<compile_context>
chip_gen: v7x
topology: tpu7x:2x2x1
jax: 0.10.0
libtpu: 0.0.40
codegen_flags: <defaults>
</compile_context>

<pallas_src>
import functools
import math

import jax
import jax.numpy as jnp
from jax.experimental import pallas as pl
from jax.experimental.pallas import tpu as pltpu


# ----------------------------------------------------------------------------
# Per-generation tiling / VMEM knobs
# ----------------------------------------------------------------------------
@functools.lru_cache(maxsize=None)
def _hw_caps():
    """Row-tile caps + scoped-VMEM limit per TPU generation:
    v5e/v6e (128 MiB physical VMEM) can run larger row tiles; v7x (64 MiB)
    needs smaller working sets.  Fallback is the conservative (v7x) setting."""
    try:
        vmem = int(pltpu.get_tpu_info().vmem_capacity_bytes)
    except Exception:
        vmem = 64 << 20
    if vmem >= (100 << 20):                         # v5e / v6e
        return {"mm": 1024, "ffn": 512, "vmem_mb": 64}
    return {"mm": 512, "ffn": 256, "vmem_mb": 40}   # v7x


def _cparams(n_parallel):
    return pltpu.CompilerParams(
        dimension_semantics=("parallel",) * n_parallel,
        vmem_limit_bytes=_hw_caps()["vmem_mb"] << 20)


def _row_tile(M, cap):
    """Largest row tile under `cap`; additionally split single-step grids on
    decent-size M so v7x's two TensorCores both get work (>=2 grid steps)."""
    if M <= cap:
        if M >= 256:
            tm = (((M + 1) // 2) + 7) // 8 * 8      # sublane-aligned half
            return min(tm, M)
        return M
    return cap


# ----------------------------------------------------------------------------
# Pallas kernels
# ----------------------------------------------------------------------------
def _mm_kernel(x_ref, w_ref, b_ref, o_ref, *, activation):
    x = x_ref[...]
    w = w_ref[...]
    if x.dtype != w.dtype:                 # cast activations in-VMEM (weights
        x = x.astype(w.dtype)              # are pre-cast once at prepare time)
    acc = jnp.dot(x, w, preferred_element_type=jnp.float32)
    acc = acc + b_ref[...]
    if activation == "relu":
        acc = jnp.maximum(acc, 0.0)
    o_ref[...] = acc.astype(o_ref.dtype)


def pallas_matmul(x, w, b=None, activation=None, *, out_dtype=jnp.float32):
    """Y = act(X @ W + b); matmul precision follows the (pre-cast) weight dtype,
    f32 accumulation.  No wrapper-level astype passes."""
    M, K = x.shape
    K2, N = w.shape
    assert K == K2
    if b is None:
        b = jnp.zeros((1, N), jnp.float32)
    tm = _row_tile(M, _hw_caps()["mm"])
    grid = (pl.cdiv(M, tm),)
    kernel = functools.partial(_mm_kernel, activation=activation)
    return pl.pallas_call(
        kernel,
        out_shape=jax.ShapeDtypeStruct((M, N), out_dtype),
        grid=grid,
        in_specs=[
            pl.BlockSpec((tm, K), lambda i: (i, 0)),
            pl.BlockSpec((K, N), lambda i: (0, 0)),
            pl.BlockSpec((1, N), lambda i: (0, 0)),
        ],
        out_specs=pl.BlockSpec((tm, N), lambda i: (i, 0)),
        compiler_params=_cparams(1),
    )(x, w, b)


def _ln_mm_kernel(x_ref, g_ref, b_ref, w_ref, o_ref, *, eps):
    x = x_ref[...].astype(jnp.float32)
    mean = jnp.mean(x, axis=-1, keepdims=True)
    xc = x - mean
    var = jnp.mean(xc * xc, axis=-1, keepdims=True)
    h = xc * jax.lax.rsqrt(var + eps) * g_ref[...] + b_ref[...]
    o_ref[...] = jnp.dot(h.astype(jnp.bfloat16), w_ref[...],
                         preferred_element_type=jnp.float32).astype(o_ref.dtype)


def pallas_ln_matmul(x, gamma, beta, w, *, eps, out_dtype=jnp.bfloat16):
    """out = LayerNorm(x) @ W   (fused pre-LN + fused QKV projection, no bias)."""
    M, D = x.shape
    D2, N = w.shape
    assert D == D2
    tm = _row_tile(M, _hw_caps()["mm"])
    grid = (pl.cdiv(M, tm),)
    kernel = functools.partial(_ln_mm_kernel, eps=eps)
    return pl.pallas_call(
        kernel,
        out_shape=jax.ShapeDtypeStruct((M, N), out_dtype),
        grid=grid,
        in_specs=[
            pl.BlockSpec((tm, D), lambda i: (i, 0)),
            pl.BlockSpec((1, D), lambda i: (0, 0)),
            pl.BlockSpec((1, D), lambda i: (0, 0)),
            pl.BlockSpec((D, N), lambda i: (0, 0)),
        ],
        out_specs=pl.BlockSpec((tm, N), lambda i: (i, 0)),
        compiler_params=_cparams(1),
    )(x, gamma, beta, w)


def _post_attn_ffn_kernel(x_ref, a_ref, wo_ref, g_ref, bln_ref,
                          w1_ref, b1_ref, w2_ref, b2_ref, o_ref, *, eps):
    # r1 = x + attn @ Wo   (attention out-projection fused with its residual)
    r1 = x_ref[...].astype(jnp.float32) + jnp.dot(
        a_ref[...], wo_ref[...], preferred_element_type=jnp.float32)
    # LN2
    mean = jnp.mean(r1, axis=-1, keepdims=True)
    xc = r1 - mean
    var = jnp.mean(xc * xc, axis=-1, keepdims=True)
    h = xc * jax.lax.rsqrt(var + eps) * g_ref[...] + bln_ref[...]
    # FFN + residual
    h1 = jnp.dot(h.astype(jnp.bfloat16), w1_ref[...],
                 preferred_element_type=jnp.float32) + b1_ref[...]
    h1 = jnp.maximum(h1, 0.0)
    h2 = jnp.dot(h1.astype(jnp.bfloat16), w2_ref[...],
                 preferred_element_type=jnp.float32) + b2_ref[...]
    o_ref[...] = (r1 + h2).astype(o_ref.dtype)


def pallas_post_attn_ffn(x, attn, wo, g2, b2ln, w1, b1, w2, b2, *, eps):
    """out = r1 + relu(LN(r1)@W1 + b1)@W2 + b2, r1 = x + attn@Wo (one kernel:
    removes one (M, D) f32 HBM round trip per layer vs separate kernels)."""
    M, D = x.shape
    M2, HD = attn.shape
    D2, F = w1.shape
    assert M == M2 and D == D2 and wo.shape == (HD, D)
    tm = _row_tile(M, _hw_caps()["ffn"])    # keep the (tm, F) f32 temp modest
    grid = (pl.cdiv(M, tm),)
    kernel = functools.partial(_post_attn_ffn_kernel, eps=eps)
    return pl.pallas_call(
        kernel,
        out_shape=jax.ShapeDtypeStruct((M, D), jnp.float32),
        grid=grid,
        in_specs=[
            pl.BlockSpec((tm, D), lambda i: (i, 0)),
            pl.BlockSpec((tm, HD), lambda i: (i, 0)),
            pl.BlockSpec((HD, D), lambda i: (0, 0)),
            pl.BlockSpec((1, D), lambda i: (0, 0)),
            pl.BlockSpec((1, D), lambda i: (0, 0)),
            pl.BlockSpec((D, F), lambda i: (0, 0)),
            pl.BlockSpec((1, F), lambda i: (0, 0)),
            pl.BlockSpec((F, D), lambda i: (0, 0)),
            pl.BlockSpec((1, D), lambda i: (0, 0)),
        ],
        out_specs=pl.BlockSpec((tm, D), lambda i: (i, 0)),
        compiler_params=_cparams(1),
    )(x, attn, wo, g2, b2ln, w1, b1, w2, b2)


def _layernorm_kernel(x_ref, g_ref, b_ref, o_ref, *, eps):
    x = x_ref[...].astype(jnp.float32)
    mean = jnp.mean(x, axis=-1, keepdims=True)
    xc = x - mean
    var = jnp.mean(xc * xc, axis=-1, keepdims=True)
    o_ref[...] = (xc * jax.lax.rsqrt(var + eps) * g_ref[...]
                  + b_ref[...]).astype(o_ref.dtype)


def pallas_layernorm(x, gamma, beta, *, eps):
    M, D = x.shape
    tm = _row_tile(M, _hw_caps()["mm"])
    grid = (pl.cdiv(M, tm),)
    kernel = functools.partial(_layernorm_kernel, eps=eps)
    return pl.pallas_call(
        kernel,
        out_shape=jax.ShapeDtypeStruct((M, D), jnp.float32),
        grid=grid,
        in_specs=[
            pl.BlockSpec((tm, D), lambda i: (i, 0)),
            pl.BlockSpec((1, D), lambda i: (0, 0)),
            pl.BlockSpec((1, D), lambda i: (0, 0)),
        ],
        out_specs=pl.BlockSpec((tm, D), lambda i: (i, 0)),
        compiler_params=_cparams(1),
    )(x, gamma, beta)


def _rel_attn_kernel(qkv_ref, bd_ref, rwb_ref, o_ref, *, n_heads, dh, scale):
    HD = n_heads * dh
    qkv = qkv_ref[0]                                        # (L, 3*HD) bf16
    q = qkv[:, :HD].astype(jnp.float32) + rwb_ref[...]      # + r_w_bias (AC term)
    k = qkv[:, HD:2 * HD]
    v = qkv[:, 2 * HD:3 * HD]
    outs = []
    # TODO(synk): for production-scale L / many heads, move this unrolled head
    # loop onto a grid axis (or a fori_loop over a head-major layout) to bound
    # live ranges; with the module defaults (L=8 chunks, H=4) it is tiny.
    for h in range(n_heads):                                # unrolled; static slices
        sl = slice(h * dh, (h + 1) * dh)
        qh = q[:, sl].astype(jnp.bfloat16)
        kh = k[:, sl]
        vh = v[:, sl]
        ac = jax.lax.dot_general(qh, kh, (((1,), (1,)), ((), ())),
                                 preferred_element_type=jnp.float32)    # (L, L)
        s = (ac + bd_ref[0, h].astype(jnp.float32)) * scale
        s = s - jnp.max(s, axis=-1, keepdims=True)
        p = jnp.exp(s)
        p = p / jnp.sum(p, axis=-1, keepdims=True)          # exact divide
        outs.append(jnp.dot(p.astype(jnp.bfloat16), vh,
                            preferred_element_type=jnp.float32))        # (L, dh)
    o_ref[0] = jnp.concatenate(outs, axis=-1).astype(o_ref.dtype)       # (L, HD)


def rel_attention(qkv, bd, r_w_bias, *, n_heads, dh, scale):
    """Transformer-XL rel-attention core.
    qkv: (BC, L, 3*H*dh) fused projections (all heads per grid step, lane-dense);
    bd:  (BC, H, L, L) bf16 pre-shifted positional score term."""
    BC, L, threeHD = qkv.shape
    HD = n_heads * dh
    assert threeHD == 3 * HD and r_w_bias.shape == (1, HD)
    kernel = functools.partial(_rel_attn_kernel, n_heads=n_heads, dh=dh, scale=scale)
    return pl.pallas_call(
        kernel,
        out_shape=jax.ShapeDtypeStruct((BC, L, HD), jnp.bfloat16),
        grid=(BC,),
        in_specs=[
            pl.BlockSpec((1, L, threeHD), lambda b: (b, 0, 0)),
            pl.BlockSpec((1, n_heads, L, L), lambda b: (b, 0, 0, 0)),
            pl.BlockSpec((1, HD), lambda b: (0, 0)),
        ],
        out_specs=pl.BlockSpec((1, L, HD), lambda b: (b, 0, 0)),
        compiler_params=_cparams(1),
    )(qkv, bd, r_w_bias)


# ----------------------------------------------------------------------------
# Glue (im2col patches, positional tables, exact Transformer-XL rel-shift)
# ----------------------------------------------------------------------------
def im2col_nhwc(x, kh, kw, stride):
    """x: (B, H, W, C) -> (B*Ho*Wo, kh*kw*C), feature order (kh, kw, C)."""
    B, H, W, C = x.shape
    Ho = (H - kh) // stride + 1
    Wo = (W - kw) // stride + 1
    cols = []
    for i in range(kh):
        for j in range(kw):
            cols.append(x[:, i:i + stride * (Ho - 1) + 1:stride,
                          j:j + stride * (Wo - 1) + 1:stride, :])
    col = jnp.stack(cols, axis=3)                       # (B, Ho, Wo, kh*kw, C)
    return col.reshape(B * Ho * Wo, kh * kw * C), Ho, Wo


def sinusoidal_pe(length, d_model):
    """ESPnet PositionalEncoding table (interleaved sin/cos)."""
    pos = jnp.arange(length, dtype=jnp.float32)[:, None]
    div = jnp.exp(jnp.arange(0, d_model, 2, dtype=jnp.float32)
                  * -(math.log(10000.0) / d_model))
    pe = jnp.zeros((length, d_model), jnp.float32)
    pe = pe.at[:, 0::2].set(jnp.sin(pos * div))
    pe = pe.at[:, 1::2].set(jnp.cos(pos * div))
    return pe


def txl_rel_pos_emb(klen, d_model):
    """Transformer-XL relative positional embedding: pos_seq = klen-1 .. 0."""
    pos_seq = jnp.arange(klen - 1, -1, -1, dtype=jnp.float32)
    inv_freq = 1.0 / (10000.0 ** (jnp.arange(0.0, d_model, 2.0) / d_model))
    sinusoid = pos_seq[:, None] * inv_freq[None, :]
    return jnp.concatenate([jnp.sin(sinusoid), jnp.cos(sinusoid)], axis=-1)


def rel_shift(x):
    """Exact Transformer-XL _rel_shift (zero-pad + view trick) over (..., q, k)."""
    *lead, q, k = x.shape
    zp = jnp.zeros((*lead, q, 1), x.dtype)
    xp = jnp.concatenate([zp, x], axis=-1)              # (..., q, k+1)
    xp = xp.reshape(*lead, k + 1, q)
    return xp[..., 1:, :].reshape(*lead, q, k)


# ----------------------------------------------------------------------------
# Model pieces
# ----------------------------------------------------------------------------
def conv2d_subsampling(x, p, d_model):
    """Conv2dSubsampling, NHWC / transpose-free: two 3x3 stride-2 convs + ReLU
    as im2col + fused Pallas matmul/bias/ReLU, then linear + xscale*x + PE."""
    B, T, F = x.shape
    x4 = x.reshape(B, T, F, 1)
    col1, T1, F1 = im2col_nhwc(x4, 3, 3, 2)
    # conv1 contraction is only K=9 -> weights kept f32 at prepare time.
    y1 = pallas_matmul(col1, p["conv1_w"], p["conv1_b"], activation="relu",
                       out_dtype=jnp.bfloat16)
    C = y1.shape[-1]
    y1 = y1.reshape(B, T1, F1, C)                       # NHWC, no transpose
    # TODO(synk): conv2 im2col still materializes the (B*Ho*Wo, 9*C) column
    # tensor in HBM (now bf16); an in-kernel halo-DMA im2col would avoid it.
    col2, T2, F2 = im2col_nhwc(y1, 3, 3, 2)
    y2 = pallas_matmul(col2, p["conv2_w"], p["conv2_b"], activation="relu",
                       out_dtype=jnp.bfloat16)
    y2 = y2.reshape(B * T2, F2 * C)                     # per-frame features (f, c)
    out = pallas_matmul(y2, p["lin_w"], p["lin_b"], out_dtype=jnp.float32)
    out = out.reshape(B, T2, d_model)
    pe = sinusoidal_pe(T2, d_model)
    return out * math.sqrt(float(d_model)) + pe[None]   # xscale + PE


def encoder_layer_xl(x, p, r, n_heads, dh, scale):
    """One EncoderLayerXL block (pre-LN Transformer-XL rel-attn + FFN), mem_len=0.
    x: (BC, L, D) with BC = batch * num_chunks; r: (L, H*dh) positional keys."""
    BC, L, D = x.shape
    HD = n_heads * dh
    M = BC * L
    x2 = x.reshape(M, D)

    # --- relative multi-head attention sub-layer (pre_lnorm=True) ------------
    qkv = pallas_ln_matmul(x2, p["ln1_g"], p["ln1_b"], p["w_qkv"], eps=1e-5)  # (M,3HD) bf16

    # BD term: (q + r_r_bias) . r_k with the exact Transformer-XL rel-shift.
    # TODO(synk): compute BD + rel-shift in-kernel (pltpu.roll with per-row
    # stride) to drop this (BC,H,L,L) tensor from HBM entirely; kept XLA-side
    # (exact view trick, proven to lower) and passed as bf16 to halve its DMA.
    q4 = qkv[:, :HD].astype(jnp.float32).reshape(BC, L, n_heads, dh)
    rk = r.reshape(L, n_heads, dh)
    bd_raw = jnp.einsum('blhd,mhd->bhlm', q4 + p["r_r_bias"][None, None], rk)
    bd = rel_shift(bd_raw).astype(jnp.bfloat16)                              # (BC,H,L,L)

    attn = rel_attention(qkv.reshape(BC, L, 3 * HD), bd, p["r_w_bias"],
                         n_heads=n_heads, dh=dh, scale=scale)                # (BC,L,HD)

    # --- out-proj + residual + LN2 + FFN + residual, fused into one kernel ---
    x2 = pallas_post_attn_ffn(x2, attn.reshape(M, HD), p["w_o"],
                              p["ln2_g"], p["ln2_b"],
                              p["ff_w1"], p["ff_b1"], p["ff_w2"], p["ff_b2"],
                              eps=1e-5)
    return x2.reshape(BC, L, D)


def encoder_forward(xs, params, masks=None, *, time_len, n_heads):
    """Encoder.forward: conv2d embed -> chunked TransformerXL blocks -> after_norm."""
    d_model = params["after_g"].shape[-1]
    dh = d_model // n_heads
    HD = n_heads * dh
    scale = 1.0 / math.sqrt(dh)

    xs = conv2d_subsampling(xs, params["embed"], d_model)
    if masks is not None:
        masks = masks[:, :, :-2:2][:, :, :-2:2]          # conv-subsampled mask
    # TODO(synk): padding mask is not applied inside attention (example uses masks=None).
    B, T2, _ = xs.shape
    if time_len is None or time_len <= 0:
        time_len = T2

    def run_layers(x):                                   # x: (BC, L, D)
        L = x.shape[1]
        pos_emb = txl_rel_pos_emb(L, d_model)            # mem_len=0 -> klen == L
        # hoisted: ALL layers' positional projections in one lane-dense matmul
        r_all = pallas_matmul(pos_emb, params["w_r_all"], out_dtype=jnp.float32)
        for li, lp in enumerate(params["layers"]):
            r = r_all[:, li * HD:(li + 1) * HD]
            x = encoder_layer_xl(x, lp, r, n_heads, dh, scale)
        return x

    n_full = T2 // time_len
    rem = T2 - n_full * time_len
    pieces = []
    if n_full > 0:
        # fold the chunk loop into the batch dim (chunks independent, mem_len=0)
        xf = xs[:, :n_full * time_len].reshape(B * n_full, time_len, d_model)
        xf = run_layers(xf)
        pieces.append(xf.reshape(B, n_full * time_len, d_model))
    if rem > 0:
        # ragged last chunk processed at its true length (exact torch.split semantics)
        pieces.append(run_layers(xs[:, n_full * time_len:]))
    xs = pieces[0] if len(pieces) == 1 else jnp.concatenate(pieces, axis=1)

    xs = pallas_layernorm(xs.reshape(B * T2, d_model),
                          params["after_g"], params["after_b"], eps=1e-12)
    return xs.reshape(B, T2, d_model), masks


# ----------------------------------------------------------------------------
# Parameter construction + one-time kernel-ready preparation
# ----------------------------------------------------------------------------
def init_params(key, *, idim, d_model, n_heads, d_ff, num_blocks):
    dh = d_model // n_heads
    f1 = (idim - 3) // 2 + 1
    f2 = (f1 - 3) // 2 + 1
    keys = iter(jax.random.split(key, 64))

    def w(shape, scale=0.02):
        return scale * jax.random.normal(next(keys), shape, jnp.float32)

    embed = dict(
        conv1_w=w((1 * 3 * 3, d_model)), conv1_b=w((d_model,)),      # (kh*kw*Cin, C)
        conv2_w=w((3 * 3 * d_model, d_model)), conv2_b=w((d_model,)),
        lin_w=w((f2 * d_model, d_model)), lin_b=w((d_model,)),       # features (f, c)
    )
    layers = []
    for _ in range(num_blocks):
        layers.append(dict(
            ln1_g=jnp.ones((d_model,), jnp.float32),
            ln1_b=jnp.zeros((d_model,), jnp.float32),
            w_qkv=w((d_model, 3 * n_heads * dh)),
            w_r=w((d_model, n_heads * dh)),
            w_o=w((n_heads * dh, d_model)),
            r_w_bias=w((n_heads, dh)),
            r_r_bias=w((n_heads, dh)),
            ln2_g=jnp.ones((d_model,), jnp.float32),
            ln2_b=jnp.zeros((d_model,), jnp.float32),
            ff_w1=w((d_model, d_ff)), ff_b1=w((d_ff,)),
            ff_w2=w((d_ff, d_model)), ff_b2=w((d_model,)),
        ))
    return dict(embed=embed, layers=layers,
                after_g=jnp.ones((d_model,), jnp.float32),
                after_b=jnp.zeros((d_model,), jnp.float32))


def prepare_params(raw):
    """One-time prep (perf review): pre-cast matmul weights to bf16, pre-shape
    biases / LN params to (1, N) f32, stack all layers' w_r for the hoisted
    positional projection.  Removes all per-forward wrapper astype passes."""
    e = raw["embed"]
    embed = dict(
        conv1_w=e["conv1_w"].astype(jnp.float32),            # K=9: keep f32
        conv1_b=e["conv1_b"].reshape(1, -1).astype(jnp.float32),
        conv2_w=e["conv2_w"].astype(jnp.bfloat16),
        conv2_b=e["conv2_b"].reshape(1, -1).astype(jnp.float32),
        lin_w=e["lin_w"].astype(jnp.bfloat16),
        lin_b=e["lin_b"].reshape(1, -1).astype(jnp.float32),
    )
    layers = []
    for lp in raw["layers"]:
        H, dh = lp["r_w_bias"].shape
        layers.append(dict(
            ln1_g=lp["ln1_g"].reshape(1, -1).astype(jnp.float32),
            ln1_b=lp["ln1_b"].reshape(1, -1).astype(jnp.float32),
            w_qkv=lp["w_qkv"].astype(jnp.bfloat16),
            w_o=lp["w_o"].astype(jnp.bfloat16),
            r_w_bias=lp["r_w_bias"].reshape(1, H * dh).astype(jnp.float32),
            r_r_bias=lp["r_r_bias"].astype(jnp.float32),      # (H, dh) for BD einsum
            ln2_g=lp["ln2_g"].reshape(1, -1).astype(jnp.float32),
            ln2_b=lp["ln2_b"].reshape(1, -1).astype(jnp.float32),
            ff_w1=lp["ff_w1"].astype(jnp.bfloat16),
            ff_b1=lp["ff_b1"].reshape(1, -1).astype(jnp.float32),
            ff_w2=lp["ff_w2"].astype(jnp.bfloat16),
            ff_b2=lp["ff_b2"].reshape(1, -1).astype(jnp.float32),
        ))
    w_r_all = jnp.concatenate([lp["w_r"] for lp in raw["layers"]],
                              axis=1).astype(jnp.bfloat16)    # (D, NB*HD)
    return dict(embed=embed, layers=layers, w_r_all=w_r_all,
                after_g=raw["after_g"].reshape(1, -1).astype(jnp.float32),
                after_b=raw["after_b"].reshape(1, -1).astype(jnp.float32))


# ----------------------------------------------------------------------------
if __name__ == "__main__":
    B, T, IDIM = 2, 67, 20              # -> T2 = 16 after conv2d subsampling
    D, H, DFF, NBLOCKS, TIME_LEN = 32, 4, 64, 2, 8

    key = jax.random.PRNGKey(0)
    pkey, xkey = jax.random.split(key)
    raw_params = init_params(pkey, idim=IDIM, d_model=D, n_heads=H,
                             d_ff=DFF, num_blocks=NBLOCKS)
    params = prepare_params(raw_params)
    xs = jax.random.normal(xkey, (B, T, IDIM), jnp.float32)

    fwd = jax.jit(functools.partial(encoder_forward,
                                    time_len=TIME_LEN, n_heads=H))
    out, masks = fwd(xs, params)
    out = jax.block_until_ready(out)
    assert out.shape == (B, 16, D), out.shape
    assert bool(jnp.all(jnp.isfinite(out)))
    print("KERNEL_OK")
</pallas_src>

<mosaic_0001>
module attributes {stable_mosaic.version = 11 : i64} {
  func.func @_mm_kernel(%arg0: i32, %arg1: memref<512x9xf32, #tpu.memory_space<vmem>>, %arg2: memref<9x32xf32, #tpu.memory_space<vmem>>, %arg3: memref<1x32xf32, #tpu.memory_space<vmem>>, %arg4: memref<512x32xbf16, #tpu.memory_space<vmem>>) attributes {dimension_semantics = [#tpu.dimension_semantics<parallel>], iteration_bounds = array<i64: 2>, scalar_prefetch = 0 : i64, scratch_operands = 0 : i64, tpu.core_type = #tpu.core_type<tc>, window_params = [{transform_indices = @transform_0, window_bounds = array<i64: 512, 9>}, {pipeline_mode = #tpu.pipeline_mode<synchronous>, transform_indices = @transform_1, window_bounds = array<i64: 9, 32>}, {pipeline_mode = #tpu.pipeline_mode<synchronous>, transform_indices = @transform_2, window_bounds = array<i64: 1, 32>}, {transform_indices = @transform_3, window_bounds = array<i64: 512, 32>}]} {
    %c0 = arith.constant 0 : index
    %c0_0 = arith.constant 0 : index
    %0 = vector.load %arg1[%c0, %c0_0] : memref<512x9xf32, #tpu.memory_space<vmem>>, vector<512x9xf32>
    %c0_1 = arith.constant 0 : index
    %c0_2 = arith.constant 0 : index
    %1 = vector.load %arg2[%c0_1, %c0_2] : memref<9x32xf32, #tpu.memory_space<vmem>>, vector<9x32xf32>
    %cst = arith.constant dense<0.000000e+00> : vector<512x32xf32>
    %2 = tpu.matmul %0, %1, %cst {dimension_numbers = #tpu.dot_dimension_numbers<[1], [0], [0], [1], [0, 0, 1, 1], [], []>} : vector<512x9xf32>, vector<9x32xf32>, vector<512x32xf32> -> vector<512x32xf32>
    %c0_3 = arith.constant 0 : index
    %c0_4 = arith.constant 0 : index
    %3 = vector.load %arg3[%c0_3, %c0_4] : memref<1x32xf32, #tpu.memory_space<vmem>>, vector<1x32xf32>
    %4 = vector.broadcast %3 : vector<1x32xf32> to vector<512x32xf32>
    %5 = arith.addf %2, %4 : vector<512x32xf32>
    %cst_5 = arith.constant 0.000000e+00 : f32
    %6 = vector.broadcast %cst_5 : f32 to vector<512x32xf32>
    %7 = arith.maximumf %5, %6 : vector<512x32xf32>
    %8 = arith.truncf %7 : vector<512x32xf32> to vector<512x32xbf16>
    %c0_6 = arith.constant 0 : index
    %c0_7 = arith.constant 0 : index
    %9 = vector.load %arg4[%c0_6, %c0_7] : memref<512x32xbf16, #tpu.memory_space<vmem>>, vector<512x32xbf16>
    tpu.vector_store %arg4[%c0_6, %c0_7], %8 {strides = array<i32>} : memref<512x32xbf16, #tpu.memory_space<vmem>>, vector<512x32xbf16>,
    return
  }
  func.func @transform_0(%arg0: i32) -> (i32, i32) {
    %c0_i32 = arith.constant 0 : i32
    %c0_i32_0 = arith.constant 0 : i32
    return %arg0, %c0_i32 : i32, i32
  }
  func.func @transform_1(%arg0: i32) -> (i32, i32) {
    %c0_i32 = arith.constant 0 : i32
    %c0_i32_0 = arith.constant 0 : i32
    %c0_i32_1 = arith.constant 0 : i32
    return %c0_i32, %c0_i32_0 : i32, i32
  }
  func.func @transform_2(%arg0: i32) -> (i32, i32) {
    %c0_i32 = arith.constant 0 : i32
    %c0_i32_0 = arith.constant 0 : i32
    %c0_i32_1 = arith.constant 0 : i32
    return %c0_i32, %c0_i32_0 : i32, i32
  }
  func.func @transform_3(%arg0: i32) -> (i32, i32) {
    %c0_i32 = arith.constant 0 : i32
    %c0_i32_0 = arith.constant 0 : i32
    return %arg0, %c0_i32 : i32, i32
  }
}

module attributes {stable_mosaic.version = 11 : i64} {
  func.func @_mm_kernel(%arg0: i32, %arg1: memref<128x288xbf16, #tpu.memory_space<vmem>>, %arg2: memref<288x32xbf16, #tpu.memory_space<vmem>>, %arg3: memref<1x32xf32, #tpu.memory_space<vmem>>, %arg4: memref<128x32xbf16, #tpu.memory_space<vmem>>) attributes {dimension_semantics = [#tpu.dimension_semantics<parallel>], iteration_bounds = array<i64: 1>, scalar_prefetch = 0 : i64, scratch_operands = 0 : i64, tpu.core_type = #tpu.core_type<tc>, window_params = [{transform_indices = @transform_0, window_bounds = array<i64: 128, 288>}, {pipeline_mode = #tpu.pipeline_mode<synchronous>, transform_indices = @transform_1, window_bounds = array<i64: 288, 32>}, {pipeline_mode = #tpu.pipeline_mode<synchronous>, transform_indices = @transform_2, window_bounds = array<i64: 1, 32>}, {transform_indices = @transform_3, window_bounds = array<i64: 128, 32>}]} {
    %c0 = arith.constant 0 : index
    %c0_0 = arith.constant 0 : index
    %0 = vector.load %arg1[%c0, %c0_0] : memref<128x288xbf16, #tpu.memory_space<vmem>>, vector<128x288xbf16>
    %c0_1 = arith.constant 0 : index
    %c0_2 = arith.constant 0 : index
    %1 = vector.load %arg2[%c0_1, %c0_2] : memref<288x32xbf16, #tpu.memory_space<vmem>>, vector<288x32xbf16>
    %cst = arith.constant dense<0.000000e+00> : vector<128x32xf32>
    %2 = tpu.matmul %0, %1, %cst {dimension_numbers = #tpu.dot_dimension_numbers<[1], [0], [0], [1], [0, 0, 1, 1], [], []>} : vector<128x288xbf16>, vector<288x32xbf16>, vector<128x32xf32> -> vector<128x32xf32>
    %c0_3 = arith.constant 0 : index
    %c0_4 = arith.constant 0 : index
    %3 = vector.load %arg3[%c0_3, %c0_4] : memref<1x32xf32, #tpu.memory_space<vmem>>, vector<1x32xf32>
    %4 = vector.broadcast %3 : vector<1x32xf32> to vector<128x32xf32>
    %5 = arith.addf %2, %4 : vector<128x32xf32>
    %cst_5 = arith.constant 0.000000e+00 : f32
    %6 = vector.broadcast %cst_5 : f32 to vector<128x32xf32>
    %7 = arith.maximumf %5, %6 : vector<128x32xf32>
    %8 = arith.truncf %7 : vector<128x32xf32> to vector<128x32xbf16>
    %c0_6 = arith.constant 0 : index
    %c0_7 = arith.constant 0 : index
    %9 = vector.load %arg4[%c0_6, %c0_7] : memref<128x32xbf16, #tpu.memory_space<vmem>>, vector<128x32xbf16>
    tpu.vector_store %arg4[%c0_6, %c0_7], %8 {strides = array<i32>} : memref<128x32xbf16, #tpu.memory_space<vmem>>, vector<128x32xbf16>,
    return
  }
  func.func @transform_0(%arg0: i32) -> (i32, i32) {
    %c0_i32 = arith.constant 0 : i32
    %c0_i32_0 = arith.constant 0 : i32
    return %arg0, %c0_i32 : i32, i32
  }
  func.func @transform_1(%arg0: i32) -> (i32, i32) {
    %c0_i32 = arith.constant 0 : i32
    %c0_i32_0 = arith.constant 0 : i32
    %c0_i32_1 = arith.constant 0 : i32
    return %c0_i32, %c0_i32_0 : i32, i32
  }
  func.func @transform_2(%arg0: i32) -> (i32, i32) {
    %c0_i32 = arith.constant 0 : i32
    %c0_i32_0 = arith.constant 0 : i32
    %c0_i32_1 = arith.constant 0 : i32
    return %c0_i32, %c0_i32_0 : i32, i32
  }
  func.func @transform_3(%arg0: i32) -> (i32, i32) {
    %c0_i32 = arith.constant 0 : i32
    %c0_i32_0 = arith.constant 0 : i32
    return %arg0, %c0_i32 : i32, i32
  }
}

module attributes {stable_mosaic.version = 11 : i64} {
  func.func @_mm_kernel(%arg0: i32, %arg1: memref<32x128xbf16, #tpu.memory_space<vmem>>, %arg2: memref<128x32xbf16, #tpu.memory_space<vmem>>, %arg3: memref<1x32xf32, #tpu.memory_space<vmem>>, %arg4: memref<32x32xf32, #tpu.memory_space<vmem>>) attributes {dimension_semantics = [#tpu.dimension_semantics<parallel>], iteration_bounds = array<i64: 1>, scalar_prefetch = 0 : i64, scratch_operands = 0 : i64, tpu.core_type = #tpu.core_type<tc>, window_params = [{transform_indices = @transform_0, window_bounds = array<i64: 32, 128>}, {pipeline_mode = #tpu.pipeline_mode<synchronous>, transform_indices = @transform_1, window_bounds = array<i64: 128, 32>}, {pipeline_mode = #tpu.pipeline_mode<synchronous>, transform_indices = @transform_2, window_bounds = array<i64: 1, 32>}, {transform_indices = @transform_3, window_bounds = array<i64: 32, 32>}]} {
    %c0 = arith.constant 0 : index
    %c0_0 = arith.constant 0 : index
    %0 = vector.load %arg1[%c0, %c0_0] : memref<32x128xbf16, #tpu.memory_space<vmem>>, vector<32x128xbf16>
    %c0_1 = arith.constant 0 : index
    %c0_2 = arith.constant 0 : index
    %1 = vector.load %arg2[%c0_1, %c0_2] : memref<128x32xbf16, #tpu.memory_space<vmem>>, vector<128x32xbf16>
    %cst = arith.constant dense<0.000000e+00> : vector<32x32xf32>
    %2 = tpu.matmul %0, %1, %cst {dimension_numbers = #tpu.dot_dimension_numbers<[1], [0], [0], [1], [0, 0, 1, 1], [], []>} : vector<32x128xbf16>, vector<128x32xbf16>, vector<32x32xf32> -> vector<32x32xf32>
    %c0_3 = arith.constant 0 : index
    %c0_4 = arith.constant 0 : index
    %3 = vector.load %arg3[%c0_3, %c0_4] : memref<1x32xf32, #tpu.memory_space<vmem>>, vector<1x32xf32>
    %4 = vector.broadcast %3 : vector<1x32xf32> to vector<32x32xf32>
    %5 = arith.addf %2, %4 : vector<32x32xf32>
    %c0_5 = arith.constant 0 : index
    %c0_6 = arith.constant 0 : index
    %6 = vector.load %arg4[%c0_5, %c0_6] : memref<32x32xf32, #tpu.memory_space<vmem>>, vector<32x32xf32>
    tpu.vector_store %arg4[%c0_5, %c0_6], %5 {strides = array<i32>} : memref<32x32xf32, #tpu.memory_space<vmem>>, vector<32x32xf32>,
    return
  }
  func.func @transform_0(%arg0: i32) -> (i32, i32) {
    %c0_i32 = arith.constant 0 : i32
    %c0_i32_0 = arith.constant 0 : i32
    return %arg0, %c0_i32 : i32, i32
  }
  func.func @transform_1(%arg0: i32) -> (i32, i32) {
    %c0_i32 = arith.constant 0 : i32
    %c0_i32_0 = arith.constant 0 : i32
    %c0_i32_1 = arith.constant 0 : i32
    return %c0_i32, %c0_i32_0 : i32, i32
  }
  func.func @transform_2(%arg0: i32) -> (i32, i32) {
    %c0_i32 = arith.constant 0 : i32
    %c0_i32_0 = arith.constant 0 : i32
    %c0_i32_1 = arith.constant 0 : i32
    return %c0_i32, %c0_i32_0 : i32, i32
  }
  func.func @transform_3(%arg0: i32) -> (i32, i32) {
    %c0_i32 = arith.constant 0 : i32
    %c0_i32_0 = arith.constant 0 : i32
    return %arg0, %c0_i32 : i32, i32
  }
}

module attributes {stable_mosaic.version = 11 : i64} {
  func.func @_ln_mm_kernel(%arg0: i32, %arg1: memref<32x32xf32, #tpu.memory_space<vmem>>, %arg2: memref<1x32xf32, #tpu.memory_space<vmem>>, %arg3: memref<1x32xf32, #tpu.memory_space<vmem>>, %arg4: memref<32x96xbf16, #tpu.memory_space<vmem>>, %arg5: memref<32x96xbf16, #tpu.memory_space<vmem>>) attributes {dimension_semantics = [#tpu.dimension_semantics<parallel>], iteration_bounds = array<i64: 1>, scalar_prefetch = 0 : i64, scratch_operands = 0 : i64, tpu.core_type = #tpu.core_type<tc>, window_params = [{transform_indices = @transform_0, window_bounds = array<i64: 32, 32>}, {pipeline_mode = #tpu.pipeline_mode<synchronous>, transform_indices = @transform_1, window_bounds = array<i64: 1, 32>}, {pipeline_mode = #tpu.pipeline_mode<synchronous>, transform_indices = @transform_2, window_bounds = array<i64: 1, 32>}, {pipeline_mode = #tpu.pipeline_mode<synchronous>, transform_indices = @transform_3, window_bounds = array<i64: 32, 96>}, {transform_indices = @transform_4, window_bounds = array<i64: 32, 96>}]} {
    %c0 = arith.constant 0 : index
    %c0_0 = arith.constant 0 : index
    %0 = vector.load %arg1[%c0, %c0_0] : memref<32x32xf32, #tpu.memory_space<vmem>>, vector<32x32xf32>
    %cst = arith.constant dense<0.000000e+00> : vector<32xf32>
    %1 = vector.multi_reduction <add>, %0, %cst [1] : vector<32x32xf32> to vector<32xf32>
    %2 = vector.shape_cast %1 : vector<32xf32> to vector<32x1xf32>
    %cst_1 = arith.constant 3.200000e+01 : f32
    %3 = vector.broadcast %cst_1 : f32 to vector<32x1xf32>
    %4 = arith.divf %2, %3 : vector<32x1xf32>
    %5 = vector.broadcast %4 : vector<32x1xf32> to vector<32x32xf32>
    %6 = arith.subf %0, %5 : vector<32x32xf32>
    %7 = arith.mulf %6, %6 : vector<32x32xf32>
    %cst_2 = arith.constant dense<0.000000e+00> : vector<32xf32>
    %8 = vector.multi_reduction <add>, %7, %cst_2 [1] : vector<32x32xf32> to vector<32xf32>
    %9 = vector.shape_cast %8 : vector<32xf32> to vector<32x1xf32>
    %cst_3 = arith.constant 3.200000e+01 : f32
    %10 = vector.broadcast %cst_3 : f32 to vector<32x1xf32>
    %11 = arith.divf %9, %10 : vector<32x1xf32>
    %cst_4 = arith.constant 9.99999974E-6 : f32
    %12 = vector.broadcast %cst_4 : f32 to vector<32x1xf32>
    %13 = arith.addf %11, %12 : vector<32x1xf32>
    %14 = math.rsqrt %13 : vector<32x1xf32>
    %15 = vector.broadcast %14 : vector<32x1xf32> to vector<32x32xf32>
    %16 = arith.mulf %6, %15 : vector<32x32xf32>
    %c0_5 = arith.constant 0 : index
    %c0_6 = arith.constant 0 : index
    %17 = vector.load %arg2[%c0_5, %c0_6] : memref<1x32xf32, #tpu.memory_space<vmem>>, vector<1x32xf32>
    %18 = vector.broadcast %17 : vector<1x32xf32> to vector<32x32xf32>
    %19 = arith.mulf %16, %18 : vector<32x32xf32>
    %c0_7 = arith.constant 0 : index
    %c0_8 = arith.constant 0 : index
    %20 = vector.load %arg3[%c0_7, %c0_8] : memref<1x32xf32, #tpu.memory_space<vmem>>, vector<1x32xf32>
    %21 = vector.broadcast %20 : vector<1x32xf32> to vector<32x32xf32>
    %22 = arith.addf %19, %21 : vector<32x32xf32>
    %23 = arith.truncf %22 : vector<32x32xf32> to vector<32x32xbf16>
    %c0_9 = arith.constant 0 : index
    %c0_10 = arith.constant 0 : index
    %24 = vector.load %arg4[%c0_9, %c0_10] : memref<32x96xbf16, #tpu.memory_space<vmem>>, vector<32x96xbf16>
    %cst_11 = arith.constant dense<0.000000e+00> : vector<32x96xf32>
    %25 = tpu.matmul %23, %24, %cst_11 {dimension_numbers = #tpu.dot_dimension_numbers<[1], [0], [0], [1], [0, 0, 1, 1], [], []>} : vector<32x32xbf16>, vector<32x96xbf16>, vector<32x96xf32> -> vector<32x96xf32>
    %26 = arith.truncf %25 : vector<32x96xf32> to vector<32x96xbf16>
    %c0_12 = arith.constant 0 : index
    %c0_13 = arith.constant 0 : index
    %27 = vector.load %arg5[%c0_12, %c0_13] : memref<32x96xbf16, #tpu.memory_space<vmem>>, vector<32x96xbf16>
    tpu.vector_store %arg5[%c0_12, %c0_13], %26 {strides = array<i32>} : memref<32x96xbf16, #tpu.memory_space<vmem>>, vector<32x96xbf16>,
    return
  }
  func.func @transform_0(%arg0: i32) -> (i32, i32) {
    %c0_i32 = arith.constant 0 : i32
    %c0_i32_0 = arith.constant 0 : i32
    return %arg0, %c0_i32 : i32, i32
  }
  func.func @transform_1(%arg0: i32) -> (i32, i32) {
    %c0_i32 = arith.constant 0 : i32
    %c0_i32_0 = arith.constant 0 : i32
    %c0_i32_1 = arith.constant 0 : i32
    return %c0_i32, %c0_i32_0 : i32, i32
  }
  func.func @transform_2(%arg0: i32) -> (i32, i32) {
    %c0_i32 = arith.constant 0 : i32
    %c0_i32_0 = arith.constant 0 : i32
    %c0_i32_1 = arith.constant 0 : i32
    return %c0_i32, %c0_i32_0 : i32, i32
  }
  func.func @transform_3(%arg0: i32) -> (i32, i32) {
    %c0_i32 = arith.constant 0 : i32
    %c0_i32_0 = arith.constant 0 : i32
    %c0_i32_1 = arith.constant 0 : i32
    return %c0_i32, %c0_i32_0 : i32, i32
  }
  func.func @transform_4(%arg0: i32) -> (i32, i32) {
    %c0_i32 = arith.constant 0 : i32
    %c0_i32_0 = arith.constant 0 : i32
    return %arg0, %c0_i32 : i32, i32
  }
}

module attributes {stable_mosaic.version = 11 : i64} {
  func.func @_mm_kernel(%arg0: i32, %arg1: memref<8x32xf32, #tpu.memory_space<vmem>>, %arg2: memref<32x64xbf16, #tpu.memory_space<vmem>>, %arg3: memref<1x64xf32, #tpu.memory_space<vmem>>, %arg4: memref<8x64xf32, #tpu.memory_space<vmem>>) attributes {dimension_semantics = [#tpu.dimension_semantics<parallel>], iteration_bounds = array<i64: 1>, scalar_prefetch = 0 : i64, scratch_operands = 0 : i64, tpu.core_type = #tpu.core_type<tc>, window_params = [{transform_indices = @transform_0, window_bounds = array<i64: 8, 32>}, {pipeline_mode = #tpu.pipeline_mode<synchronous>, transform_indices = @transform_1, window_bounds = array<i64: 32, 64>}, {pipeline_mode = #tpu.pipeline_mode<synchronous>, transform_indices = @transform_2, window_bounds = array<i64: 1, 64>}, {transform_indices = @transform_3, window_bounds = array<i64: 8, 64>}]} {
    %c0 = arith.constant 0 : index
    %c0_0 = arith.constant 0 : index
    %0 = vector.load %arg1[%c0, %c0_0] : memref<8x32xf32, #tpu.memory_space<vmem>>, vector<8x32xf32>
    %c0_1 = arith.constant 0 : index
    %c0_2 = arith.constant 0 : index
    %1 = vector.load %arg2[%c0_1, %c0_2] : memref<32x64xbf16, #tpu.memory_space<vmem>>, vector<32x64xbf16>
    %2 = arith.truncf %0 : vector<8x32xf32> to vector<8x32xbf16>
    %cst = arith.constant dense<0.000000e+00> : vector<8x64xf32>
    %3 = tpu.matmul %2, %1, %cst {dimension_numbers = #tpu.dot_dimension_numbers<[1], [0], [0], [1], [0, 0, 1, 1], [], []>} : vector<8x32xbf16>, vector<32x64xbf16>, vector<8x64xf32> -> vector<8x64xf32>
    %c0_3 = arith.constant 0 : index
    %c0_4 = arith.constant 0 : index
    %4 = vector.load %arg3[%c0_3, %c0_4] : memref<1x64xf32, #tpu.memory_space<vmem>>, vector<1x64xf32>
    %5 = vector.broadcast %4 : vector<1x64xf32> to vector<8x64xf32>
    %6 = arith.addf %3, %5 : vector<8x64xf32>
    %c0_5 = arith.constant 0 : index
    %c0_6 = arith.constant 0 : index
    %7 = vector.load %arg4[%c0_5, %c0_6] : memref<8x64xf32, #tpu.memory_space<vmem>>, vector<8x64xf32>
    tpu.vector_store %arg4[%c0_5, %c0_6], %6 {strides = array<i32>} : memref<8x64xf32, #tpu.memory_space<vmem>>, vector<8x64xf32>,
    return
  }
  func.func @transform_0(%arg0: i32) -> (i32, i32) {
    %c0_i32 = arith.constant 0 : i32
    %c0_i32_0 = arith.constant 0 : i32
    return %arg0, %c0_i32 : i32, i32
  }
  func.func @transform_1(%arg0: i32) -> (i32, i32) {
    %c0_i32 = arith.constant 0 : i32
    %c0_i32_0 = arith.constant 0 : i32
    %c0_i32_1 = arith.constant 0 : i32
    return %c0_i32, %c0_i32_0 : i32, i32
  }
  func.func @transform_2(%arg0: i32) -> (i32, i32) {
    %c0_i32 = arith.constant 0 : i32
    %c0_i32_0 = arith.constant 0 : i32
    %c0_i32_1 = arith.constant 0 : i32
    return %c0_i32, %c0_i32_0 : i32, i32
  }
  func.func @transform_3(%arg0: i32) -> (i32, i32) {
    %c0_i32 = arith.constant 0 : i32
    %c0_i32_0 = arith.constant 0 : i32
    return %arg0, %c0_i32 : i32, i32
  }
}

module attributes {stable_mosaic.version = 11 : i64} {
  func.func @_rel_attn_kernel(%arg0: i32, %arg1: memref<1x8x96xbf16, #tpu.memory_space<vmem>>, %arg2: memref<1x4x8x8xbf16, #tpu.memory_space<vmem>>, %arg3: memref<1x32xf32, #tpu.memory_space<vmem>>, %arg4: memref<1x8x32xbf16, #tpu.memory_space<vmem>>) attributes {dimension_semantics = [#tpu.dimension_semantics<parallel>], iteration_bounds = array<i64: 4>, scalar_prefetch = 0 : i64, scratch_operands = 0 : i64, tpu.core_type = #tpu.core_type<tc>, window_params = [{transform_indices = @transform_0, window_bounds = array<i64: 1, 8, 96>}, {transform_indices = @transform_1, window_bounds = array<i64: 1, 4, 8, 8>}, {pipeline_mode = #tpu.pipeline_mode<synchronous>, transform_indices = @transform_2, window_bounds = array<i64: 1, 32>}, {transform_indices = @transform_3, window_bounds = array<i64: 1, 8, 32>}]} {
    %c0 = arith.constant 0 : index
    %c0_0 = arith.constant 0 : index
    %c0_1 = arith.constant 0 : index
    %0 = vector.load %arg1[%c0, %c0_0, %c0_1] : memref<1x8x96xbf16, #tpu.memory_space<vmem>>, vector<1x8x96xbf16>
    %1 = vector.shape_cast %0 : vector<1x8x96xbf16> to vector<8x96xbf16>
    %2 = vector.extract_strided_slice %1 {offsets = [0, 0], sizes = [8, 32], strides = [1, 1]} : vector<8x96xbf16> to vector<8x32xbf16>
    %3 = arith.extf %2 : vector<8x32xbf16> to vector<8x32xf32>
    %c0_2 = arith.constant 0 : index
    %c0_3 = arith.constant 0 : index
    %4 = vector.load %arg3[%c0_2, %c0_3] : memref<1x32xf32, #tpu.memory_space<vmem>>, vector<1x32xf32>
    %5 = vector.broadcast %4 : vector<1x32xf32> to vector<8x32xf32>
    %6 = arith.addf %3, %5 : vector<8x32xf32>
    %7 = vector.extract_strided_slice %1 {offsets = [0, 32], sizes = [8, 32], strides = [1, 1]} : vector<8x96xbf16> to vector<8x32xbf16>
    %8 = vector.extract_strided_slice %1 {offsets = [0, 64], sizes = [8, 32], strides = [1, 1]} : vector<8x96xbf16> to vector<8x32xbf16>
    %9 = vector.extract_strided_slice %6 {offsets = [0, 0], sizes = [8, 8], strides = [1, 1]} : vector<8x32xf32> to vector<8x8xf32>
    %10 = arith.truncf %9 : vector<8x8xf32> to vector<8x8xbf16>
    %11 = vector.extract_strided_slice %7 {offsets = [0, 0], sizes = [8, 8], strides = [1, 1]} : vector<8x32xbf16> to vector<8x8xbf16>
    %12 = vector.extract_strided_slice %8 {offsets = [0, 0], sizes = [8, 8], strides = [1, 1]} : vector<8x32xbf16> to vector<8x8xbf16>
    %cst = arith.constant dense<0.000000e+00> : vector<8x8xf32>
    %13 = tpu.matmul %10, %11, %cst {dimension_numbers = #tpu.dot_dimension_numbers<[1], [1], [0], [0], [0, 0, 1, 0], [], []>} : vector<8x8xbf16>, vector<8x8xbf16>, vector<8x8xf32> -> vector<8x8xf32>
    %c0_4 = arith.constant 0 : index
    %c0_5 = arith.constant 0 : index
    %c0_6 = arith.constant 0 : index
    %c0_7 = arith.constant 0 : index
    %14 = vector.load %arg2[%c0_4, %c0_5, %c0_6, %c0_7] : memref<1x4x8x8xbf16, #tpu.memory_space<vmem>>, vector<1x1x8x8xbf16>
    %15 = vector.shape_cast %14 : vector<1x1x8x8xbf16> to vector<8x8xbf16>
    %16 = arith.extf %15 : vector<8x8xbf16> to vector<8x8xf32>
    %17 = arith.addf %13, %16 : vector<8x8xf32>
    %cst_8 = arith.constant 0.353553385 : f32
    %18 = vector.broadcast %cst_8 : f32 to vector<8x8xf32>
    %19 = arith.mulf %17, %18 : vector<8x8xf32>
    %cst_9 = arith.constant dense<0xFF800000> : vector<8xf32>
    %20 = vector.multi_reduction <maximumf>, %19, %cst_9 [1] : vector<8x8xf32> to vector<8xf32>
    %21 = vector.shape_cast %20 : vector<8xf32> to vector<8x1xf32>
    %22 = vector.broadcast %21 : vector<8x1xf32> to vector<8x8xf32>
    %23 = arith.subf %19, %22 : vector<8x8xf32>
    %24 = math.exp %23 : vector<8x8xf32>
    %cst_10 = arith.constant dense<0.000000e+00> : vector<8xf32>
    %25 = vector.multi_reduction <add>, %24, %cst_10 [1] : vector<8x8xf32> to vector<8xf32>
    %26 = vector.shape_cast %25 : vector<8xf32> to vector<8x1xf32>
    %27 = vector.broadcast %26 : vector<8x1xf32> to vector<8x8xf32>
    %28 = arith.divf %24, %27 : vector<8x8xf32>
    %29 = arith.truncf %28 : vector<8x8xf32> to vector<8x8xbf16>
    %cst_11 = arith.constant dense<0.000000e+00> : vector<8x8xf32>
    %30 = tpu.matmul %29, %12, %cst_11 {dimension_numbers = #tpu.dot_dimension_numbers<[1], [0], [0], [1], [0, 0, 1, 1], [], []>} : vector<8x8xbf16>, vector<8x8xbf16>, vector<8x8xf32> -> vector<8x8xf32>
    %31 = vector.extract_strided_slice %6 {offsets = [0, 8], sizes = [8, 8], strides = [1, 1]} : vector<8x32xf32> to vector<8x8xf32>
    %32 = arith.truncf %31 : vector<8x8xf32> to vector<8x8xbf16>
    %33 = vector.extract_strided_slice %7 {offsets = [0, 8], sizes = [8, 8], strides = [1, 1]} : vector<8x32xbf16> to vector<8x8xbf16>
    %34 = vector.extract_strided_slice %8 {offsets = [0, 8], sizes = [8, 8], strides = [1, 1]} : vector<8x32xbf16> to vector<8x8xbf16>
    %cst_12 = arith.constant dense<0.000000e+00> : vector<8x8xf32>
    %35 = tpu.matmul %32, %33, %cst_12 {dimension_numbers = #tpu.dot_dimension_numbers<[1], [1], [0], [0], [0, 0, 1, 0], [], []>} : vector<8x8xbf16>, vector<8x8xbf16>, vector<8x8xf32> -> vector<8x8xf32>
    %c0_13 = arith.constant 0 : index
    %c1 = arith.constant 1 : index
    %c0_14 = arith.constant 0 : index
    %c0_15 = arith.constant 0 : index
    %36 = vector.load %arg2[%c0_13, %c1, %c0_14, %c0_15] : memref<1x4x8x8xbf16, #tpu.memory_space<vmem>>, vector<1x1x8x8xbf16>
    %37 = vector.shape_cast %36 : vector<1x1x8x8xbf16> to vector<8x8xbf16>
    %38 = arith.extf %37 : vector<8x8xbf16> to vector<8x8xf32>
    %39 = arith.addf %35, %38 : vector<8x8xf32>
    %cst_16 = arith.constant 0.353553385 : f32
    %40 = vector.broadcast %cst_16 : f32 to vector<8x8xf32>
    %41 = arith.mulf %39, %40 : vector<8x8xf32>
    %cst_17 = arith.constant dense<0xFF800000> : vector<8xf32>
    %42 = vector.multi_reduction <maximumf>, %41, %cst_17 [1] : vector<8x8xf32> to vector<8xf32>
    %43 = vector.shape_cast %42 : vector<8xf32> to vector<8x1xf32>
    %44 = vector.broadcast %43 : vector<8x1xf32> to vector<8x8xf32>
    %45 = arith.subf %41, %44 : vector<8x8xf32>
    %46 = math.exp %45 : vector<8x8xf32>
    %cst_18 = arith.constant dense<0.000000e+00> : vector<8xf32>
    %47 = vector.multi_reduction <add>, %46, %cst_18 [1] : vector<8x8xf32> to vector<8xf32>
    %48 = vector.shape_cast %47 : vector<8xf32> to vector<8x1xf32>
    %49 = vector.broadcast %48 : vector<8x1xf32> to vector<8x8xf32>
    %50 = arith.divf %46, %49 : vector<8x8xf32>
    %51 = arith.truncf %50 : vector<8x8xf32> to vector<8x8xbf16>
    %cst_19 = arith.constant dense<0.000000e+00> : vector<8x8xf32>
    %52 = tpu.matmul %51, %34, %cst_19 {dimension_numbers = #tpu.dot_dimension_numbers<[1], [0], [0], [1], [0, 0, 1, 1], [], []>} : vector<8x8xbf16>, vector<8x8xbf16>, vector<8x8xf32> -> vector<8x8xf32>
    %53 = vector.extract_strided_slice %6 {offsets = [0, 16], sizes = [8, 8], strides = [1, 1]} : vector<8x32xf32> to vector<8x8xf32>
    %54 = arith.truncf %53 : vector<8x8xf32> to vector<8x8xbf16>
    %55 = vector.extract_strided_slice %7 {offsets = [0, 16], sizes = [8, 8], strides = [1, 1]} : vector<8x32xbf16> to vector<8x8xbf16>
    %56 = vector.extract_strided_slice %8 {offsets = [0, 16], sizes = [8, 8], strides = [1, 1]} : vector<8x32xbf16> to vector<8x8xbf16>
    %cst_20 = arith.constant dense<0.000000e+00> : vector<8x8xf32>
    %57 = tpu.matmul %54, %55, %cst_20 {dimension_numbers = #tpu.dot_dimension_numbers<[1], [1], [0], [0], [0, 0, 1, 0], [], []>} : vector<8x8xbf16>, vector<8x8xbf16>, vector<8x8xf32> -> vector<8x8xf32>
    %c0_21 = arith.constant 0 : index
    %c2 = arith.constant 2 : index
    %c0_22 = arith.constant 0 : index
    %c0_23 = arith.constant 0 : index
    %58 = vector.load %arg2[%c0_21, %c2, %c0_22, %c0_23] : memref<1x4x8x8xbf16, #tpu.memory_space<vmem>>, vector<1x1x8x8xbf16>
    %59 = vector.shape_cast %58 : vector<1x1x8x8xbf16> to vector<8x8xbf16>
    %60 = arith.extf %59 : vector<8x8xbf16> to vector<8x8xf32>
    %61 = arith.addf %57, %60 : vector<8x8xf32>
    %cst_24 = arith.constant 0.353553385 : f32
    %62 = vector.broadcast %cst_24 : f32 to vector<8x8xf32>
    %63 = arith.mulf %61, %62 : vector<8x8xf32>
    %cst_25 = arith.constant dense<0xFF800000> : vector<8xf32>
    %64 = vector.multi_reduction <maximumf>, %63, %cst_25 [1] : vector<8x8xf32> to vector<8xf32>
    %65 = vector.shape_cast %64 : vector<8xf32> to vector<8x1xf32>
    %66 = vector.broadcast %65 : vector<8x1xf32> to vector<8x8xf32>
    %67 = arith.subf %63, %66 : vector<8x8xf32>
    %68 = math.exp %67 : vector<8x8xf32>
    %cst_26 = arith.constant dense<0.000000e+00> : vector<8xf32>
    %69 = vector.multi_reduction <add>, %68, %cst_26 [1] : vector<8x8xf32> to vector<8xf32>
    %70 = vector.shape_cast %69 : vector<8xf32> to vector<8x1xf32>
    %71 = vector.broadcast %70 : vector<8x1xf32> to vector<8x8xf32>
    %72 = arith.divf %68, %71 : vector<8x8xf32>
    %73 = arith.truncf %72 : vector<8x8xf32> to vector<8x8xbf16>
    %cst_27 = arith.constant dense<0.000000e+00> : vector<8x8xf32>
    %74 = tpu.matmul %73, %56, %cst_27 {dimension_numbers = #tpu.dot_dimension_numbers<[1], [0], [0], [1], [0, 0, 1, 1], [], []>} : vector<8x8xbf16>, vector<8x8xbf16>, vector<8x8xf32> -> vector<8x8xf32>
    %75 = vector.extract_strided_slice %6 {offsets = [0, 24], sizes = [8, 8], strides = [1, 1]} : vector<8x32xf32> to vector<8x8xf32>
    %76 = arith.truncf %75 : vector<8x8xf32> to vector<8x8xbf16>
    %77 = vector.extract_strided_slice %7 {offsets = [0, 24], sizes = [8, 8], strides = [1, 1]} : vector<8x32xbf16> to vector<8x8xbf16>
    %78 = vector.extract_strided_slice %8 {offsets = [0, 24], sizes = [8, 8], strides = [1, 1]} : vector<8x32xbf16> to vector<8x8xbf16>
    %cst_28 = arith.constant dense<0.000000e+00> : vector<8x8xf32>
    %79 = tpu.matmul %76, %77, %cst_28 {dimension_numbers = #tpu.dot_dimension_numbers<[1], [1], [0], [0], [0, 0, 1, 0], [], []>} : vector<8x8xbf16>, vector<8x8xbf16>, vector<8x8xf32> -> vector<8x8xf32>
    %c0_29 = arith.constant 0 : index
    %c3 = arith.constant 3 : index
    %c0_30 = arith.constant 0 : index
    %c0_31 = arith.constant 0 : index
    %80 = vector.load %arg2[%c0_29, %c3, %c0_30, %c0_31] : memref<1x4x8x8xbf16, #tpu.memory_space<vmem>>, vector<1x1x8x8xbf16>
    %81 = vector.shape_cast %80 : vector<1x1x8x8xbf16> to vector<8x8xbf16>
    %82 = arith.extf %81 : vector<8x8xbf16> to vector<8x8xf32>
    %83 = arith.addf %79, %82 : vector<8x8xf32>
    %cst_32 = arith.constant 0.353553385 : f32
    %84 = vector.broadcast %cst_32 : f32 to vector<8x8xf32>
    %85 = arith.mulf %83, %84 : vector<8x8xf32>
    %cst_33 = arith.constant dense<0xFF800000> : vector<8xf32>
    %86 = vector.multi_reduction <maximumf>, %85, %cst_33 [1] : vector<8x8xf32> to vector<8xf32>
    %87 = vector.shape_cast %86 : vector<8xf32> to vector<8x1xf32>
    %88 = vector.broadcast %87 : vector<8x1xf32> to vector<8x8xf32>
    %89 = arith.subf %85, %88 : vector<8x8xf32>
    %90 = math.exp %89 : vector<8x8xf32>
    %cst_34 = arith.constant dense<0.000000e+00> : vector<8xf32>
    %91 = vector.multi_reduction <add>, %90, %cst_34 [1] : vector<8x8xf32> to vector<8xf32>
    %92 = vector.shape_cast %91 : vector<8xf32> to vector<8x1xf32>
    %93 = vector.broadcast %92 : vector<8x1xf32> to vector<8x8xf32>
    %94 = arith.divf %90, %93 : vector<8x8xf32>
    %95 = arith.truncf %94 : vector<8x8xf32> to vector<8x8xbf16>
    %cst_35 = arith.constant dense<0.000000e+00> : vector<8x8xf32>
    %96 = tpu.matmul %95, %78, %cst_35 {dimension_numbers = #tpu.dot_dimension_numbers<[1], [0], [0], [1], [0, 0, 1, 1], [], []>} : vector<8x8xbf16>, vector<8x8xbf16>, vector<8x8xf32> -> vector<8x8xf32>
    %97 = tpu.concatenate %30, %52, %74, %96 in 1 : vector<8x8xf32>, vector<8x8xf32>, vector<8x8xf32>, vector<8x8xf32> -> vector<8x32xf32>
    %98 = arith.truncf %97 : vector<8x32xf32> to vector<8x32xbf16>
    %c0_36 = arith.constant 0 : index
    %c0_37 = arith.constant 0 : index
    %c0_38 = arith.constant 0 : index
    %99 = vector.load %arg4[%c0_36, %c0_37, %c0_38] : memref<1x8x32xbf16, #tpu.memory_space<vmem>>, vector<1x8x32xbf16>
    %100 = vector.shape_cast %99 : vector<1x8x32xbf16> to vector<8x32xbf16>
    %101 = vector.shape_cast %98 : vector<8x32xbf16> to vector<1x8x32xbf16>
    tpu.vector_store %arg4[%c0_36, %c0_37, %c0_38], %101 {strides = array<i32>} : memref<1x8x32xbf16, #tpu.memory_space<vmem>>, vector<1x8x32xbf16>,
    return
  }
  func.func @transform_0(%arg0: i32) -> (i32, i32, i32) {
    %c0_i32 = arith.constant 0 : i32
    %c0_i32_0 = arith.constant 0 : i32
    %c0_i32_1 = arith.constant 0 : i32
    return %arg0, %c0_i32, %c0_i32_0 : i32, i32, i32
  }
  func.func @transform_1(%arg0: i32) -> (i32, i32, i32, i32) {
    %c0_i32 = arith.constant 0 : i32
    %c0_i32_0 = arith.constant 0 : i32
    %c0_i32_1 = arith.constant 0 : i32
    %c0_i32_2 = arith.constant 0 : i32
    return %arg0, %c0_i32, %c0_i32_0, %c0_i32_1 : i32, i32, i32, i32
  }
  func.func @transform_2(%arg0: i32) -> (i32, i32) {
    %c0_i32 = arith.constant 0 : i32
    %c0_i32_0 = arith.constant 0 : i32
    %c0_i32_1 = arith.constant 0 : i32
    return %c0_i32, %c0_i32_0 : i32, i32
  }
  func.func @transform_3(%arg0: i32) -> (i32, i32, i32) {
    %c0_i32 = arith.constant 0 : i32
    %c0_i32_0 = arith.constant 0 : i32
    %c0_i32_1 = arith.constant 0 : i32
    return %arg0, %c0_i32, %c0_i32_0 : i32, i32, i32
  }
}

module attributes {stable_mosaic.version = 11 : i64} {
  func.func @_post_attn_ffn_kernel(%arg0: i32, %arg1: memref<32x32xf32, #tpu.memory_space<vmem>>, %arg2: memref<32x32xbf16, #tpu.memory_space<vmem>>, %arg3: memref<32x32xbf16, #tpu.memory_space<vmem>>, %arg4: memref<1x32xf32, #tpu.memory_space<vmem>>, %arg5: memref<1x32xf32, #tpu.memory_space<vmem>>, %arg6: memref<32x64xbf16, #tpu.memory_space<vmem>>, %arg7: memref<1x64xf32, #tpu.memory_space<vmem>>, %arg8: memref<64x32xbf16, #tpu.memory_space<vmem>>, %arg9: memref<1x32xf32, #tpu.memory_space<vmem>>, %arg10: memref<32x32xf32, #tpu.memory_space<vmem>>) attributes {dimension_semantics = [#tpu.dimension_semantics<parallel>], iteration_bounds = array<i64: 1>, scalar_prefetch = 0 : i64, scratch_operands = 0 : i64, tpu.core_type = #tpu.core_type<tc>, window_params = [{transform_indices = @transform_0, window_bounds = array<i64: 32, 32>}, {transform_indices = @transform_1, window_bounds = array<i64: 32, 32>}, {pipeline_mode = #tpu.pipeline_mode<synchronous>, transform_indices = @transform_2, window_bounds = array<i64: 32, 32>}, {pipeline_mode = #tpu.pipeline_mode<synchronous>, transform_indices = @transform_3, window_bounds = array<i64: 1, 32>}, {pipeline_mode = #tpu.pipeline_mode<synchronous>, transform_indices = @transform_4, window_bounds = array<i64: 1, 32>}, {pipeline_mode = #tpu.pipeline_mode<synchronous>, transform_indices = @transform_5, window_bounds = array<i64: 32, 64>}, {pipeline_mode = #tpu.pipeline_mode<synchronous>, transform_indices = @transform_6, window_bounds = array<i64: 1, 64>}, {pipeline_mode = #tpu.pipeline_mode<synchronous>, transform_indices = @transform_7, window_bounds = array<i64: 64, 32>}, {pipeline_mode = #tpu.pipeline_mode<synchronous>, transform_indices = @transform_8, window_bounds = array<i64: 1, 32>}, {transform_indices = @transform_9, window_bounds = array<i64: 32, 32>}]} {
    %c0 = arith.constant 0 : index
    %c0_0 = arith.constant 0 : index
    %0 = vector.load %arg1[%c0, %c0_0] : memref<32x32xf32, #tpu.memory_space<vmem>>, vector<32x32xf32>
    %c0_1 = arith.constant 0 : index
    %c0_2 = arith.constant 0 : index
    %1 = vector.load %arg2[%c0_1, %c0_2] : memref<32x32xbf16, #tpu.memory_space<vmem>>, vector<32x32xbf16>
    %c0_3 = arith.constant 0 : index
    %c0_4 = arith.constant 0 : index
    %2 = vector.load %arg3[%c0_3, %c0_4] : memref<32x32xbf16, #tpu.memory_space<vmem>>, vector<32x32xbf16>
    %cst = arith.constant dense<0.000000e+00> : vector<32x32xf32>
    %3 = tpu.matmul %1, %2, %cst {dimension_numbers = #tpu.dot_dimension_numbers<[1], [0], [0], [1], [0, 0, 1, 1], [], []>} : vector<32x32xbf16>, vector<32x32xbf16>, vector<32x32xf32> -> vector<32x32xf32>
    %4 = arith.addf %0, %3 : vector<32x32xf32>
    %cst_5 = arith.constant dense<0.000000e+00> : vector<32xf32>
    %5 = vector.multi_reduction <add>, %4, %cst_5 [1] : vector<32x32xf32> to vector<32xf32>
    %6 = vector.shape_cast %5 : vector<32xf32> to vector<32x1xf32>
    %cst_6 = arith.constant 3.200000e+01 : f32
    %7 = vector.broadcast %cst_6 : f32 to vector<32x1xf32>
    %8 = arith.divf %6, %7 : vector<32x1xf32>
    %9 = vector.broadcast %8 : vector<32x1xf32> to vector<32x32xf32>
    %10 = arith.subf %4, %9 : vector<32x32xf32>
    %11 = arith.mulf %10, %10 : vector<32x32xf32>
    %cst_7 = arith.constant dense<0.000000e+00> : vector<32xf32>
    %12 = vector.multi_reduction <add>, %11, %cst_7 [1] : vector<32x32xf32> to vector<32xf32>
    %13 = vector.shape_cast %12 : vector<32xf32> to vector<32x1xf32>
    %cst_8 = arith.constant 3.200000e+01 : f32
    %14 = vector.broadcast %cst_8 : f32 to vector<32x1xf32>
    %15 = arith.divf %13, %14 : vector<32x1xf32>
    %cst_9 = arith.constant 9.99999974E-6 : f32
    %16 = vector.broadcast %cst_9 : f32 to vector<32x1xf32>
    %17 = arith.addf %15, %16 : vector<32x1xf32>
    %18 = math.rsqrt %17 : vector<32x1xf32>
    %19 = vector.broadcast %18 : vector<32x1xf32> to vector<32x32xf32>
    %20 = arith.mulf %10, %19 : vector<32x32xf32>
    %c0_10 = arith.constant 0 : index
    %c0_11 = arith.constant 0 : index
    %21 = vector.load %arg4[%c0_10, %c0_11] : memref<1x32xf32, #tpu.memory_space<vmem>>, vector<1x32xf32>
    %22 = vector.broadcast %21 : vector<1x32xf32> to vector<32x32xf32>
    %23 = arith.mulf %20, %22 : vector<32x32xf32>
    %c0_12 = arith.constant 0 : index
    %c0_13 = arith.constant 0 : index
    %24 = vector.load %arg5[%c0_12, %c0_13] : memref<1x32xf32, #tpu.memory_space<vmem>>, vector<1x32xf32>
    %25 = vector.broadcast %24 : vector<1x32xf32> to vector<32x32xf32>
    %26 = arith.addf %23, %25 : vector<32x32xf32>
    %27 = arith.truncf %26 : vector<32x32xf32> to vector<32x32xbf16>
    %c0_14 = arith.constant 0 : index
    %c0_15 = arith.constant 0 : index
    %28 = vector.load %arg6[%c0_14, %c0_15] : memref<32x64xbf16, #tpu.memory_space<vmem>>, vector<32x64xbf16>
    %cst_16 = arith.constant dense<0.000000e+00> : vector<32x64xf32>
    %29 = tpu.matmul %27, %28, %cst_16 {dimension_numbers = #tpu.dot_dimension_numbers<[1], [0], [0], [1], [0, 0, 1, 1], [], []>} : vector<32x32xbf16>, vector<32x64xbf16>, vector<32x64xf32> -> vector<32x64xf32>
    %c0_17 = arith.constant 0 : index
    %c0_18 = arith.constant 0 : index
    %30 = vector.load %arg7[%c0_17, %c0_18] : memref<1x64xf32, #tpu.memory_space<vmem>>, vector<1x64xf32>
    %31 = vector.broadcast %30 : vector<1x64xf32> to vector<32x64xf32>
    %32 = arith.addf %29, %31 : vector<32x64xf32>
    %cst_19 = arith.constant 0.000000e+00 : f32
    %33 = vector.broadcast %cst_19 : f32 to vector<32x64xf32>
    %34 = arith.maximumf %32, %33 : vector<32x64xf32>
    %35 = arith.truncf %34 : vector<32x64xf32> to vector<32x64xbf16>
    %c0_20 = arith.constant 0 : index
    %c0_21 = arith.constant 0 : index
    %36 = vector.load %arg8[%c0_20, %c0_21] : memref<64x32xbf16, #tpu.memory_space<vmem>>, vector<64x32xbf16>
    %cst_22 = arith.constant dense<0.000000e+00> : vector<32x32xf32>
    %37 = tpu.matmul %35, %36, %cst_22 {dimension_numbers = #tpu.dot_dimension_numbers<[1], [0], [0], [1], [0, 0, 1, 1], [], []>} : vector<32x64xbf16>, vector<64x32xbf16>, vector<32x32xf32> -> vector<32x32xf32>
    %c0_23 = arith.constant 0 : index
    %c0_24 = arith.constant 0 : index
    %38 = vector.load %arg9[%c0_23, %c0_24] : memref<1x32xf32, #tpu.memory_space<vmem>>, vector<1x32xf32>
    %39 = vector.broadcast %38 : vector<1x32xf32> to vector<32x32xf32>
    %40 = arith.addf %37, %39 : vector<32x32xf32>
    %41 = arith.addf %4, %40 : vector<32x32xf32>
    %c0_25 = arith.constant 0 : index
    %c0_26 = arith.constant 0 : index
    %42 = vector.load %arg10[%c0_25, %c0_26] : memref<32x32xf32, #tpu.memory_space<vmem>>, vector<32x32xf32>
    tpu.vector_store %arg10[%c0_25, %c0_26], %41 {strides = array<i32>} : memref<32x32xf32, #tpu.memory_space<vmem>>, vector<32x32xf32>,
    return
  }
  func.func @transform_0(%arg0: i32) -> (i32, i32) {
    %c0_i32 = arith.constant 0 : i32
    %c0_i32_0 = arith.constant 0 : i32
    return %arg0, %c0_i32 : i32, i32
  }
  func.func @transform_1(%arg0: i32) -> (i32, i32) {
    %c0_i32 = arith.constant 0 : i32
    %c0_i32_0 = arith.constant 0 : i32
    return %arg0, %c0_i32 : i32, i32
  }
  func.func @transform_2(%arg0: i32) -> (i32, i32) {
    %c0_i32 = arith.constant 0 : i32
    %c0_i32_0 = arith.constant 0 : i32
    %c0_i32_1 = arith.constant 0 : i32
    return %c0_i32, %c0_i32_0 : i32, i32
  }
  func.func @transform_3(%arg0: i32) -> (i32, i32) {
    %c0_i32 = arith.constant 0 : i32
    %c0_i32_0 = arith.constant 0 : i32
    %c0_i32_1 = arith.constant 0 : i32
    return %c0_i32, %c0_i32_0 : i32, i32
  }
  func.func @transform_4(%arg0: i32) -> (i32, i32) {
    %c0_i32 = arith.constant 0 : i32
    %c0_i32_0 = arith.constant 0 : i32
    %c0_i32_1 = arith.constant 0 : i32
    return %c0_i32, %c0_i32_0 : i32, i32
  }
  func.func @transform_5(%arg0: i32) -> (i32, i32) {
    %c0_i32 = arith.constant 0 : i32
    %c0_i32_0 = arith.constant 0 : i32
    %c0_i32_1 = arith.constant 0 : i32
    return %c0_i32, %c0_i32_0 : i32, i32
  }
  func.func @transform_6(%arg0: i32) -> (i32, i32) {
    %c0_i32 = arith.constant 0 : i32
    %c0_i32_0 = arith.constant 0 : i32
    %c0_i32_1 = arith.constant 0 : i32
    return %c0_i32, %c0_i32_0 : i32, i32
  }
  func.func @transform_7(%arg0: i32) -> (i32, i32) {
    %c0_i32 = arith.constant 0 : i32
    %c0_i32_0 = arith.constant 0 : i32
    %c0_i32_1 = arith.constant 0 : i32
    return %c0_i32, %c0_i32_0 : i32, i32
  }
  func.func @transform_8(%arg0: i32) -> (i32, i32) {
    %c0_i32 = arith.constant 0 : i32
    %c0_i32_0 = arith.constant 0 : i32
    %c0_i32_1 = arith.constant 0 : i32
    return %c0_i32, %c0_i32_0 : i32, i32
  }
  func.func @transform_9(%arg0: i32) -> (i32, i32) {
    %c0_i32 = arith.constant 0 : i32
    %c0_i32_0 = arith.constant 0 : i32
    return %arg0, %c0_i32 : i32, i32
  }
}

module attributes {stable_mosaic.version = 11 : i64} {
  func.func @_layernorm_kernel(%arg0: i32, %arg1: memref<32x32xf32, #tpu.memory_space<vmem>>, %arg2: memref<1x32xf32, #tpu.memory_space<vmem>>, %arg3: memref<1x32xf32, #tpu.memory_space<vmem>>, %arg4: memref<32x32xf32, #tpu.memory_space<vmem>>) attributes {dimension_semantics = [#tpu.dimension_semantics<parallel>], iteration_bounds = array<i64: 1>, scalar_prefetch = 0 : i64, scratch_operands = 0 : i64, tpu.core_type = #tpu.core_type<tc>, window_params = [{transform_indices = @transform_0, window_bounds = array<i64: 32, 32>}, {pipeline_mode = #tpu.pipeline_mode<synchronous>, transform_indices = @transform_1, window_bounds = array<i64: 1, 32>}, {pipeline_mode = #tpu.pipeline_mode<synchronous>, transform_indices = @transform_2, window_bounds = array<i64: 1, 32>}, {transform_indices = @transform_3, window_bounds = array<i64: 32, 32>}]} {
    %c0 = arith.constant 0 : index
    %c0_0 = arith.constant 0 : index
    %0 = vector.load %arg1[%c0, %c0_0] : memref<32x32xf32, #tpu.memory_space<vmem>>, vector<32x32xf32>
    %cst = arith.constant dense<0.000000e+00> : vector<32xf32>
    %1 = vector.multi_reduction <add>, %0, %cst [1] : vector<32x32xf32> to vector<32xf32>
    %2 = vector.shape_cast %1 : vector<32xf32> to vector<32x1xf32>
    %cst_1 = arith.constant 3.200000e+01 : f32
    %3 = vector.broadcast %cst_1 : f32 to vector<32x1xf32>
    %4 = arith.divf %2, %3 : vector<32x1xf32>
    %5 = vector.broadcast %4 : vector<32x1xf32> to vector<32x32xf32>
    %6 = arith.subf %0, %5 : vector<32x32xf32>
    %7 = arith.mulf %6, %6 : vector<32x32xf32>
    %cst_2 = arith.constant dense<0.000000e+00> : vector<32xf32>
    %8 = vector.multi_reduction <add>, %7, %cst_2 [1] : vector<32x32xf32> to vector<32xf32>
    %9 = vector.shape_cast %8 : vector<32xf32> to vector<32x1xf32>
    %cst_3 = arith.constant 3.200000e+01 : f32
    %10 = vector.broadcast %cst_3 : f32 to vector<32x1xf32>
    %11 = arith.divf %9, %10 : vector<32x1xf32>
    %cst_4 = arith.constant 9.99999996E-13 : f32
    %12 = vector.broadcast %cst_4 : f32 to vector<32x1xf32>
    %13 = arith.addf %11, %12 : vector<32x1xf32>
    %14 = math.rsqrt %13 : vector<32x1xf32>
    %15 = vector.broadcast %14 : vector<32x1xf32> to vector<32x32xf32>
    %16 = arith.mulf %6, %15 : vector<32x32xf32>
    %c0_5 = arith.constant 0 : index
    %c0_6 = arith.constant 0 : index
    %17 = vector.load %arg2[%c0_5, %c0_6] : memref<1x32xf32, #tpu.memory_space<vmem>>, vector<1x32xf32>
    %18 = vector.broadcast %17 : vector<1x32xf32> to vector<32x32xf32>
    %19 = arith.mulf %16, %18 : vector<32x32xf32>
    %c0_7 = arith.constant 0 : index
    %c0_8 = arith.constant 0 : index
    %20 = vector.load %arg3[%c0_7, %c0_8] : memref<1x32xf32, #tpu.memory_space<vmem>>, vector<1x32xf32>
    %21 = vector.broadcast %20 : vector<1x32xf32> to vector<32x32xf32>
    %22 = arith.addf %19, %21 : vector<32x32xf32>
    %c0_9 = arith.constant 0 : index
    %c0_10 = arith.constant 0 : index
    %23 = vector.load %arg4[%c0_9, %c0_10] : memref<32x32xf32, #tpu.memory_space<vmem>>, vector<32x32xf32>
    tpu.vector_store %arg4[%c0_9, %c0_10], %22 {strides = array<i32>} : memref<32x32xf32, #tpu.memory_space<vmem>>, vector<32x32xf32>,
    return
  }
  func.func @transform_0(%arg0: i32) -> (i32, i32) {
    %c0_i32 = arith.constant 0 : i32
    %c0_i32_0 = arith.constant 0 : i32
    return %arg0, %c0_i32 : i32, i32
  }
  func.func @transform_1(%arg0: i32) -> (i32, i32) {
    %c0_i32 = arith.constant 0 : i32
    %c0_i32_0 = arith.constant 0 : i32
    %c0_i32_1 = arith.constant 0 : i32
    return %c0_i32, %c0_i32_0 : i32, i32
  }
  func.func @transform_2(%arg0: i32) -> (i32, i32) {
    %c0_i32 = arith.constant 0 : i32
    %c0_i32_0 = arith.constant 0 : i32
    %c0_i32_1 = arith.constant 0 : i32
    return %c0_i32, %c0_i32_0 : i32, i32
  }
  func.func @transform_3(%arg0: i32) -> (i32, i32) {
    %c0_i32 = arith.constant 0 : i32
    %c0_i32_0 = arith.constant 0 : i32
    return %arg0, %c0_i32 : i32, i32
  }
}

</mosaic_0001>

<llo_original>
// kernel: encoder_forward.11
$region0: #{encoder_forward.11}
  #allocation0 [shape = 'u32[]', space=smem, size = 0x4, offset = 0x4, fixed_abs, tag = 'smem constant byte address 0x4 - core index']
  #allocation1 [shape = 'u32[144,128]{1,0:T(1,128)}', space=vmem, size = 0x12000, scoped, tag = 'internal scratch']
  %s0 = inlined_call_operand.vmem [shape: f32[594,9], index: 0, kind: input, shape index: {}]
  %s1 = inlined_call_operand.vmem [shape: f32[9,32], index: 1, kind: input, shape index: {}]
  %s2 = inlined_call_operand.vmem [shape: f32[1,32], index: 2, kind: input, shape index: {}]
  %s3 = inlined_call_operand.vmem [shape: bf16[594,32], index: 3, kind: output, shape index: {}]
  %s4 = sld [smem:[#allocation0]]
  $region89: #{encoder_forward.11} parent=0
    _
  %s6 = ssub.s32 1, %s4
  %s7 = scalar_select 0, %s6, %s4
  $region1: #{encoder_forward.11} parent=0
    #allocation2 [shape = 'u8[262144]{0}', space=vmem, size = 0x40000, scoped, tag = 'output window, operand 0']
    loop: start=0, step=1, limit=4
    $region2: #{encoder_forward.11} parent=1 // loop_pre_header
      _
    $region3: #{encoder_forward.11} parent=1 // loop_header
      %s9 = sphi 0, %s13
      %p10 = scmp.ge.s32.totalorder %s9, 4
      %s19 = sphi 0, %s21
      %s22 = sphi 0, %s19
      %s23 = sphi 0, %s22
      %s39 = sphi 0, %s23
      %s43 = sphi 0, %s43
      %s45 = sphi 0, %s43
      %s46 = sphi 0, %s45
      %s60 = sphi 0, %s46
      %s64 = sphi 0, %s64
      %s66 = sphi 0, %s64
      %s67 = sphi 0, %s66
      %s81 = sphi 0, %s67
      %s87 = sphi 0, %s89
      %s90 = sphi 0, %s87
      %s91 = sphi 0, %s90
      %s107 = sphi 0, %s91
    $region4: #{encoder_forward.11} parent=1 // loop_header_branch
      %12 = sbr.rel (%p10) target = $region8
    $region5: #{encoder_forward.11} parent=1 // loop_body
      %s14 = ssub.s32 %s9, 1
      %s15 = ssub.s32 %s9, 2
      %s16 = sadd.s32 %s9, 1
      %s17 = ssub.s32 %s9, %s16
      %p18 = scmp.eq.s32.totalorder %s17, 0
      %s20 = sadd.s32 %s19, 1
      %s21 = scalar_select %p18, %s19, %s20
      %p24 = pneg %p18
      %p25 = scmp.eq.s32.totalorder %s9, 1
      %p26 = por %p24, %p25
      %p27 = scmp.ne.s32.totalorder %s19, %s22
      %p28 = scmp.eq.s32.totalorder %s9, 0
      %p29 = por %p27, %p28
      %p30 = scmp.ne.s32.totalorder %s19, %s22
      %p31 = scmp.eq.s32.totalorder %s14, 1
      %p32 = por %p30, %p31
      %p33 = scmp.ne.s32.totalorder %s22, %s23
      %p34 = scmp.eq.s32.totalorder %s14, 0
      %p35 = por %p33, %p34
      %p36 = scmp.ne.s32.totalorder %s22, %s23
      %p37 = scmp.eq.s32.totalorder %s15, 1
      %p38 = por %p36, %p37
      %p40 = scmp.ne.s32.totalorder %s23, %s39
      %p41 = scmp.eq.s32.totalorder %s15, 0
      %p42 = por %p40, %p41
      %s44 = sadd.s32 %s43, 1
      %p47 = scmp.eq.s32.totalorder %s9, 1
      %p48 = scmp.ne.s32.totalorder %s43, %s45
      %p49 = scmp.eq.s32.totalorder %s9, 0
      %p50 = por %p48, %p49
      %p51 = scmp.ne.s32.totalorder %s43, %s45
      %p52 = scmp.eq.s32.totalorder %s14, 1
      %p53 = por %p51, %p52
      %p54 = scmp.ne.s32.totalorder %s45, %s46
      %p55 = scmp.eq.s32.totalorder %s14, 0
      %p56 = por %p54, %p55
      %p57 = scmp.ne.s32.totalorder %s45, %s46
      %p58 = scmp.eq.s32.totalorder %s15, 1
      %p59 = por %p57, %p58
      %p61 = scmp.ne.s32.totalorder %s46, %s60
      %p62 = scmp.eq.s32.totalorder %s15, 0
      %p63 = por %p61, %p62
      %s65 = sadd.s32 %s64, 1
      %p68 = scmp.eq.s32.totalorder %s9, 1
      %p69 = scmp.ne.s32.totalorder %s64, %s66
      %p70 = scmp.eq.s32.totalorder %s9, 0
      %p71 = por %p69, %p70
      %p72 = scmp.ne.s32.totalorder %s64, %s66
      %p73 = scmp.eq.s32.totalorder %s14, 1
      %p74 = por %p72, %p73
      %p75 = scmp.ne.s32.totalorder %s66, %s67
      %p76 = scmp.eq.s32.totalorder %s14, 0
      %p77 = por %p75, %p76
      %p78 = scmp.ne.s32.totalorder %s66, %s67
      %p79 = scmp.eq.s32.totalorder %s15, 1
      %p80 = por %p78, %p79
      %p82 = scmp.ne.s32.totalorder %s67, %s81
      %p83 = scmp.eq.s32.totalorder %s15, 0
      %p84 = por %p82, %p83
      %s85 = ssub.s32 %s9, %s16
      %p86 = scmp.eq.s32.totalorder %s85, 0
      %s88 = sadd.s32 %s87, 1
      %s89 = scalar_select %p86, %s87, %s88
      %p92 = pneg %p86
      %p93 = scmp.eq.s32.totalorder %s9, 1
      %p94 = por %p92, %p93
      %p95 = scmp.ne.s32.totalorder %s87, %s90
      %p96 = scmp.eq.s32.totalorder %s9, 0
      %p97 = por %p95, %p96
      %p98 = scmp.ne.s32.totalorder %s87, %s90
      %p99 = scmp.eq.s32.totalorder %s14, 1
      %p100 = por %p98, %p99
      %p101 = scmp.ne.s32.totalorder %s90, %s91
      %p102 = scmp.eq.s32.totalorder %s14, 0
      %p103 = por %p101, %p102
      %p104 = scmp.ne.s32.totalorder %s90, %s91
      %p105 = scmp.eq.s32.totalorder %s15, 1
      %p106 = por %p104, %p105
      %p108 = scmp.ne.s32.totalorder %s91, %s107
      %p109 = scmp.eq.s32.totalorder %s15, 0
      %p110 = por %p108, %p109
      %p111 = scmp.le.s32.totalorder 1, %s9
      %p112 = scmp.lt.s32.totalorder %s9, 3
      %p113 = pnand %p111, %p112
      %p114 = pneg %p113
      // Predicated region
      $region9: #{encoder_forward.11} parent=5 // pred_check
        _
      $region10: #{encoder_forward.11} parent=5 // pred_check_branch
        %116 = sbr.rel (%p113) target = $region12
      $region11: #{encoder_forward.11} parent=5 // pred_region
        %s117 = ssub.s32 %s9, 1
        // Predicated region
        $region13: #{encoder_forward.11} parent=11 // pred_check
          %p118 = pneg %p56
        $region14: #{encoder_forward.11} parent=11 // pred_check_branch
          %120 = sbr.rel (%p118) target = $region16
        $region15: #{encoder_forward.11} parent=11 // pred_region
          _
        $region16: #{encoder_forward.11} parent=11 // pred_fallthru
          _
        // Predicated region
        $region17: #{encoder_forward.11} parent=11 // pred_check
          %p121 = pneg %p77
        $region18: #{encoder_forward.11} parent=11 // pred_check_branch
          %123 = sbr.rel (%p121) target = $region20
        $region19: #{encoder_forward.11} parent=11 // pred_region
          _
        $region20: #{encoder_forward.11} parent=11 // pred_fallthru
          _
      $region12: #{encoder_forward.11} parent=5 // pred_fallthru
        _
      %p124 = scmp.lt.s32.totalorder %s9, 2
      // Predicated region
      $region21: #{encoder_forward.11} parent=5 // pred_check
        %p125 = pneg %p124
      $region22: #{encoder_forward.11} parent=5 // pred_check_branch
        %127 = sbr.rel (%p125) target = $region24
      $region23: #{encoder_forward.11} parent=5 // pred_region
        // Predicated region
        $region25: #{encoder_forward.11} parent=23 // pred_check
          %p128 = pneg %p29
        $region26: #{encoder_forward.11} parent=23 // pred_check_branch
          %130 = sbr.rel (%p128) target = $region28
        $region27: #{encoder_forward.11} parent=23 // pred_region
          %s131 = smul.u32 64, %s9
          %s132 = ssub.s32 75, %s131
          %p133 = scmp.lt.s32.totalorder %s132, 64
          %s134 = scalar_select %p133, %s132, 64
          %s135 = smul.u32 128, %s134
          %p136 = scmp.lt.s32.totalorder %s131, 74
          %s137 = scalar_select %p136, %s131, 74
          %s138 = smul.addr %s137, 8
          %s139 = scalar_lea.vmem %s0, %s138
          %s140 = smul.u32 64, %s9
          %s141 = ssub.s32 75, %s140
          %p142 = scmp.lt.s32.totalorder %s141, 64
          %s143 = scalar_select %p142, %s141, 64
          %s144 = smul.u32 128, %s143
        $region28: #{encoder_forward.11} parent=23 // pred_fallthru
          _
      $region24: #{encoder_forward.11} parent=5 // pred_fallthru
        _
      %p145 = scmp.le.s32.totalorder 1, %s9
      %p146 = scmp.lt.s32.totalorder %s9, 3
      %p147 = pnand %p145, %p146
      %p148 = pneg %p147
      // Predicated region
      $region29: #{encoder_forward.11} parent=5 // pred_check
        _
      $region30: #{encoder_forward.11} parent=5 // pred_check_branch
        %150 = sbr.rel (%p147) target = $region32
      $region31: #{encoder_forward.11} parent=5 // pred_region
        %s151 = ssub.s32 %s9, 1
        %s152 = smul.u32 64, %s14
        %s153 = ssub.s32 75, %s152
        %p154 = scmp.lt.s32.totalorder %s153, 64
        %s155 = scalar_select %p154, %s153, 64
        %s156 = smul.u32 128, %s155
        %p157 = scmp.lt.s32.totalorder %s152, 74
        %s158 = scalar_select %p157, %s152, 74
        %s159 = smul.addr %s158, 8
        %s160 = scalar_lea.vmem %s0, %s159
        %p161 = pneg %p35
        %p162 = pneg %p32
        %p163 = pneg %p56
        %p164 = pneg %p53
        %p165 = pneg %p77
        %p166 = pneg %p74
        %p167 = pneg %p103
        %p168 = pneg %p100
        %s169 = sand.u32 %s90, 1
        %s170 = sand.u32 %s90, 1
        %s171 = smul.addr %s170, 256
        %s172 = scalar_lea.vmem [#allocation2], %s171
        %s173 = smul.u32 64, %s14
        %s174 = ssub.s32 75, %s173
        %p175 = scmp.lt.s32.totalorder %s174, 64
        %s176 = scalar_select %p175, %s174, 64
        %s177 = smul.u32 128, %s176
        %p178 = scmp.lt.s32.totalorder %s173, 74
        %s179 = scalar_select %p178, %s173, 74
        %s180 = smul.addr %s179, 8
        %s181 = scalar_lea.vmem %s0, %s180
        %s182 = smul.u32 64, %s14
        %s183 = ssub.s32 75, %s182
        %p184 = scmp.lt.s32.totalorder %s183, 64
        %s185 = scalar_select %p184, %s183, 64
        %s186 = smul.u32 128, %s185
        %s187 = smul.u32 64, %s14
        %s188 = ssub.s32 75, %s187
        %p189 = scmp.lt.s32.totalorder %s188, 64
        %s190 = scalar_select %p189, %s188, 64
        %s191 = smul.u32 64, %s190
        %v192 = vld [vmem:[%s181] sm:$0xff]
        %v193 = vld [vmem:[%s181 + $0x8] sm:$0xff]
        %v194 = vld [vmem:[%s181 + $0x10] sm:$0xff]
        %v195 = vld [vmem:[%s181 + $0x18] sm:$0xff]
        %v196 = vld [vmem:[%s181 + $0x20] sm:$0xff]
        %v197 = vld [vmem:[%s181 + $0x28] sm:$0xff]
        %v198 = vld [vmem:[%s181 + $0x30] sm:$0xff]
        %v199 = vld [vmem:[%s181 + $0x38] sm:$0xff]
        %v200 = vld [vmem:[%s181 + $0x40] sm:$0xff]
        %v201 = vld [vmem:[%s181 + $0x48] sm:$0xff]
        %v202 = vld [vmem:[%s181 + $0x50] sm:$0xff]
        %v203 = vld [vmem:[%s181 + $0x58] sm:$0xff]
        %v204 = vld [vmem:[%s181 + $0x60] sm:$0xff]
        %v205 = vld [vmem:[%s181 + $0x68] sm:$0xff]
        %v206 = vld [vmem:[%s181 + $0x70] sm:$0xff]
        %v207 = vld [vmem:[%s181 + $0x78] sm:$0xff]
        %v208 = vld [vmem:[%s181 + $0x80] sm:$0xff]
        %v209 = vld [vmem:[%s181 + $0x88] sm:$0xff]
        %v210 = vld [vmem:[%s181 + $0x90] sm:$0xff]
        %v211 = vld [vmem:[%s181 + $0x98] sm:$0xff]
        %v212 = vld [vmem:[%s181 + $0xa0] sm:$0xff]
        %v213 = vld [vmem:[%s181 + $0xa8] sm:$0xff]
        %v214 = vld [vmem:[%s181 + $0xb0] sm:$0xff]
        %v215 = vld [vmem:[%s181 + $0xb8] sm:$0xff]
        %v216 = vld [vmem:[%s181 + $0xc0] sm:$0xff]
        %v217 = vld [vmem:[%s181 + $0xc8] sm:$0xff]
        %v218 = vld [vmem:[%s181 + $0xd0] sm:$0xff]
        %v219 = vld [vmem:[%s181 + $0xd8] sm:$0xff]
        %v220 = vld [vmem:[%s181 + $0xe0] sm:$0xff]
        %v221 = vld [vmem:[%s181 + $0xe8] sm:$0xff]
        %v222 = vld [vmem:[%s181 + $0xf0] sm:$0xff]
        %v223 = vld [vmem:[%s181 + $0xf8] sm:$0xff]
        %v224 = vld [vmem:[%s181 + $0x100] sm:$0xff]
        %v225 = vld [vmem:[%s181 + $0x108] sm:$0xff]
        %v226 = vld [vmem:[%s181 + $0x110] sm:$0xff]
        %v227 = vld [vmem:[%s181 + $0x118] sm:$0xff]
        %v228 = vld [vmem:[%s181 + $0x120] sm:$0xff]
        %v229 = vld [vmem:[%s181 + $0x128] sm:$0xff]
        %v230 = vld [vmem:[%s181 + $0x130] sm:$0xff]
        %v231 = vld [vmem:[%s181 + $0x138] sm:$0xff]
        %v232 = vld [vmem:[%s181 + $0x140] sm:$0xff]
        %v233 = vld [vmem:[%s181 + $0x148] sm:$0xff]
        %v234 = vld [vmem:[%s181 + $0x150] sm:$0xff]
        %v235 = vld [vmem:[%s181 + $0x158] sm:$0xff]
        %v236 = vld [vmem:[%s181 + $0x160] sm:$0xff]
        %v237 = vld [vmem:[%s181 + $0x168] sm:$0xff]
        %v238 = vld [vmem:[%s181 + $0x170] sm:$0xff]
        %v239 = vld [vmem:[%s181 + $0x178] sm:$0xff]
        %v240 = vld [vmem:[%s181 + $0x180] sm:$0xff]
        %v241 = vld [vmem:[%s181 + $0x188] sm:$0xff]
        %v242 = vld [vmem:[%s181 + $0x190] sm:$0xff]
        %v243 = vld [vmem:[%s181 + $0x198] sm:$0xff]
        %v244 = vld [vmem:[%s181 + $0x1a0] sm:$0xff]
        %v245 = vld [vmem:[%s181 + $0x1a8] sm:$0xff]
        %v246 = vld [vmem:[%s181 + $0x1b0] sm:$0xff]
        %v247 = vld [vmem:[%s181 + $0x1b8] sm:$0xff]
        %v248 = vld [vmem:[%s181 + $0x1c0] sm:$0xff]
        %v249 = vld [vmem:[%s181 + $0x1c8] sm:$0xff]
        %v250 = vld [vmem:[%s181 + $0x1d0] sm:$0xff]
        %v251 = vld [vmem:[%s181 + $0x1d8] sm:$0xff]
        %v252 = vld [vmem:[%s181 + $0x1e0] sm:$0xff]
        %v253 = vld [vmem:[%s181 + $0x1e8] sm:$0xff]
        %v254 = vld [vmem:[%s181 + $0x1f0] sm:$0xff]
        %v255 = vld [vmem:[%s181 + $0x1f8] sm:$0xff]
        %v256 = vld [vmem:[%s1] sm:$0xff]
        %v257 = vld [vmem:[%s1 + $0x8] sm:$0x1]
        %v258 = vld [vmem:[%s2] sm:$0x1]
        %v260 = vlaneseq
        %v261 = vshrl.u32 %v260, 7
        %v262 = vsub.s32 0, %v261
        %v263 = vrot.slane %v258, %v262
        %vm265 = vcmask 72704
        %v267 = vsel %vm265, %v192, 0
        %v270 = vsel %vm265, %v193, 0
        %v273 = vsel %vm265, %v194, 0
        %v276 = vsel %vm265, %v195, 0
        %v279 = vsel %vm265, %v196, 0
        %v282 = vsel %vm265, %v197, 0
        %v285 = vsel %vm265, %v198, 0
        %v288 = vsel %vm265, %v199, 0
        %v291 = vsel %vm265, %v200, 0
        %v294 = vsel %vm265, %v201, 0
        %v297 = vsel %vm265, %v202, 0
        %v300 = vsel %vm265, %v203, 0
        %v303 = vsel %vm265, %v204, 0
        %v306 = vsel %vm265, %v205, 0
        %v309 = vsel %vm265, %v206, 0
        %v312 = vsel %vm265, %v207, 0
        %v315 = vsel %vm265, %v208, 0
        %v318 = vsel %vm265, %v209, 0
        %v321 = vsel %vm265, %v210, 0
        %v324 = vsel %vm265, %v211, 0
        %v327 = vsel %vm265, %v212, 0
        %v330 = vsel %vm265, %v213, 0
        %v333 = vsel %vm265, %v214, 0
        %v336 = vsel %vm265, %v215, 0
        %v339 = vsel %vm265, %v216, 0
        %v342 = vsel %vm265, %v217, 0
        %v345 = vsel %vm265, %v218, 0
        %v348 = vsel %vm265, %v219, 0
        %v351 = vsel %vm265, %v220, 0
        %v354 = vsel %vm265, %v221, 0
        %v357 = vsel %vm265, %v222, 0
        %v360 = vsel %vm265, %v223, 0
        %v363 = vsel %vm265, %v224, 0
        %v366 = vsel %vm265, %v225, 0
        %v369 = vsel %vm265, %v226, 0
        %v372 = vsel %vm265, %v227, 0
        %v375 = vsel %vm265, %v228, 0
        %v378 = vsel %vm265, %v229, 0
        %v381 = vsel %vm265, %v230, 0
        %v384 = vsel %vm265, %v231, 0
        %v387 = vsel %vm265, %v232, 0
        %v390 = vsel %vm265, %v233, 0
        %v393 = vsel %vm265, %v234, 0
        %v396 = vsel %vm265, %v235, 0
        %v399 = vsel %vm265, %v236, 0
        %v402 = vsel %vm265, %v237, 0
        %v405 = vsel %vm265, %v238, 0
        %v408 = vsel %vm265, %v239, 0
        %v411 = vsel %vm265, %v240, 0
        %v414 = vsel %vm265, %v241, 0
        %v417 = vsel %vm265, %v242, 0
        %v420 = vsel %vm265, %v243, 0
        %v423 = vsel %vm265, %v244, 0
        %v426 = vsel %vm265, %v245, 0
        %v429 = vsel %vm265, %v246, 0
        %v432 = vsel %vm265, %v247, 0
        %v435 = vsel %vm265, %v248, 0
        %v438 = vsel %vm265, %v249, 0
        %v441 = vsel %vm265, %v250, 0
        %v444 = vsel %vm265, %v251, 0
        %v447 = vsel %vm265, %v252, 0
        %v450 = vsel %vm265, %v253, 0
        %v453 = vsel %vm265, %v254, 0
        %v456 = vsel %vm265, %v255, 0
        %vm458 = vcmask 1040384
        %v460 = vsel %vm458, %v257, 0
        %462 = vmatprep.subr.mxu0 0.0
        %463 = vmatpush1.msra.mxu0 %v256
        %464 = vmatprep.subr.mxu0 0.0
        %465 = vmatpush1.msra.mxu0 %v460
        %466 = vmatprep.subr.mxu0 0.0
        %467 = vmatpush1.msra.mxu0 0.0
        %468 = vmatprep.subr.mxu0 0.0
        %469 = vmatpush1.msra.mxu0 0.0
        %470 = vmatprep.subr.mxu0 0.0
        %471 = vmatpush1.msra.mxu0 0.0
        %472 = vmatprep.subr.mxu0 0.0
        %473 = vmatpush1.msra.mxu0 0.0
        %474 = vmatprep.subr.mxu0 0.0
        %475 = vmatpush1.msra.mxu0 0.0
        %476 = vmatprep.subr.mxu0 0.0
        %477 = vmatpush1.msra.mxu0 0.0
        %478 = vmatprep.subr.mxu0 0.0
        %479 = vmatpush1.msra.mxu0 0.0
        %480 = vmatprep.subr.mxu0 0.0
        %481 = vmatpush1.msra.mxu0 0.0
        %482 = vmatprep.subr.mxu0 0.0
        %483 = vmatpush1.msra.mxu0 0.0
        %484 = vmatprep.subr.mxu0 0.0
        %485 = vmatpush1.msra.mxu0 0.0
        %486 = vmatprep.subr.mxu0 0.0
        %487 = vmatpush1.msra.mxu0 0.0
        %488 = vmatprep.subr.mxu0 0.0
        %489 = vmatpush1.msra.mxu0 0.0
        %490 = vmatprep.subr.mxu0 0.0
        %491 = vmatpush1.msra.mxu0 0.0
        %492 = vmatprep.subr.mxu0 0.0
        %493 = vmatpush1.msra.mxu0 0.0
        %494 = vmatprep.subr.mxu0 0.0
        %495 = vmatpush1.msra.mxu0 0.0
        %496 = vmatprep.subr.mxu0 0.0
        %497 = vmatpush1.msra.mxu0 0.0
        %498 = vmatprep.subr.mxu0 0.0
        %499 = vmatpush1.msra.mxu0 0.0
        %500 = vmatprep.subr.mxu0 0.0
        %501 = vmatpush1.msra.mxu0 0.0
        %502 = vmatprep.subr.mxu0 0.0
        %503 = vmatpush1.msra.mxu0 0.0
        %504 = vmatprep.subr.mxu0 0.0
        %505 = vmatpush1.msra.mxu0 0.0
        %506 = vmatprep.subr.mxu0 0.0
        %507 = vmatpush1.msra.mxu0 0.0
        %508 = vmatprep.subr.mxu0 0.0
        %509 = vmatpush1.msra.mxu0 0.0
        %510 = vmatprep.subr.mxu0 0.0
        %511 = vmatpush1.msra.mxu0 0.0
        %512 = vmatprep.subr.mxu0 0.0
        %513 = vmatpush1.msra.mxu0 0.0
        %514 = vmatprep.subr.mxu0 0.0
        %515 = vmatpush1.msra.mxu0 0.0
        %516 = vmatprep.subr.mxu0 0.0
        %517 = vmatpush1.msra.mxu0 0.0
        %518 = vmatprep.subr.mxu0 0.0
        %519 = vmatpush1.msra.mxu0 0.0
        %520 = vmatprep.subr.mxu0 0.0
        %521 = vmatpush1.msra.mxu0 0.0
        %522 = vmatprep.subr.mxu0 0.0
        %523 = vmatpush1.msra.mxu0 0.0
        %524 = vmatprep.subr.mxu0 0.0
        %525 = vmatpush1.msra.mxu0 0.0
        %526 = vmatprep.mubr.f32.mxu0 0.0
        %527 = vmatmul.mubr.f32.gmra.mrb[0].mxu0 %v267
        %v528 = vpop.f32.mrb[0].mxu0
        %v529 = vadd.f32 %v263, %v528
        %v530 = vpop.f32.mrb[0].mxu0
        %531 = vmatprep.mubr.f32.mxu0 0.0
        %532 = vmatmul.mubr.f32.gmra.mrb[0].mxu0 %v270
        %v533 = vpop.f32.mrb[0].mxu0
        %v534 = vadd.f32 %v263, %v533
        %v535 = vpop.f32.mrb[0].mxu0
        %536 = vmatprep.mubr.f32.mxu0 0.0
        %537 = vmatmul.mubr.f32.gmra.mrb[0].mxu0 %v273
        %v538 = vpop.f32.mrb[0].mxu0
        %v539 = vadd.f32 %v263, %v538
        %v540 = vpop.f32.mrb[0].mxu0
        %541 = vmatprep.mubr.f32.mxu0 0.0
        %542 = vmatmul.mubr.f32.gmra.mrb[0].mxu0 %v276
        %v543 = vpop.f32.mrb[0].mxu0
        %v544 = vadd.f32 %v263, %v543
        %v545 = vpop.f32.mrb[0].mxu0
        %546 = vmatprep.mubr.f32.mxu0 0.0
        %547 = vmatmul.mubr.f32.gmra.mrb[0].mxu0 %v279
        %v548 = vpop.f32.mrb[0].mxu0
        %v549 = vadd.f32 %v263, %v548
        %v550 = vpop.f32.mrb[0].mxu0
        %551 = vmatprep.mubr.f32.mxu0 0.0
        %552 = vmatmul.mubr.f32.gmra.mrb[0].mxu0 %v282
        %v553 = vpop.f32.mrb[0].mxu0
        %v554 = vadd.f32 %v263, %v553
        %v555 = vpop.f32.mrb[0].mxu0
        %556 = vmatprep.mubr.f32.mxu0 0.0
        %557 = vmatmul.mubr.f32.gmra.mrb[0].mxu0 %v285
        %v558 = vpop.f32.mrb[0].mxu0
        %v559 = vadd.f32 %v263, %v558
        %v560 = vpop.f32.mrb[0].mxu0
        %561 = vmatprep.mubr.f32.mxu0 0.0
        %562 = vmatmul.mubr.f32.gmra.mrb[0].mxu0 %v288
        %v563 = vpop.f32.mrb[0].mxu0
        %v564 = vadd.f32 %v263, %v563
        %v565 = vpop.f32.mrb[0].mxu0
        %566 = vmatprep.mubr.f32.mxu0 0.0
        %567 = vmatmul.mubr.f32.gmra.mrb[0].mxu0 %v291
        %v568 = vpop.f32.mrb[0].mxu0
        %v569 = vadd.f32 %v263, %v568
        %v570 = vpop.f32.mrb[0].mxu0
        %571 = vmatprep.mubr.f32.mxu0 0.0
        %572 = vmatmul.mubr.f32.gmra.mrb[0].mxu0 %v294
        %v573 = vpop.f32.mrb[0].mxu0
        %v574 = vadd.f32 %v263, %v573
        %v575 = vpop.f32.mrb[0].mxu0
        %576 = vmatprep.mubr.f32.mxu0 0.0
        %577 = vmatmul.mubr.f32.gmra.mrb[0].mxu0 %v297
        %v578 = vpop.f32.mrb[0].mxu0
        %v579 = vadd.f32 %v263, %v578
        %v580 = vpop.f32.mrb[0].mxu0
        %581 = vmatprep.mubr.f32.mxu0 0.0
        %582 = vmatmul.mubr.f32.gmra.mrb[0].mxu0 %v300
        %v583 = vpop.f32.mrb[0].mxu0
        %v584 = vadd.f32 %v263, %v583
        %v585 = vpop.f32.mrb[0].mxu0
        %586 = vmatprep.mubr.f32.mxu0 0.0
        %587 = vmatmul.mubr.f32.gmra.mrb[0].mxu0 %v303
        %v588 = vpop.f32.mrb[0].mxu0
        %v589 = vadd.f32 %v263, %v588
        %v590 = vpop.f32.mrb[0].mxu0
        %591 = vmatprep.mubr.f32.mxu0 0.0
        %592 = vmatmul.mubr.f32.gmra.mrb[0].mxu0 %v306
        %v593 = vpop.f32.mrb[0].mxu0
        %v594 = vadd.f32 %v263, %v593
        %v595 = vpop.f32.mrb[0].mxu0
        %596 = vmatprep.mubr.f32.mxu0 0.0
        %597 = vmatmul.mubr.f32.gmra.mrb[0].mxu0 %v309
        %v598 = vpop.f32.mrb[0].mxu0
        %v599 = vadd.f32 %v263, %v598
        %v600 = vpop.f32.mrb[0].mxu0
        %601 = vmatprep.mubr.f32.mxu0 0.0
        %602 = vmatmul.mubr.f32.gmra.mrb[0].mxu0 %v312
        %v603 = vpop.f32.mrb[0].mxu0
        %v604 = vadd.f32 %v263, %v603
        %v605 = vpop.f32.mrb[0].mxu0
        %606 = vmatprep.mubr.f32.mxu0 0.0
        %607 = vmatmul.mubr.f32.gmra.mrb[0].mxu0 %v315
        %v608 = vpop.f32.mrb[0].mxu0
        %v609 = vadd.f32 %v263, %v608
        %v610 = vpop.f32.mrb[0].mxu0
        %611 = vmatprep.mubr.f32.mxu0 0.0
        %612 = vmatmul.mubr.f32.gmra.mrb[0].mxu0 %v318
        %v613 = vpop.f32.mrb[0].mxu0
        %v614 = vadd.f32 %v263, %v613
        %v615 = vpop.f32.mrb[0].mxu0
        %616 = vmatprep.mubr.f32.mxu0 0.0
        %617 = vmatmul.mubr.f32.gmra.mrb[0].mxu0 %v321
        %v618 = vpop.f32.mrb[0].mxu0
        %v619 = vadd.f32 %v263, %v618
        %v620 = vpop.f32.mrb[0].mxu0
        %621 = vmatprep.mubr.f32.mxu0 0.0
        %622 = vmatmul.mubr.f32.gmra.mrb[0].mxu0 %v324
        %v623 = vpop.f32.mrb[0].mxu0
        %v624 = vadd.f32 %v263, %v623
        %v625 = vpop.f32.mrb[0].mxu0
        %626 = vmatprep.mubr.f32.mxu0 0.0
        %627 = vmatmul.mubr.f32.gmra.mrb[0].mxu0 %v327
        %v628 = vpop.f32.mrb[0].mxu0
        %v629 = vadd.f32 %v263, %v628
        %v630 = vpop.f32.mrb[0].mxu0
        %631 = vmatprep.mubr.f32.mxu0 0.0
        %632 = vmatmul.mubr.f32.gmra.mrb[0].mxu0 %v330
        %v633 = vpop.f32.mrb[0].mxu0
        %v634 = vadd.f32 %v263, %v633
        %v635 = vpop.f32.mrb[0].mxu0
        %636 = vmatprep.mubr.f32.mxu0 0.0
        %637 = vmatmul.mubr.f32.gmra.mrb[0].mxu0 %v333
        %v638 = vpop.f32.mrb[0].mxu0
        %v639 = vadd.f32 %v263, %v638
        %v640 = vpop.f32.mrb[0].mxu0
        %641 = vmatprep.mubr.f32.mxu0 0.0
        %642 = vmatmul.mubr.f32.gmra.mrb[0].mxu0 %v336
        %v643 = vpop.f32.mrb[0].mxu0
        %v644 = vadd.f32 %v263, %v643
        %v645 = vpop.f32.mrb[0].mxu0
        %646 = vmatprep.mubr.f32.mxu0 0.0
        %647 = vmatmul.mubr.f32.gmra.mrb[0].mxu0 %v339
        %v648 = vpop.f32.mrb[0].mxu0
        %v649 = vadd.f32 %v263, %v648
        %v650 = vpop.f32.mrb[0].mxu0
        %651 = vmatprep.mubr.f32.mxu0 0.0
        %652 = vmatmul.mubr.f32.gmra.mrb[0].mxu0 %v342
        %v653 = vpop.f32.mrb[0].mxu0
        %v654 = vadd.f32 %v263, %v653
        %v655 = vpop.f32.mrb[0].mxu0
        %656 = vmatprep.mubr.f32.mxu0 0.0
        %657 = vmatmul.mubr.f32.gmra.mrb[0].mxu0 %v345
        %v658 = vpop.f32.mrb[0].mxu0
        %v659 = vadd.f32 %v263, %v658
        %v660 = vpop.f32.mrb[0].mxu0
        %661 = vmatprep.mubr.f32.mxu0 0.0
        %662 = vmatmul.mubr.f32.gmra.mrb[0].mxu0 %v348
        %v663 = vpop.f32.mrb[0].mxu0
        %v664 = vadd.f32 %v263, %v663
        %v665 = vpop.f32.mrb[0].mxu0
        %666 = vmatprep.mubr.f32.mxu0 0.0
        %667 = vmatmul.mubr.f32.gmra.mrb[0].mxu0 %v351
        %v668 = vpop.f32.mrb[0].mxu0
        %v669 = vadd.f32 %v263, %v668
        %v670 = vpop.f32.mrb[0].mxu0
        %671 = vmatprep.mubr.f32.mxu0 0.0
        %672 = vmatmul.mubr.f32.gmra.mrb[0].mxu0 %v354
        %v673 = vpop.f32.mrb[0].mxu0
        %v674 = vadd.f32 %v263, %v673
        %v675 = vpop.f32.mrb[0].mxu0
        %676 = vmatprep.mubr.f32.mxu0 0.0
        %677 = vmatmul.mubr.f32.gmra.mrb[0].mxu0 %v357
        %v678 = vpop.f32.mrb[0].mxu0
        %v679 = vadd.f32 %v263, %v678
        %v680 = vpop.f32.mrb[0].mxu0
        %681 = vmatprep.mubr.f32.mxu0 0.0
        %682 = vmatmul.mubr.f32.gmra.mrb[0].mxu0 %v360
        %v683 = vpop.f32.mrb[0].mxu0
        %v684 = vadd.f32 %v263, %v683
        %v685 = vpop.f32.mrb[0].mxu0
        %686 = vmatprep.mubr.f32.mxu0 0.0
        %687 = vmatmul.mubr.f32.gmra.mrb[0].mxu0 %v363
        %v688 = vpop.f32.mrb[0].mxu0
        %v689 = vadd.f32 %v263, %v688
        %v690 = vpop.f32.mrb[0].mxu0
        %691 = vmatprep.mubr.f32.mxu0 0.0
        %692 = vmatmul.mubr.f32.gmra.mrb[0].mxu0 %v366
        %v693 = vpop.f32.mrb[0].mxu0
        %v694 = vadd.f32 %v263, %v693
        %v695 = vpop.f32.mrb[0].mxu0
        %696 = vmatprep.mubr.f32.mxu0 0.0
        %697 = vmatmul.mubr.f32.gmra.mrb[0].mxu0 %v369
        %v698 = vpop.f32.mrb[0].mxu0
        %v699 = vadd.f32 %v263, %v698
        %v700 = vpop.f32.mrb[0].mxu0
        %701 = vmatprep.mubr.f32.mxu0 0.0
        %702 = vmatmul.mubr.f32.gmra.mrb[0].mxu0 %v372
        %v703 = vpop.f32.mrb[0].mxu0
        %v704 = vadd.f32 %v263, %v703
        %v705 = vpop.f32.mrb[0].mxu0
        %706 = vmatprep.mubr.f32.mxu0 0.0
        %707 = vmatmul.mubr.f32.gmra.mrb[0].mxu0 %v375
        %v708 = vpop.f32.mrb[0].mxu0
        %v709 = vadd.f32 %v263, %v708
        %v710 = vpop.f32.mrb[0].mxu0
        %711 = vmatprep.mubr.f32.mxu0 0.0
        %712 = vmatmul.mubr.f32.gmra.mrb[0].mxu0 %v378
        %v713 = vpop.f32.mrb[0].mxu0
        %v714 = vadd.f32 %v263, %v713
        %v715 = vpop.f32.mrb[0].mxu0
        %716 = vmatprep.mubr.f32.mxu0 0.0
        %717 = vmatmul.mubr.f32.gmra.mrb[0].mxu0 %v381
        %v718 = vpop.f32.mrb[0].mxu0
        %v719 = vadd.f32 %v263, %v718
        %v720 = vpop.f32.mrb[0].mxu0
        %721 = vmatprep.mubr.f32.mxu0 0.0
        %722 = vmatmul.mubr.f32.gmra.mrb[0].mxu0 %v384
        %v723 = vpop.f32.mrb[0].mxu0
        %v724 = vadd.f32 %v263, %v723
        %v725 = vpop.f32.mrb[0].mxu0
        %726 = vmatprep.mubr.f32.mxu0 0.0
        %727 = vmatmul.mubr.f32.gmra.mrb[0].mxu0 %v387
        %v728 = vpop.f32.mrb[0].mxu0
        %v729 = vadd.f32 %v263, %v728
        %v730 = vpop.f32.mrb[0].mxu0
        %731 = vmatprep.mubr.f32.mxu0 0.0
        %732 = vmatmul.mubr.f32.gmra.mrb[0].mxu0 %v390
        %v733 = vpop.f32.mrb[0].mxu0
        %v734 = vadd.f32 %v263, %v733
        %v735 = vpop.f32.mrb[0].mxu0
        %736 = vmatprep.mubr.f32.mxu0 0.0
        %737 = vmatmul.mubr.f32.gmra.mrb[0].mxu0 %v393
        %v738 = vpop.f32.mrb[0].mxu0
        %v739 = vadd.f32 %v263, %v738
        %v740 = vpop.f32.mrb[0].mxu0
        %741 = vmatprep.mubr.f32.mxu0 0.0
        %742 = vmatmul.mubr.f32.gmra.mrb[0].mxu0 %v396
        %v743 = vpop.f32.mrb[0].mxu0
        %v744 = vadd.f32 %v263, %v743
        %v745 = vpop.f32.mrb[0].mxu0
        %746 = vmatprep.mubr.f32.mxu0 0.0
        %747 = vmatmul.mubr.f32.gmra.mrb[0].mxu0 %v399
        %v748 = vpop.f32.mrb[0].mxu0
        %v749 = vadd.f32 %v263, %v748
        %v750 = vpop.f32.mrb[0].mxu0
        %751 = vmatprep.mubr.f32.mxu0 0.0
        %752 = vmatmul.mubr.f32.gmra.mrb[0].mxu0 %v402
        %v753 = vpop.f32.mrb[0].mxu0
        %v754 = vadd.f32 %v263, %v753
        %v755 = vpop.f32.mrb[0].mxu0
        %756 = vmatprep.mubr.f32.mxu0 0.0
        %757 = vmatmul.mubr.f32.gmra.mrb[0].mxu0 %v405
        %v758 = vpop.f32.mrb[0].mxu0
        %v759 = vadd.f32 %v263, %v758
        %v760 = vpop.f32.mrb[0].mxu0
        %761 = vmatprep.mubr.f32.mxu0 0.0
        %762 = vmatmul.mubr.f32.gmra.mrb[0].mxu0 %v408
        %v763 = vpop.f32.mrb[0].mxu0
        %v764 = vadd.f32 %v263, %v763
        %v765 = vpop.f32.mrb[0].mxu0
        %766 = vmatprep.mubr.f32.mxu0 0.0
        %767 = vmatmul.mubr.f32.gmra.mrb[0].mxu0 %v411
        %v768 = vpop.f32.mrb[0].mxu0
        %v769 = vadd.f32 %v263, %v768
        %v770 = vpop.f32.mrb[0].mxu0
        %771 = vmatprep.mubr.f32.mxu0 0.0
        %772 = vmatmul.mubr.f32.gmra.mrb[0].mxu0 %v414
        %v773 = vpop.f32.mrb[0].mxu0
        %v774 = vadd.f32 %v263, %v773
        %v775 = vpop.f32.mrb[0].mxu0
        %776 = vmatprep.mubr.f32.mxu0 0.0
        %777 = vmatmul.mubr.f32.gmra.mrb[0].mxu0 %v417
        %v778 = vpop.f32.mrb[0].mxu0
        %v779 = vadd.f32 %v263, %v778
        %v780 = vpop.f32.mrb[0].mxu0
        %781 = vmatprep.mubr.f32.mxu0 0.0
        %782 = vmatmul.mubr.f32.gmra.mrb[0].mxu0 %v420
        %v783 = vpop.f32.mrb[0].mxu0
        %v784 = vadd.f32 %v263, %v783
        %v785 = vpop.f32.mrb[0].mxu0
        %786 = vmatprep.mubr.f32.mxu0 0.0
        %787 = vmatmul.mubr.f32.gmra.mrb[0].mxu0 %v423
        %v788 = vpop.f32.mrb[0].mxu0
        %v789 = vadd.f32 %v263, %v788
        %v790 = vpop.f32.mrb[0].mxu0
        %791 = vmatprep.mubr.f32.mxu0 0.0
        %792 = vmatmul.mubr.f32.gmra.mrb[0].mxu0 %v426
        %v793 = vpop.f32.mrb[0].mxu0
        %v794 = vadd.f32 %v263, %v793
        %v795 = vpop.f32.mrb[0].mxu0
        %796 = vmatprep.mubr.f32.mxu0 0.0
        %797 = vmatmul.mubr.f32.gmra.mrb[0].mxu0 %v429
        %v798 = vpop.f32.mrb[0].mxu0
        %v799 = vadd.f32 %v263, %v798
        %v800 = vpop.f32.mrb[0].mxu0
        %801 = vmatprep.mubr.f32.mxu0 0.0
        %802 = vmatmul.mubr.f32.gmra.mrb[0].mxu0 %v432
        %v803 = vpop.f32.mrb[0].mxu0
        %v804 = vadd.f32 %v263, %v803
        %v805 = vpop.f32.mrb[0].mxu0
        %806 = vmatprep.mubr.f32.mxu0 0.0
        %807 = vmatmul.mubr.f32.gmra.mrb[0].mxu0 %v435
        %v808 = vpop.f32.mrb[0].mxu0
        %v809 = vadd.f32 %v263, %v808
        %v810 = vpop.f32.mrb[0].mxu0
        %811 = vmatprep.mubr.f32.mxu0 0.0
        %812 = vmatmul.mubr.f32.gmra.mrb[0].mxu0 %v438
        %v813 = vpop.f32.mrb[0].mxu0
        %v814 = vadd.f32 %v263, %v813
        %v815 = vpop.f32.mrb[0].mxu0
        %816 = vmatprep.mubr.f32.mxu0 0.0
        %817 = vmatmul.mubr.f32.gmra.mrb[0].mxu0 %v441
        %v818 = vpop.f32.mrb[0].mxu0
        %v819 = vadd.f32 %v263, %v818
        %v820 = vpop.f32.mrb[0].mxu0
        %821 = vmatprep.mubr.f32.mxu0 0.0
        %822 = vmatmul.mubr.f32.gmra.mrb[0].mxu0 %v444
        %v823 = vpop.f32.mrb[0].mxu0
        %v824 = vadd.f32 %v263, %v823
        %v825 = vpop.f32.mrb[0].mxu0
        %826 = vmatprep.mubr.f32.mxu0 0.0
        %827 = vmatmul.mubr.f32.gmra.mrb[0].mxu0 %v447
        %v828 = vpop.f32.mrb[0].mxu0
        %v829 = vadd.f32 %v263, %v828
        %v830 = vpop.f32.mrb[0].mxu0
        %831 = vmatprep.mubr.f32.mxu0 0.0
        %832 = vmatmul.mubr.f32.gmra.mrb[0].mxu0 %v450
        %v833 = vpop.f32.mrb[0].mxu0
        %v834 = vadd.f32 %v263, %v833
        %v835 = vpop.f32.mrb[0].mxu0
        %836 = vmatprep.mubr.f32.mxu0 0.0
        %837 = vmatmul.mubr.f32.gmra.mrb[0].mxu0 %v453
        %v838 = vpop.f32.mrb[0].mxu0
        %v839 = vadd.f32 %v263, %v838
        %v840 = vpop.f32.mrb[0].mxu0
        %841 = vmatprep.mubr.f32.mxu0 0.0
        %842 = vmatmul.mubr.f32.gmra.mrb[0].mxu0 %v456
        %v843 = vpop.f32.mrb[0].mxu0
        %v844 = vadd.f32 %v263, %v843
        %v845 = vpop.f32.mrb[0].mxu0
        %846 = vdwg.mxu0
        %v847 = vmax.f32 %v529, 0.0
        %v848 = vmax.f32 %v534, 0.0
        %v849 = vmax.f32 %v539, 0.0
        %v850 = vmax.f32 %v544, 0.0
        %v851 = vmax.f32 %v549, 0.0
        %v852 = vmax.f32 %v554, 0.0
        %v853 = vmax.f32 %v559, 0.0
        %v854 = vmax.f32 %v564, 0.0
        %v855 = vmax.f32 %v569, 0.0
        %v856 = vmax.f32 %v574, 0.0
        %v857 = vmax.f32 %v579, 0.0
        %v858 = vmax.f32 %v584, 0.0
        %v859 = vmax.f32 %v589, 0.0
        %v860 = vmax.f32 %v594, 0.0
        %v861 = vmax.f32 %v599, 0.0
        %v862 = vmax.f32 %v604, 0.0
        %v863 = vmax.f32 %v609, 0.0
        %v864 = vmax.f32 %v614, 0.0
        %v865 = vmax.f32 %v619, 0.0
        %v866 = vmax.f32 %v624, 0.0
        %v867 = vmax.f32 %v629, 0.0
        %v868 = vmax.f32 %v634, 0.0
        %v869 = vmax.f32 %v639, 0.0
        %v870 = vmax.f32 %v644, 0.0
        %v871 = vmax.f32 %v649, 0.0
        %v872 = vmax.f32 %v654, 0.0
        %v873 = vmax.f32 %v659, 0.0
        %v874 = vmax.f32 %v664, 0.0
        %v875 = vmax.f32 %v669, 0.0
        %v876 = vmax.f32 %v674, 0.0
        %v877 = vmax.f32 %v679, 0.0
        %v878 = vmax.f32 %v684, 0.0
        %v879 = vmax.f32 %v689, 0.0
        %v880 = vmax.f32 %v694, 0.0
        %v881 = vmax.f32 %v699, 0.0
        %v882 = vmax.f32 %v704, 0.0
        %v883 = vmax.f32 %v709, 0.0
        %v884 = vmax.f32 %v714, 0.0
        %v885 = vmax.f32 %v719, 0.0
        %v886 = vmax.f32 %v724, 0.0
        %v887 = vmax.f32 %v729, 0.0
        %v888 = vmax.f32 %v734, 0.0
        %v889 = vmax.f32 %v739, 0.0
        %v890 = vmax.f32 %v744, 0.0
        %v891 = vmax.f32 %v749, 0.0
        %v892 = vmax.f32 %v754, 0.0
        %v893 = vmax.f32 %v759, 0.0
        %v894 = vmax.f32 %v764, 0.0
        %v895 = vmax.f32 %v769, 0.0
        %v896 = vmax.f32 %v774, 0.0
        %v897 = vmax.f32 %v779, 0.0
        %v898 = vmax.f32 %v784, 0.0
        %v899 = vmax.f32 %v789, 0.0
        %v900 = vmax.f32 %v794, 0.0
        %v901 = vmax.f32 %v799, 0.0
        %v902 = vmax.f32 %v804, 0.0
        %v903 = vmax.f32 %v809, 0.0
        %v904 = vmax.f32 %v814, 0.0
        %v905 = vmax.f32 %v819, 0.0
        %v906 = vmax.f32 %v824, 0.0
        %v907 = vmax.f32 %v829, 0.0
        %v908 = vmax.f32 %v834, 0.0
        %v909 = vmax.f32 %v839, 0.0
        %v910 = vmax.f32 %v844, 0.0
        %v911 = vpack.c.bf16 %v848, %v847
        %v912 = vpack.c.bf16 %v850, %v849
        %v913 = vpack.c.bf16 %v852, %v851
        %v914 = vpack.c.bf16 %v854, %v853
        %v915 = vpack.c.bf16 %v856, %v855
        %v916 = vpack.c.bf16 %v858, %v857
        %v917 = vpack.c.bf16 %v860, %v859
        %v918 = vpack.c.bf16 %v862, %v861
        %v919 = vpack.c.bf16 %v864, %v863
        %v920 = vpack.c.bf16 %v866, %v865
        %v921 = vpack.c.bf16 %v868, %v867
        %v922 = vpack.c.bf16 %v870, %v869
        %v923 = vpack.c.bf16 %v872, %v871
        %v924 = vpack.c.bf16 %v874, %v873
        %v925 = vpack.c.bf16 %v876, %v875
        %v926 = vpack.c.bf16 %v878, %v877
        %v927 = vpack.c.bf16 %v880, %v879
        %v928 = vpack.c.bf16 %v882, %v881
        %v929 = vpack.c.bf16 %v884, %v883
        %v930 = vpack.c.bf16 %v886, %v885
        %v931 = vpack.c.bf16 %v888, %v887
        %v932 = vpack.c.bf16 %v890, %v889
        %v933 = vpack.c.bf16 %v892, %v891
        %v934 = vpack.c.bf16 %v894, %v893
        %v935 = vpack.c.bf16 %v896, %v895
        %v936 = vpack.c.bf16 %v898, %v897
        %v937 = vpack.c.bf16 %v900, %v899
        %v938 = vpack.c.bf16 %v902, %v901
        %v939 = vpack.c.bf16 %v904, %v903
        %v940 = vpack.c.bf16 %v906, %v905
        %v941 = vpack.c.bf16 %v908, %v907
        %v942 = vpack.c.bf16 %v910, %v909
        %v975 = vunpack.c.l.b16 %v911
        %v976 = vunpack.c.h.b16 %v911
        %v977 = vunpack.c.l.b16 %v912
        %v978 = vunpack.c.h.b16 %v912
        %v979 = vunpack.c.l.b16 %v913
        %v980 = vunpack.c.h.b16 %v913
        %v981 = vunpack.c.l.b16 %v914
        %v982 = vunpack.c.h.b16 %v914
        %v983 = vunpack.c.l.b16 %v915
        %v984 = vunpack.c.h.b16 %v915
        %v985 = vunpack.c.l.b16 %v916
        %v986 = vunpack.c.h.b16 %v916
        %v987 = vunpack.c.l.b16 %v917
        %v988 = vunpack.c.h.b16 %v917
        %v989 = vunpack.c.l.b16 %v918
        %v990 = vunpack.c.h.b16 %v918
        %v991 = vunpack.c.l.b16 %v919
        %v992 = vunpack.c.h.b16 %v919
        %v993 = vunpack.c.l.b16 %v920
        %v994 = vunpack.c.h.b16 %v920
        %v995 = vunpack.c.l.b16 %v921
        %v996 = vunpack.c.h.b16 %v921
        %v997 = vunpack.c.l.b16 %v922
        %v998 = vunpack.c.h.b16 %v922
        %v999 = vunpack.c.l.b16 %v923
        %v1000 = vunpack.c.h.b16 %v923
        %v1001 = vunpack.c.l.b16 %v924
        %v1002 = vunpack.c.h.b16 %v924
        %v1003 = vunpack.c.l.b16 %v925
        %v1004 = vunpack.c.h.b16 %v925
        %v1005 = vunpack.c.l.b16 %v926
        %v1006 = vunpack.c.h.b16 %v926
        %v1007 = vunpack.c.l.b16 %v927
        %v1008 = vunpack.c.h.b16 %v927
        %v1009 = vunpack.c.l.b16 %v928
        %v1010 = vunpack.c.h.b16 %v928
        %v1011 = vunpack.c.l.b16 %v929
        %v1012 = vunpack.c.h.b16 %v929
        %v1013 = vunpack.c.l.b16 %v930
        %v1014 = vunpack.c.h.b16 %v930
        %v1015 = vunpack.c.l.b16 %v931
        %v1016 = vunpack.c.h.b16 %v931
        %v1017 = vunpack.c.l.b16 %v932
        %v1018 = vunpack.c.h.b16 %v932
        %v1019 = vunpack.c.l.b16 %v933
        %v1020 = vunpack.c.h.b16 %v933
        %v1021 = vunpack.c.l.b16 %v934
        %v1022 = vunpack.c.h.b16 %v934
        %v1023 = vunpack.c.l.b16 %v935
        %v1024 = vunpack.c.h.b16 %v935
        %v1025 = vunpack.c.l.b16 %v936
        %v1026 = vunpack.c.h.b16 %v936
        %v1027 = vunpack.c.l.b16 %v937
        %v1028 = vunpack.c.h.b16 %v937
        %v1029 = vunpack.c.l.b16 %v938
        %v1030 = vunpack.c.h.b16 %v938
        %v1031 = vunpack.c.l.b16 %v939
        %v1032 = vunpack.c.h.b16 %v939
        %v1033 = vunpack.c.l.b16 %v940
        %v1034 = vunpack.c.h.b16 %v940
        %v1035 = vunpack.c.l.b16 %v941
        %v1036 = vunpack.c.h.b16 %v941
        %v1037 = vunpack.c.l.b16 %v942
        %v1038 = vunpack.c.h.b16 %v942
        %v1039 = vpack.c.b16 %v975, %v975
        %v1040 = vpack.c.b16 %v976, %v976
        %v1041 = vpack.c.b16 %v977, %v977
        %v1042 = vpack.c.b16 %v978, %v978
        %v1043 = vpack.c.b16 %v979, %v979
        %v1044 = vpack.c.b16 %v980, %v980
        %v1045 = vpack.c.b16 %v981, %v981
        %v1046 = vpack.c.b16 %v982, %v982
        %v1047 = vpack.c.b16 %v983, %v983
        %v1048 = vpack.c.b16 %v984, %v984
        %v1049 = vpack.c.b16 %v985, %v985
        %v1050 = vpack.c.b16 %v986, %v986
        %v1051 = vpack.c.b16 %v987, %v987
        %v1052 = vpack.c.b16 %v988, %v988
        %v1053 = vpack.c.b16 %v989, %v989
        %v1054 = vpack.c.b16 %v990, %v990
        %v1055 = vpack.c.b16 %v991, %v991
        %v1056 = vpack.c.b16 %v992, %v992
        %v1057 = vpack.c.b16 %v993, %v993
        %v1058 = vpack.c.b16 %v994, %v994
        %v1059 = vpack.c.b16 %v995, %v995
        %v1060 = vpack.c.b16 %v996, %v996
        %v1061 = vpack.c.b16 %v997, %v997
        %v1062 = vpack.c.b16 %v998, %v998
        %v1063 = vpack.c.b16 %v999, %v999
        %v1064 = vpack.c.b16 %v1000, %v1000
        %v1065 = vpack.c.b16 %v1001, %v1001
        %v1066 = vpack.c.b16 %v1002, %v1002
        %v1067 = vpack.c.b16 %v1003, %v1003
        %v1068 = vpack.c.b16 %v1004, %v1004
        %v1069 = vpack.c.b16 %v1005, %v1005
        %v1070 = vpack.c.b16 %v1006, %v1006
        %v1071 = vpack.c.b16 %v1007, %v1007
        %v1072 = vpack.c.b16 %v1008, %v1008
        %v1073 = vpack.c.b16 %v1009, %v1009
        %v1074 = vpack.c.b16 %v1010, %v1010
        %v1075 = vpack.c.b16 %v1011, %v1011
        %v1076 = vpack.c.b16 %v1012, %v1012
        %v1077 = vpack.c.b16 %v1013, %v1013
        %v1078 = vpack.c.b16 %v1014, %v1014
        %v1079 = vpack.c.b16 %v1015, %v1015
        %v1080 = vpack.c.b16 %v1016, %v1016
        %v1081 = vpack.c.b16 %v1017, %v1017
        %v1082 = vpack.c.b16 %v1018, %v1018
        %v1083 = vpack.c.b16 %v1019, %v1019
        %v1084 = vpack.c.b16 %v1020, %v1020
        %v1085 = vpack.c.b16 %v1021, %v1021
        %v1086 = vpack.c.b16 %v1022, %v1022
        %v1087 = vpack.c.b16 %v1023, %v1023
        %v1088 = vpack.c.b16 %v1024, %v1024
        %v1089 = vpack.c.b16 %v1025, %v1025
        %v1090 = vpack.c.b16 %v1026, %v1026
        %v1091 = vpack.c.b16 %v1027, %v1027
        %v1092 = vpack.c.b16 %v1028, %v1028
        %v1093 = vpack.c.b16 %v1029, %v1029
        %v1094 = vpack.c.b16 %v1030, %v1030
        %v1095 = vpack.c.b16 %v1031, %v1031
        %v1096 = vpack.c.b16 %v1032, %v1032
        %v1097 = vpack.c.b16 %v1033, %v1033
        %v1098 = vpack.c.b16 %v1034, %v1034
        %v1099 = vpack.c.b16 %v1035, %v1035
        %v1100 = vpack.c.b16 %v1036, %v1036
        %v1101 = vpack.c.b16 %v1037, %v1037
        %v1102 = vpack.c.b16 %v1038, %v1038
        %vm1167 = vcmask 257024
        %1168 = vst.msk [vmem:[%s172] sm:$0xf] %vm1167, %v1039
        %1169 = vst.msk [vmem:[%s172 + $0x4] sm:$0xf] %vm1167, %v1040
        %1170 = vst.msk [vmem:[%s172 + $0x8] sm:$0xf] %vm1167, %v1041
        %1171 = vst.msk [vmem:[%s172 + $0xc] sm:$0xf] %vm1167, %v1042
        %1172 = vst.msk [vmem:[%s172 + $0x10] sm:$0xf] %vm1167, %v1043
        %1173 = vst.msk [vmem:[%s172 + $0x14] sm:$0xf] %vm1167, %v1044
        %1174 = vst.msk [vmem:[%s172 + $0x18] sm:$0xf] %vm1167, %v1045
        %1175 = vst.msk [vmem:[%s172 + $0x1c] sm:$0xf] %vm1167, %v1046
        %1176 = vst.msk [vmem:[%s172 + $0x20] sm:$0xf] %vm1167, %v1047
        %1177 = vst.msk [vmem:[%s172 + $0x24] sm:$0xf] %vm1167, %v1048
        %1178 = vst.msk [vmem:[%s172 + $0x28] sm:$0xf] %vm1167, %v1049
        %1179 = vst.msk [vmem:[%s172 + $0x2c] sm:$0xf] %vm1167, %v1050
        %1180 = vst.msk [vmem:[%s172 + $0x30] sm:$0xf] %vm1167, %v1051
        %1181 = vst.msk [vmem:[%s172 + $0x34] sm:$0xf] %vm1167, %v1052
        %1182 = vst.msk [vmem:[%s172 + $0x38] sm:$0xf] %vm1167, %v1053
        %1183 = vst.msk [vmem:[%s172 + $0x3c] sm:$0xf] %vm1167, %v1054
        %1184 = vst.msk [vmem:[%s172 + $0x40] sm:$0xf] %vm1167, %v1055
        %1185 = vst.msk [vmem:[%s172 + $0x44] sm:$0xf] %vm1167, %v1056
        %1186 = vst.msk [vmem:[%s172 + $0x48] sm:$0xf] %vm1167, %v1057
        %1187 = vst.msk [vmem:[%s172 + $0x4c] sm:$0xf] %vm1167, %v1058
        %1188 = vst.msk [vmem:[%s172 + $0x50] sm:$0xf] %vm1167, %v1059
        %1189 = vst.msk [vmem:[%s172 + $0x54] sm:$0xf] %vm1167, %v1060
        %1190 = vst.msk [vmem:[%s172 + $0x58] sm:$0xf] %vm1167, %v1061
        %1191 = vst.msk [vmem:[%s172 + $0x5c] sm:$0xf] %vm1167, %v1062
        %1192 = vst.msk [vmem:[%s172 + $0x60] sm:$0xf] %vm1167, %v1063
        %1193 = vst.msk [vmem:[%s172 + $0x64] sm:$0xf] %vm1167, %v1064
        %1194 = vst.msk [vmem:[%s172 + $0x68] sm:$0xf] %vm1167, %v1065
        %1195 = vst.msk [vmem:[%s172 + $0x6c] sm:$0xf] %vm1167, %v1066
        %1196 = vst.msk [vmem:[%s172 + $0x70] sm:$0xf] %vm1167, %v1067
        %1197 = vst.msk [vmem:[%s172 + $0x74] sm:$0xf] %vm1167, %v1068
        %1198 = vst.msk [vmem:[%s172 + $0x78] sm:$0xf] %vm1167, %v1069
        %1199 = vst.msk [vmem:[%s172 + $0x7c] sm:$0xf] %vm1167, %v1070
        %1200 = vst.msk [vmem:[%s172 + $0x80] sm:$0xf] %vm1167, %v1071
        %1201 = vst.msk [vmem:[%s172 + $0x84] sm:$0xf] %vm1167, %v1072
        %1202 = vst.msk [vmem:[%s172 + $0x88] sm:$0xf] %vm1167, %v1073
        %1203 = vst.msk [vmem:[%s172 + $0x8c] sm:$0xf] %vm1167, %v1074
        %1204 = vst.msk [vmem:[%s172 + $0x90] sm:$0xf] %vm1167, %v1075
        %1205 = vst.msk [vmem:[%s172 + $0x94] sm:$0xf] %vm1167, %v1076
        %1206 = vst.msk [vmem:[%s172 + $0x98] sm:$0xf] %vm1167, %v1077
        %1207 = vst.msk [vmem:[%s172 + $0x9c] sm:$0xf] %vm1167, %v1078
        %1208 = vst.msk [vmem:[%s172 + $0xa0] sm:$0xf] %vm1167, %v1079
        %1209 = vst.msk [vmem:[%s172 + $0xa4] sm:$0xf] %vm1167, %v1080
        %1210 = vst.msk [vmem:[%s172 + $0xa8] sm:$0xf] %vm1167, %v1081
        %1211 = vst.msk [vmem:[%s172 + $0xac] sm:$0xf] %vm1167, %v1082
        %1212 = vst.msk [vmem:[%s172 + $0xb0] sm:$0xf] %vm1167, %v1083
        %1213 = vst.msk [vmem:[%s172 + $0xb4] sm:$0xf] %vm1167, %v1084
        %1214 = vst.msk [vmem:[%s172 + $0xb8] sm:$0xf] %vm1167, %v1085
        %1215 = vst.msk [vmem:[%s172 + $0xbc] sm:$0xf] %vm1167, %v1086
        %1216 = vst.msk [vmem:[%s172 + $0xc0] sm:$0xf] %vm1167, %v1087
        %1217 = vst.msk [vmem:[%s172 + $0xc4] sm:$0xf] %vm1167, %v1088
        %1218 = vst.msk [vmem:[%s172 + $0xc8] sm:$0xf] %vm1167, %v1089
        %1219 = vst.msk [vmem:[%s172 + $0xcc] sm:$0xf] %vm1167, %v1090
        %1220 = vst.msk [vmem:[%s172 + $0xd0] sm:$0xf] %vm1167, %v1091
        %1221 = vst.msk [vmem:[%s172 + $0xd4] sm:$0xf] %vm1167, %v1092
        %1222 = vst.msk [vmem:[%s172 + $0xd8] sm:$0xf] %vm1167, %v1093
        %1223 = vst.msk [vmem:[%s172 + $0xdc] sm:$0xf] %vm1167, %v1094
        %1224 = vst.msk [vmem:[%s172 + $0xe0] sm:$0xf] %vm1167, %v1095
        %1225 = vst.msk [vmem:[%s172 + $0xe4] sm:$0xf] %vm1167, %v1096
        %1226 = vst.msk [vmem:[%s172 + $0xe8] sm:$0xf] %vm1167, %v1097
        %1227 = vst.msk [vmem:[%s172 + $0xec] sm:$0xf] %vm1167, %v1098
        %1228 = vst.msk [vmem:[%s172 + $0xf0] sm:$0xf] %vm1167, %v1099
        %1229 = vst.msk [vmem:[%s172 + $0xf4] sm:$0xf] %vm1167, %v1100
        %1230 = vst.msk [vmem:[%s172 + $0xf8] sm:$0xf] %vm1167, %v1101
        %1231 = vst.msk [vmem:[%s172 + $0xfc] sm:$0xf] %vm1167, %v1102
        %s1232 = sand.u32 %s90, 1
        %s1233 = sand.u32 %s90, 1
        %s1234 = smul.addr %s1233, 256
        %s1235 = scalar_lea.vmem [#allocation2], %s1234
        // Predicated region
        $region33: #{encoder_forward.11} parent=31 // pred_check
          %p1236 = pneg %p100
        $region34: #{encoder_forward.11} parent=31 // pred_check_branch
          %1238 = sbr.rel (%p1236) target = $region36
        $region35: #{encoder_forward.11} parent=31 // pred_region
          %s1239 = smul.u32 64, %s14
          %s1240 = ssub.s32 75, %s1239
          %p1241 = scmp.lt.s32.totalorder %s1240, 64
          %s1242 = scalar_select %p1241, %s1240, 64
          %s1243 = smul.u32 64, %s1242
          %p1244 = scmp.ne.s32.totalorder 0, %s1243
          %s1245 = smul.addr %s1239, 4
          %s1246 = scalar_lea.vmem %s3, %s1245
          // Predicated region
          $region37: #{encoder_forward.11} parent=35 // pred_check
            %p1247 = pneg %p1244
          $region38: #{encoder_forward.11} parent=35 // pred_check_branch
            %1249 = sbr.rel (%p1247) target = $region40
          $region39: #{encoder_forward.11} parent=35 // pred_region
            // Predicated region
            $region41: #{encoder_forward.11} parent=39 // pred_check
              _
            $region42: #{encoder_forward.11} parent=39 // pred_check_branch
              %1251 = sbr.rel target = $region44
            $region43: #{encoder_forward.11} parent=39 // pred_region
              // Predicated region
              $region63: #{encoder_forward.11} parent=43 // pred_check
                _
              $region64: #{encoder_forward.11} parent=43 // pred_check_branch
                %1426 = sbr.rel (0) target = $region66
              $region65: #{encoder_forward.11} parent=43 // pred_region
                %s1428 = sshrl.u32 %s1242, 6
                // While loop
                $region67: #{encoder_forward.11} parent=65 // loop_pre_header
                  _
                $region68: #{encoder_forward.11} parent=65 // loop_header
                  %s1430 = sphi 0, %s1432
                  %p1431 = scmp.ge.s32.totalorder %s1430, %s1428
                  %s1435 = sphi 0, %s1568
                  %s1436 = sphi %s1235, %s1571
                  %s1437 = sphi %s1246, %s1572
                $region69: #{encoder_forward.11} parent=65 // loop_header_branch
                  %1434 = sbr.rel (%p1431) target = $region73
                $region70: #{encoder_forward.11} parent=65 // loop_body
                  %v1438 = vld [vmem:[%s1436] sm:$0xf]
                  %1439 = vst [vmem:[%s1437] sm:$0xf] %v1438
                  %v1440 = vld [vmem:[%s1436 + $0x4] sm:$0xf]
                  %1441 = vst [vmem:[%s1437 + $0x4] sm:$0xf] %v1440
                  %v1442 = vld [vmem:[%s1436 + $0x8] sm:$0xf]
                  %1443 = vst [vmem:[%s1437 + $0x8] sm:$0xf] %v1442
                  %v1444 = vld [vmem:[%s1436 + $0xc] sm:$0xf]
                  %1445 = vst [vmem:[%s1437 + $0xc] sm:$0xf] %v1444
                  %v1446 = vld [vmem:[%s1436 + $0x10] sm:$0xf]
                  %1447 = vst [vmem:[%s1437 + $0x10] sm:$0xf] %v1446
                  %v1448 = vld [vmem:[%s1436 + $0x14] sm:$0xf]
                  %1449 = vst [vmem:[%s1437 + $0x14] sm:$0xf] %v1448
                  %v1450 = vld [vmem:[%s1436 + $0x18] sm:$0xf]
                  %1451 = vst [vmem:[%s1437 + $0x18] sm:$0xf] %v1450
                  %v1452 = vld [vmem:[%s1436 + $0x1c] sm:$0xf]
                  %1453 = vst [vmem:[%s1437 + $0x1c] sm:$0xf] %v1452
                  %v1454 = vld [vmem:[%s1436 + $0x20] sm:$0xf]
                  %1455 = vst [vmem:[%s1437 + $0x20] sm:$0xf] %v1454
                  %v1456 = vld [vmem:[%s1436 + $0x24] sm:$0xf]
                  %1457 = vst [vmem:[%s1437 + $0x24] sm:$0xf] %v1456
                  %v1458 = vld [vmem:[%s1436 + $0x28] sm:$0xf]
                  %1459 = vst [vmem:[%s1437 + $0x28] sm:$0xf] %v1458
                  %v1460 = vld [vmem:[%s1436 + $0x2c] sm:$0xf]
                  %1461 = vst [vmem:[%s1437 + $0x2c] sm:$0xf] %v1460
                  %v1462 = vld [vmem:[%s1436 + $0x30] sm:$0xf]
                  %1463 = vst [vmem:[%s1437 + $0x30] sm:$0xf] %v1462
                  %v1464 = vld [vmem:[%s1436 + $0x34] sm:$0xf]
                  %1465 = vst [vmem:[%s1437 + $0x34] sm:$0xf] %v1464
                  %v1466 = vld [vmem:[%s1436 + $0x38] sm:$0xf]
                  %1467 = vst [vmem:[%s1437 + $0x38] sm:$0xf] %v1466
                  %v1468 = vld [vmem:[%s1436 + $0x3c] sm:$0xf]
                  %1469 = vst [vmem:[%s1437 + $0x3c] sm:$0xf] %v1468
                  %v1470 = vld [vmem:[%s1436 + $0x40] sm:$0xf]
                  %1471 = vst [vmem:[%s1437 + $0x40] sm:$0xf] %v1470
                  %v1472 = vld [vmem:[%s1436 + $0x44] sm:$0xf]
                  %1473 = vst [vmem:[%s1437 + $0x44] sm:$0xf] %v1472
                  %v1474 = vld [vmem:[%s1436 + $0x48] sm:$0xf]
                  %1475 = vst [vmem:[%s1437 + $0x48] sm:$0xf] %v1474
                  %v1476 = vld [vmem:[%s1436 + $0x4c] sm:$0xf]
                  %1477 = vst [vmem:[%s1437 + $0x4c] sm:$0xf] %v1476
                  %v1478 = vld [vmem:[%s1436 + $0x50] sm:$0xf]
                  %1479 = vst [vmem:[%s1437 + $0x50] sm:$0xf] %v1478
                  %v1480 = vld [vmem:[%s1436 + $0x54] sm:$0xf]
                  %1481 = vst [vmem:[%s1437 + $0x54] sm:$0xf] %v1480
                  %v1482 = vld [vmem:[%s1436 + $0x58] sm:$0xf]
                  %1483 = vst [vmem:[%s1437 + $0x58] sm:$0xf] %v1482
                  %v1484 = vld [vmem:[%s1436 + $0x5c] sm:$0xf]
                  %1485 = vst [vmem:[%s1437 + $0x5c] sm:$0xf] %v1484
                  %v1486 = vld [vmem:[%s1436 + $0x60] sm:$0xf]
                  %1487 = vst [vmem:[%s1437 + $0x60] sm:$0xf] %v1486
                  %v1488 = vld [vmem:[%s1436 + $0x64] sm:$0xf]
                  %1489 = vst [vmem:[%s1437 + $0x64] sm:$0xf] %v1488
                  %v1490 = vld [vmem:[%s1436 + $0x68] sm:$0xf]
                  %1491 = vst [vmem:[%s1437 + $0x68] sm:$0xf] %v1490
                  %v1492 = vld [vmem:[%s1436 + $0x6c] sm:$0xf]
                  %1493 = vst [vmem:[%s1437 + $0x6c] sm:$0xf] %v1492
                  %v1494 = vld [vmem:[%s1436 + $0x70] sm:$0xf]
                  %1495 = vst [vmem:[%s1437 + $0x70] sm:$0xf] %v1494
                  %v1496 = vld [vmem:[%s1436 + $0x74] sm:$0xf]
                  %1497 = vst [vmem:[%s1437 + $0x74] sm:$0xf] %v1496
                  %v1498 = vld [vmem:[%s1436 + $0x78] sm:$0xf]
                  %1499 = vst [vmem:[%s1437 + $0x78] sm:$0xf] %v1498
                  %v1500 = vld [vmem:[%s1436 + $0x7c] sm:$0xf]
                  %1501 = vst [vmem:[%s1437 + $0x7c] sm:$0xf] %v1500
                  %v1502 = vld [vmem:[%s1436 + $0x80] sm:$0xf]
                  %1503 = vst [vmem:[%s1437 + $0x80] sm:$0xf] %v1502
                  %v1504 = vld [vmem:[%s1436 + $0x84] sm:$0xf]
                  %1505 = vst [vmem:[%s1437 + $0x84] sm:$0xf] %v1504
                  %v1506 = vld [vmem:[%s1436 + $0x88] sm:$0xf]
                  %1507 = vst [vmem:[%s1437 + $0x88] sm:$0xf] %v1506
                  %v1508 = vld [vmem:[%s1436 + $0x8c] sm:$0xf]
                  %1509 = vst [vmem:[%s1437 + $0x8c] sm:$0xf] %v1508
                  %v1510 = vld [vmem:[%s1436 + $0x90] sm:$0xf]
                  %1511 = vst [vmem:[%s1437 + $0x90] sm:$0xf] %v1510
                  %v1512 = vld [vmem:[%s1436 + $0x94] sm:$0xf]
                  %1513 = vst [vmem:[%s1437 + $0x94] sm:$0xf] %v1512
                  %v1514 = vld [vmem:[%s1436 + $0x98] sm:$0xf]
                  %1515 = vst [vmem:[%s1437 + $0x98] sm:$0xf] %v1514
                  %v1516 = vld [vmem:[%s1436 + $0x9c] sm:$0xf]
                  %1517 = vst [vmem:[%s1437 + $0x9c] sm:$0xf] %v1516
                  %v1518 = vld [vmem:[%s1436 + $0xa0] sm:$0xf]
                  %1519 = vst [vmem:[%s1437 + $0xa0] sm:$0xf] %v1518
                  %v1520 = vld [vmem:[%s1436 + $0xa4] sm:$0xf]
                  %1521 = vst [vmem:[%s1437 + $0xa4] sm:$0xf] %v1520
                  %v1522 = vld [vmem:[%s1436 + $0xa8] sm:$0xf]
                  %1523 = vst [vmem:[%s1437 + $0xa8] sm:$0xf] %v1522
                  %v1524 = vld [vmem:[%s1436 + $0xac] sm:$0xf]
                  %1525 = vst [vmem:[%s1437 + $0xac] sm:$0xf] %v1524
                  %v1526 = vld [vmem:[%s1436 + $0xb0] sm:$0xf]
                  %1527 = vst [vmem:[%s1437 + $0xb0] sm:$0xf] %v1526
                  %v1528 = vld [vmem:[%s1436 + $0xb4] sm:$0xf]
                  %1529 = vst [vmem:[%s1437 + $0xb4] sm:$0xf] %v1528
                  %v1530 = vld [vmem:[%s1436 + $0xb8] sm:$0xf]
                  %1531 = vst [vmem:[%s1437 + $0xb8] sm:$0xf] %v1530
                  %v1532 = vld [vmem:[%s1436 + $0xbc] sm:$0xf]
                  %1533 = vst [vmem:[%s1437 + $0xbc] sm:$0xf] %v1532
                  %v1534 = vld [vmem:[%s1436 + $0xc0] sm:$0xf]
                  %1535 = vst [vmem:[%s1437 + $0xc0] sm:$0xf] %v1534
                  %v1536 = vld [vmem:[%s1436 + $0xc4] sm:$0xf]
                  %1537 = vst [vmem:[%s1437 + $0xc4] sm:$0xf] %v1536
                  %v1538 = vld [vmem:[%s1436 + $0xc8] sm:$0xf]
                  %1539 = vst [vmem:[%s1437 + $0xc8] sm:$0xf] %v1538
                  %v1540 = vld [vmem:[%s1436 + $0xcc] sm:$0xf]
                  %1541 = vst [vmem:[%s1437 + $0xcc] sm:$0xf] %v1540
                  %v1542 = vld [vmem:[%s1436 + $0xd0] sm:$0xf]
                  %1543 = vst [vmem:[%s1437 + $0xd0] sm:$0xf] %v1542
                  %v1544 = vld [vmem:[%s1436 + $0xd4] sm:$0xf]
                  %1545 = vst [vmem:[%s1437 + $0xd4] sm:$0xf] %v1544
                  %v1546 = vld [vmem:[%s1436 + $0xd8] sm:$0xf]
                  %1547 = vst [vmem:[%s1437 + $0xd8] sm:$0xf] %v1546
                  %v1548 = vld [vmem:[%s1436 + $0xdc] sm:$0xf]
                  %1549 = vst [vmem:[%s1437 + $0xdc] sm:$0xf] %v1548
                  %v1550 = vld [vmem:[%s1436 + $0xe0] sm:$0xf]
                  %1551 = vst [vmem:[%s1437 + $0xe0] sm:$0xf] %v1550
                  %v1552 = vld [vmem:[%s1436 + $0xe4] sm:$0xf]
                  %1553 = vst [vmem:[%s1437 + $0xe4] sm:$0xf] %v1552
                  %v1554 = vld [vmem:[%s1436 + $0xe8] sm:$0xf]
                  %1555 = vst [vmem:[%s1437 + $0xe8] sm:$0xf] %v1554
                  %v1556 = vld [vmem:[%s1436 + $0xec] sm:$0xf]
                  %1557 = vst [vmem:[%s1437 + $0xec] sm:$0xf] %v1556
                  %v1558 = vld [vmem:[%s1436 + $0xf0] sm:$0xf]
                  %1559 = vst [vmem:[%s1437 + $0xf0] sm:$0xf] %v1558
                  %v1560 = vld [vmem:[%s1436 + $0xf4] sm:$0xf]
                  %1561 = vst [vmem:[%s1437 + $0xf4] sm:$0xf] %v1560
                  %v1562 = vld [vmem:[%s1436 + $0xf8] sm:$0xf]
                  %1563 = vst [vmem:[%s1437 + $0xf8] sm:$0xf] %v1562
                  %v1564 = vld [vmem:[%s1436 + $0xfc] sm:$0xf]
                  %1565 = vst [vmem:[%s1437 + $0xfc] sm:$0xf] %v1564
                  %s1566 = sadd.s32 1, %s1435
                  %p1567 = scmp.ge.s32.totalorder %s1566, %s1428
                  %s1568 = scalar_select %p1567, 0, %s1566
                  %s1569 = smul.u32 %s1568, 256
                  %s1570 = smul.u32 %s1568, 256
                  %s1571 = scalar_lea.vmem %s1235, %s1569 [#allocation2]
                  %s1572 = scalar_lea.vmem %s1246, %s1570
                $region71: #{encoder_forward.11} parent=65 // loop_footer
                  %s1432 = sadd.s32 %s1430, 1
                $region72: #{encoder_forward.11} parent=65 // loop_footer_branch
                  %1429 = sbr.rel target = $region68
                $region73: #{encoder_forward.11} parent=65 // loop_exit
                  _
                %s1573 = sshrl.u32 %s1242, 6
                %s1574 = sand.u32 %s1242, 63
                %s1575 = smul.u32 %s1573, 64
                %s1576 = smul.u32 4, %s1575
                %s1577 = scalar_lea.vmem %s1235, %s1576 [#allocation2]
                %s1578 = smul.u32 4, %s1575
                %s1579 = scalar_lea.vmem %s1246, %s1578
                // While loop
                $region74: #{encoder_forward.11} parent=65 // loop_pre_header
                  _
                $region75: #{encoder_forward.11} parent=65 // loop_header
                  %s1581 = sphi 0, %s1583
                  %p1582 = scmp.ge.s32.totalorder %s1581, %s1574
                  %s1586 = sphi 0, %s1593
                  %s1587 = sphi %s1577, %s1596
                  %s1588 = sphi %s1579, %s1597
                $region76: #{encoder_forward.11} parent=65 // loop_header_branch
                  %1585 = sbr.rel (%p1582) target = $region80
                $region77: #{encoder_forward.11} parent=65 // loop_body
                  %v1589 = vld [vmem:[%s1587] sm:$0xf]
                  %1590 = vst [vmem:[%s1588] sm:$0xf] %v1589
                  %s1591 = sadd.s32 1, %s1586
                  %p1592 = scmp.ge.s32.totalorder %s1591, %s1574
                  %s1593 = scalar_select %p1592, 0, %s1591
                  %s1594 = smul.u32 %s1593, 4
                  %s1595 = smul.u32 %s1593, 4
                  %s1596 = scalar_lea.vmem %s1577, %s1594 [#allocation2]
                  %s1597 = scalar_lea.vmem %s1579, %s1595
                $region78: #{encoder_forward.11} parent=65 // loop_footer
                  %s1583 = sadd.s32 %s1581, 1
                $region79: #{encoder_forward.11} parent=65 // loop_footer_branch
                  %1580 = sbr.rel target = $region75
                $region80: #{encoder_forward.11} parent=65 // loop_exit
                  _
              $region66: #{encoder_forward.11} parent=43 // pred_fallthru
                _
            $region44: #{encoder_forward.11} parent=39 // pred_fallthru
              _
            // Predicated region
            $region45: #{encoder_forward.11} parent=39 // pred_check
              _
            $region46: #{encoder_forward.11} parent=39 // pred_check_branch
              %1253 = sbr.rel (0) target = $region48
            $region47: #{encoder_forward.11} parent=39 // pred_region
              %s1255 = sshrl.u32 %s1242, 6
              // While loop
              $region49: #{encoder_forward.11} parent=47 // loop_pre_header
                _
              $region50: #{encoder_forward.11} parent=47 // loop_header
                %s1257 = sphi 0, %s1259
                %p1258 = scmp.ge.s32.totalorder %s1257, %s1255
                %s1262 = sphi 0, %s1395
                %s1263 = sphi %s1235, %s1398
                %s1264 = sphi %s1246, %s1399
              $region51: #{encoder_forward.11} parent=47 // loop_header_branch
                %1261 = sbr.rel (%p1258) target = $region55
              $region52: #{encoder_forward.11} parent=47 // loop_body
                %v1265 = vld [vmem:[%s1263] sm:$0xf]
                %1266 = vst [vmem:[%s1264] sm:$0xf] %v1265
                %v1267 = vld [vmem:[%s1263 + $0x4] sm:$0xf]
                %1268 = vst [vmem:[%s1264 + $0x4] sm:$0xf] %v1267
                %v1269 = vld [vmem:[%s1263 + $0x8] sm:$0xf]
                %1270 = vst [vmem:[%s1264 + $0x8] sm:$0xf] %v1269
                %v1271 = vld [vmem:[%s1263 + $0xc] sm:$0xf]
                %1272 = vst [vmem:[%s1264 + $0xc] sm:$0xf] %v1271
                %v1273 = vld [vmem:[%s1263 + $0x10] sm:$0xf]
                %1274 = vst [vmem:[%s1264 + $0x10] sm:$0xf] %v1273
                %v1275 = vld [vmem:[%s1263 + $0x14] sm:$0xf]
                %1276 = vst [vmem:[%s1264 + $0x14] sm:$0xf] %v1275
                %v1277 = vld [vmem:[%s1263 + $0x18] sm:$0xf]
                %1278 = vst [vmem:[%s1264 + $0x18] sm:$0xf] %v1277
                %v1279 = vld [vmem:[%s1263 + $0x1c] sm:$0xf]
                %1280 = vst [vmem:[%s1264 + $0x1c] sm:$0xf] %v1279
                %v1281 = vld [vmem:[%s1263 + $0x20] sm:$0xf]
                %1282 = vst [vmem:[%s1264 + $0x20] sm:$0xf] %v1281
                %v1283 = vld [vmem:[%s1263 + $0x24] sm:$0xf]
                %1284 = vst [vmem:[%s1264 + $0x24] sm:$0xf] %v1283
                %v1285 = vld [vmem:[%s1263 + $0x28] sm:$0xf]
                %1286 = vst [vmem:[%s1264 + $0x28] sm:$0xf] %v1285
                %v1287 = vld [vmem:[%s1263 + $0x2c] sm:$0xf]
                %1288 = vst [vmem:[%s1264 + $0x2c] sm:$0xf] %v1287
                %v1289 = vld [vmem:[%s1263 + $0x30] sm:$0xf]
                %1290 = vst [vmem:[%s1264 + $0x30] sm:$0xf] %v1289
                %v1291 = vld [vmem:[%s1263 + $0x34] sm:$0xf]
                %1292 = vst [vmem:[%s1264 + $0x34] sm:$0xf] %v1291
                %v1293 = vld [vmem:[%s1263 + $0x38] sm:$0xf]
                %1294 = vst [vmem:[%s1264 + $0x38] sm:$0xf] %v1293
                %v1295 = vld [vmem:[%s1263 + $0x3c] sm:$0xf]
                %1296 = vst [vmem:[%s1264 + $0x3c] sm:$0xf] %v1295
                %v1297 = vld [vmem:[%s1263 + $0x40] sm:$0xf]
                %1298 = vst [vmem:[%s1264 + $0x40] sm:$0xf] %v1297
                %v1299 = vld [vmem:[%s1263 + $0x44] sm:$0xf]
                %1300 = vst [vmem:[%s1264 + $0x44] sm:$0xf] %v1299
                %v1301 = vld [vmem:[%s1263 + $0x48] sm:$0xf]
                %1302 = vst [vmem:[%s1264 + $0x48] sm:$0xf] %v1301
                %v1303 = vld [vmem:[%s1263 + $0x4c] sm:$0xf]
                %1304 = vst [vmem:[%s1264 + $0x4c] sm:$0xf] %v1303
                %v1305 = vld [vmem:[%s1263 + $0x50] sm:$0xf]
                %1306 = vst [vmem:[%s1264 + $0x50] sm:$0xf] %v1305
                %v1307 = vld [vmem:[%s1263 + $0x54] sm:$0xf]
                %1308 = vst [vmem:[%s1264 + $0x54] sm:$0xf] %v1307
                %v1309 = vld [vmem:[%s1263 + $0x58] sm:$0xf]
                %1310 = vst [vmem:[%s1264 + $0x58] sm:$0xf] %v1309
                %v1311 = vld [vmem:[%s1263 + $0x5c] sm:$0xf]
                %1312 = vst [vmem:[%s1264 + $0x5c] sm:$0xf] %v1311
                %v1313 = vld [vmem:[%s1263 + $0x60] sm:$0xf]
                %1314 = vst [vmem:[%s1264 + $0x60] sm:$0xf] %v1313
                %v1315 = vld [vmem:[%s1263 + $0x64] sm:$0xf]
                %1316 = vst [vmem:[%s1264 + $0x64] sm:$0xf] %v1315
                %v1317 = vld [vmem:[%s1263 + $0x68] sm:$0xf]
                %1318 = vst [vmem:[%s1264 + $0x68] sm:$0xf] %v1317
                %v1319 = vld [vmem:[%s1263 + $0x6c] sm:$0xf]
                %1320 = vst [vmem:[%s1264 + $0x6c] sm:$0xf] %v1319
                %v1321 = vld [vmem:[%s1263 + $0x70] sm:$0xf]
                %1322 = vst [vmem:[%s1264 + $0x70] sm:$0xf] %v1321
                %v1323 = vld [vmem:[%s1263 + $0x74] sm:$0xf]
                %1324 = vst [vmem:[%s1264 + $0x74] sm:$0xf] %v1323
                %v1325 = vld [vmem:[%s1263 + $0x78] sm:$0xf]
                %1326 = vst [vmem:[%s1264 + $0x78] sm:$0xf] %v1325
                %v1327 = vld [vmem:[%s1263 + $0x7c] sm:$0xf]
                %1328 = vst [vmem:[%s1264 + $0x7c] sm:$0xf] %v1327
                %v1329 = vld [vmem:[%s1263 + $0x80] sm:$0xf]
                %1330 = vst [vmem:[%s1264 + $0x80] sm:$0xf] %v1329
                %v1331 = vld [vmem:[%s1263 + $0x84] sm:$0xf]
                %1332 = vst [vmem:[%s1264 + $0x84] sm:$0xf] %v1331
                %v1333 = vld [vmem:[%s1263 + $0x88] sm:$0xf]
                %1334 = vst [vmem:[%s1264 + $0x88] sm:$0xf] %v1333
                %v1335 = vld [vmem:[%s1263 + $0x8c] sm:$0xf]
                %1336 = vst [vmem:[%s1264 + $0x8c] sm:$0xf] %v1335
                %v1337 = vld [vmem:[%s1263 + $0x90] sm:$0xf]
                %1338 = vst [vmem:[%s1264 + $0x90] sm:$0xf] %v1337
                %v1339 = vld [vmem:[%s1263 + $0x94] sm:$0xf]
                %1340 = vst [vmem:[%s1264 + $0x94] sm:$0xf] %v1339
                %v1341 = vld [vmem:[%s1263 + $0x98] sm:$0xf]
                %1342 = vst [vmem:[%s1264 + $0x98] sm:$0xf] %v1341
                %v1343 = vld [vmem:[%s1263 + $0x9c] sm:$0xf]
                %1344 = vst [vmem:[%s1264 + $0x9c] sm:$0xf] %v1343
                %v1345 = vld [vmem:[%s1263 + $0xa0] sm:$0xf]
                %1346 = vst [vmem:[%s1264 + $0xa0] sm:$0xf] %v1345
                %v1347 = vld [vmem:[%s1263 + $0xa4] sm:$0xf]
                %1348 = vst [vmem:[%s1264 + $0xa4] sm:$0xf] %v1347
                %v1349 = vld [vmem:[%s1263 + $0xa8] sm:$0xf]
                %1350 = vst [vmem:[%s1264 + $0xa8] sm:$0xf] %v1349
                %v1351 = vld [vmem:[%s1263 + $0xac] sm:$0xf]
                %1352 = vst [vmem:[%s1264 + $0xac] sm:$0xf] %v1351
                %v1353 = vld [vmem:[%s1263 + $0xb0] sm:$0xf]
                %1354 = vst [vmem:[%s1264 + $0xb0] sm:$0xf] %v1353
                %v1355 = vld [vmem:[%s1263 + $0xb4] sm:$0xf]
                %1356 = vst [vmem:[%s1264 + $0xb4] sm:$0xf] %v1355
                %v1357 = vld [vmem:[%s1263 + $0xb8] sm:$0xf]
                %1358 = vst [vmem:[%s1264 + $0xb8] sm:$0xf] %v1357
                %v1359 = vld [vmem:[%s1263 + $0xbc] sm:$0xf]
                %1360 = vst [vmem:[%s1264 + $0xbc] sm:$0xf] %v1359
                %v1361 = vld [vmem:[%s1263 + $0xc0] sm:$0xf]
                %1362 = vst [vmem:[%s1264 + $0xc0] sm:$0xf] %v1361
                %v1363 = vld [vmem:[%s1263 + $0xc4] sm:$0xf]
                %1364 = vst [vmem:[%s1264 + $0xc4] sm:$0xf] %v1363
                %v1365 = vld [vmem:[%s1263 + $0xc8] sm:$0xf]
                %1366 = vst [vmem:[%s1264 + $0xc8] sm:$0xf] %v1365
                %v1367 = vld [vmem:[%s1263 + $0xcc] sm:$0xf]
                %1368 = vst [vmem:[%s1264 + $0xcc] sm:$0xf] %v1367
                %v1369 = vld [vmem:[%s1263 + $0xd0] sm:$0xf]
                %1370 = vst [vmem:[%s1264 + $0xd0] sm:$0xf] %v1369
                %v1371 = vld [vmem:[%s1263 + $0xd4] sm:$0xf]
                %1372 = vst [vmem:[%s1264 + $0xd4] sm:$0xf] %v1371
                %v1373 = vld [vmem:[%s1263 + $0xd8] sm:$0xf]
                %1374 = vst [vmem:[%s1264 + $0xd8] sm:$0xf] %v1373
                %v1375 = vld [vmem:[%s1263 + $0xdc] sm:$0xf]
                %1376 = vst [vmem:[%s1264 + $0xdc] sm:$0xf] %v1375
                %v1377 = vld [vmem:[%s1263 + $0xe0] sm:$0xf]
                %1378 = vst [vmem:[%s1264 + $0xe0] sm:$0xf] %v1377
                %v1379 = vld [vmem:[%s1263 + $0xe4] sm:$0xf]
                %1380 = vst [vmem:[%s1264 + $0xe4] sm:$0xf] %v1379
                %v1381 = vld [vmem:[%s1263 + $0xe8] sm:$0xf]
                %1382 = vst [vmem:[%s1264 + $0xe8] sm:$0xf] %v1381
                %v1383 = vld [vmem:[%s1263 + $0xec] sm:$0xf]
                %1384 = vst [vmem:[%s1264 + $0xec] sm:$0xf] %v1383
                %v1385 = vld [vmem:[%s1263 + $0xf0] sm:$0xf]
                %1386 = vst [vmem:[%s1264 + $0xf0] sm:$0xf] %v1385
                %v1387 = vld [vmem:[%s1263 + $0xf4] sm:$0xf]
                %1388 = vst [vmem:[%s1264 + $0xf4] sm:$0xf] %v1387
                %v1389 = vld [vmem:[%s1263 + $0xf8] sm:$0xf]
                %1390 = vst [vmem:[%s1264 + $0xf8] sm:$0xf] %v1389
                %v1391 = vld [vmem:[%s1263 + $0xfc] sm:$0xf]
                %1392 = vst [vmem:[%s1264 + $0xfc] sm:$0xf] %v1391
                %s1393 = sadd.s32 1, %s1262
                %p1394 = scmp.ge.s32.totalorder %s1393, %s1255
                %s1395 = scalar_select %p1394, 0, %s1393
                %s1396 = smul.u32 %s1395, 256
                %s1397 = smul.u32 %s1395, 256
                %s1398 = scalar_lea.vmem %s1235, %s1396 [#allocation2]
                %s1399 = scalar_lea.vmem %s1246, %s1397
              $region53: #{encoder_forward.11} parent=47 // loop_footer
                %s1259 = sadd.s32 %s1257, 1
              $region54: #{encoder_forward.11} parent=47 // loop_footer_branch
                %1256 = sbr.rel target = $region50
              $region55: #{encoder_forward.11} parent=47 // loop_exit
                _
              %s1400 = sshrl.u32 %s1242, 6
              %s1401 = sand.u32 %s1242, 63
              %s1402 = smul.u32 %s1400, 64
              %s1403 = smul.u32 4, %s1402
              %s1404 = scalar_lea.vmem %s1235, %s1403 [#allocation2]
              %s1405 = smul.u32 4, %s1402
              %s1406 = scalar_lea.vmem %s1246, %s1405
              // While loop
              $region56: #{encoder_forward.11} parent=47 // loop_pre_header
                _
              $region57: #{encoder_forward.11} parent=47 // loop_header
                %s1408 = sphi 0, %s1410
                %p1409 = scmp.ge.s32.totalorder %s1408, %s1401
                %s1413 = sphi 0, %s1420
                %s1414 = sphi %s1404, %s1423
                %s1415 = sphi %s1406, %s1424
              $region58: #{encoder_forward.11} parent=47 // loop_header_branch
                %1412 = sbr.rel (%p1409) target = $region62
              $region59: #{encoder_forward.11} parent=47 // loop_body
                %v1416 = vld [vmem:[%s1414] sm:$0xf]
                %1417 = vst [vmem:[%s1415] sm:$0xf] %v1416
                %s1418 = sadd.s32 1, %s1413
                %p1419 = scmp.ge.s32.totalorder %s1418, %s1401
                %s1420 = scalar_select %p1419, 0, %s1418
                %s1421 = smul.u32 %s1420, 4
                %s1422 = smul.u32 %s1420, 4
                %s1423 = scalar_lea.vmem %s1404, %s1421 [#allocation2]
                %s1424 = scalar_lea.vmem %s1406, %s1422
              $region60: #{encoder_forward.11} parent=47 // loop_footer
                %s1410 = sadd.s32 %s1408, 1
              $region61: #{encoder_forward.11} parent=47 // loop_footer_branch
                %1407 = sbr.rel target = $region57
              $region62: #{encoder_forward.11} parent=47 // loop_exit
                _
            $region48: #{encoder_forward.11} parent=39 // pred_fallthru
              _
          $region40: #{encoder_forward.11} parent=35 // pred_fallthru
            _
          %1598 = vnop
        $region36: #{encoder_forward.11} parent=31 // pred_fallthru
          _
      $region32: #{encoder_forward.11} parent=5 // pred_fallthru
        _
      %p1599 = scmp.le.s32.totalorder 2, %s9
      // Predicated region
      $region81: #{encoder_forward.11} parent=5 // pred_check
        %p1600 = pneg %p1599
      $region82: #{encoder_forward.11} parent=5 // pred_check_branch
        %1602 = sbr.rel (%p1600) target = $region84
      $region83: #{encoder_forward.11} parent=5 // pred_region
        %s1603 = ssub.s32 %s9, 2
        // Predicated region
        $region85: #{encoder_forward.11} parent=83 // pred_check
          %p1604 = pneg %p106
        $region86: #{encoder_forward.11} parent=83 // pred_check_branch
          %1606 = sbr.rel (%p1604) target = $region88
        $region87: #{encoder_forward.11} parent=83 // pred_region
          %s1607 = sand.u32 %s91, 1
          %s1608 = sand.u32 %s91, 1
          %s1609 = smul.addr %s1608, 256
          %s1610 = scalar_lea.vmem [#allocation2], %s1609
        $region88: #{encoder_forward.11} parent=83 // pred_fallthru
          _
      $region84: #{encoder_forward.11} parent=5 // pred_fallthru
        _
    $region6: #{encoder_forward.11} parent=1 // loop_footer
      %s13 = sadd.s32 1, %s9
    $region7: #{encoder_forward.11} parent=1 // loop_footer_branch
      %8 = sbr.rel target = $region3
    $region8: #{encoder_forward.11} parent=1 // loop_exit
      _

// kernel: encoder_forward.12
$region0: #{encoder_forward.12}
  #allocation0 [shape = 'u32[]', space=smem, size = 0x4, offset = 0x4, fixed_abs, tag = 'smem constant byte address 0x4 - core index']
  #allocation1 [shape = 'u32[144,128]{1,0:T(1,128)}', space=vmem, size = 0x12000, scoped, tag = 'internal scratch']
  %s0 = inlined_call_operand.vmem [shape: bf16[128,288], index: 0, kind: input, shape index: {}]
  %s1 = inlined_call_operand.vmem [shape: bf16[288,32], index: 1, kind: input, shape index: {}]
  %s2 = inlined_call_operand.vmem [shape: f32[1,32], index: 2, kind: input, shape index: {}]
  %s3 = inlined_call_operand.vmem [shape: bf16[128,32], index: 3, kind: output, shape index: {}]
  %s4 = sld [smem:[#allocation0]]
  $region22: #{encoder_forward.12} parent=0
    _
  %s6 = ssub.s32 1, %s4
  %s7 = scalar_select 0, %s6, %s4
  // Predicated region
  $region2: #{encoder_forward.12} parent=0 // pred_check
    _
  $region3: #{encoder_forward.12} parent=0 // pred_check_branch
    %9 = sbr.rel (0) target = $region5
  $region4: #{encoder_forward.12} parent=0 // pred_region
    _
  $region5: #{encoder_forward.12} parent=0 // pred_fallthru
    _
  // Predicated region
  $region6: #{encoder_forward.12} parent=0 // pred_check
    _
  $region7: #{encoder_forward.12} parent=0 // pred_check_branch
    %11 = sbr.rel (0) target = $region9
  $region8: #{encoder_forward.12} parent=0 // pred_region
    _
  $region9: #{encoder_forward.12} parent=0 // pred_fallthru
    _
  // Predicated region
  $region10: #{encoder_forward.12} parent=0 // pred_check
    _
  $region11: #{encoder_forward.12} parent=0 // pred_check_branch
    %13 = sbr.rel (0) target = $region13
  $region12: #{encoder_forward.12} parent=0 // pred_region
    _
  $region13: #{encoder_forward.12} parent=0 // pred_fallthru
    _
  %v15 = vld [vmem:[%s0] sm:$0xff]
  %v16 = vld [vmem:[%s0 + $0x8] sm:$0xf]
  %v17 = vld [vmem:[%s0 + $0xc] sm:$0xff]
  %v18 = vld [vmem:[%s0 + $0x14] sm:$0xf]
  %v19 = vld [vmem:[%s0 + $0x18] sm:$0xff]
  %v20 = vld [vmem:[%s0 + $0x20] sm:$0xf]
  %v21 = vld [vmem:[%s0 + $0x24] sm:$0xff]
  %v22 = vld [vmem:[%s0 + $0x2c] sm:$0xf]
  %v23 = vld [vmem:[%s0 + $0x30] sm:$0xff]
  %v24 = vld [vmem:[%s0 + $0x38] sm:$0xf]
  %v25 = vld [vmem:[%s0 + $0x3c] sm:$0xff]
  %v26 = vld [vmem:[%s0 + $0x44] sm:$0xf]
  %v27 = vld [vmem:[%s0 + $0x48] sm:$0xff]
  %v28 = vld [vmem:[%s0 + $0x50] sm:$0xf]
  %v29 = vld [vmem:[%s0 + $0x54] sm:$0xff]
  %v30 = vld [vmem:[%s0 + $0x5c] sm:$0xf]
  %v31 = vld [vmem:[%s0 + $0x60] sm:$0xff]
  %v32 = vld [vmem:[%s0 + $0x68] sm:$0xf]
  %v33 = vld [vmem:[%s0 + $0x6c] sm:$0xff]
  %v34 = vld [vmem:[%s0 + $0x74] sm:$0xf]
  %v35 = vld [vmem:[%s0 + $0x78] sm:$0xff]
  %v36 = vld [vmem:[%s0 + $0x80] sm:$0xf]
  %v37 = vld [vmem:[%s0 + $0x84] sm:$0xff]
  %v38 = vld [vmem:[%s0 + $0x8c] sm:$0xf]
  %v39 = vld [vmem:[%s0 + $0x90] sm:$0xff]
  %v40 = vld [vmem:[%s0 + $0x98] sm:$0xf]
  %v41 = vld [vmem:[%s0 + $0x9c] sm:$0xff]
  %v42 = vld [vmem:[%s0 + $0xa4] sm:$0xf]
  %v43 = vld [vmem:[%s0 + $0xa8] sm:$0xff]
  %v44 = vld [vmem:[%s0 + $0xb0] sm:$0xf]
  %v45 = vld [vmem:[%s0 + $0xb4] sm:$0xff]
  %v46 = vld [vmem:[%s0 + $0xbc] sm:$0xf]
  %v47 = vld [vmem:[%s1] sm:$0xf]
  %v48 = vld [vmem:[%s1 + $0x4] sm:$0xf]
  %v49 = vld [vmem:[%s1 + $0x8] sm:$0xf]
  %v50 = vld [vmem:[%s1 + $0xc] sm:$0xf]
  %v51 = vld [vmem:[%s1 + $0x10] sm:$0xf]
  %v52 = vld [vmem:[%s1 + $0x14] sm:$0xf]
  %v53 = vld [vmem:[%s1 + $0x18] sm:$0xf]
  %v54 = vld [vmem:[%s1 + $0x1c] sm:$0xf]
  %v55 = vld [vmem:[%s1 + $0x20] sm:$0xf]
  %v56 = vld [vmem:[%s1 + $0x24] sm:$0xf]
  %v57 = vld [vmem:[%s1 + $0x28] sm:$0xf]
  %v58 = vld [vmem:[%s1 + $0x2c] sm:$0xf]
  %v59 = vld [vmem:[%s1 + $0x30] sm:$0xf]
  %v60 = vld [vmem:[%s1 + $0x34] sm:$0xf]
  %v61 = vld [vmem:[%s1 + $0x38] sm:$0xf]
  %v62 = vld [vmem:[%s1 + $0x3c] sm:$0xf]
  %v63 = vld [vmem:[%s1 + $0x40] sm:$0xf]
  %v64 = vld [vmem:[%s1 + $0x44] sm:$0xf]
  %v65 = vld [vmem:[%s1 + $0x48] sm:$0xf]
  %v66 = vld [vmem:[%s1 + $0x4c] sm:$0xf]
  %v67 = vld [vmem:[%s1 + $0x50] sm:$0xf]
  %v68 = vld [vmem:[%s1 + $0x54] sm:$0xf]
  %v69 = vld [vmem:[%s1 + $0x58] sm:$0xf]
  %v70 = vld [vmem:[%s1 + $0x5c] sm:$0xf]
  %v71 = vld [vmem:[%s1 + $0x60] sm:$0xf]
  %v72 = vld [vmem:[%s1 + $0x64] sm:$0xf]
  %v73 = vld [vmem:[%s1 + $0x68] sm:$0xf]
  %v74 = vld [vmem:[%s1 + $0x6c] sm:$0xf]
  %v75 = vld [vmem:[%s1 + $0x70] sm:$0xf]
  %v76 = vld [vmem:[%s1 + $0x74] sm:$0xf]
  %v77 = vld [vmem:[%s1 + $0x78] sm:$0xf]
  %v78 = vld [vmem:[%s1 + $0x7c] sm:$0xf]
  %v79 = vld [vmem:[%s1 + $0x80] sm:$0xf]
  %v80 = vld [vmem:[%s1 + $0x84] sm:$0xf]
  %v81 = vld [vmem:[%s1 + $0x88] sm:$0xf]
  %v82 = vld [vmem:[%s1 + $0x8c] sm:$0xf]
  %v83 = vld [vmem:[%s2] sm:$0x1]
  %v85 = vlaneseq
  %v86 = vshrl.u32 %v85, 7
  %v87 = vsub.s32 0, %v86
  %v88 = vrot.slane %v83, %v87
  %v122 = vunpack.c.l.b16 %v15
  %v123 = vunpack.c.h.b16 %v15
  %v124 = vunpack.c.l.b16 %v16
  %v125 = vunpack.c.l.b16 %v17
  %v126 = vunpack.c.h.b16 %v17
  %v127 = vunpack.c.l.b16 %v18
  %v128 = vunpack.c.l.b16 %v19
  %v129 = vunpack.c.h.b16 %v19
  %v130 = vunpack.c.l.b16 %v20
  %v131 = vunpack.c.l.b16 %v21
  %v132 = vunpack.c.h.b16 %v21
  %v133 = vunpack.c.l.b16 %v22
  %v134 = vunpack.c.l.b16 %v23
  %v135 = vunpack.c.h.b16 %v23
  %v136 = vunpack.c.l.b16 %v24
  %v137 = vunpack.c.l.b16 %v25
  %v138 = vunpack.c.h.b16 %v25
  %v139 = vunpack.c.l.b16 %v26
  %v140 = vunpack.c.l.b16 %v27
  %v141 = vunpack.c.h.b16 %v27
  %v142 = vunpack.c.l.b16 %v28
  %v143 = vunpack.c.l.b16 %v29
  %v144 = vunpack.c.h.b16 %v29
  %v145 = vunpack.c.l.b16 %v30
  %v146 = vunpack.c.l.b16 %v31
  %v147 = vunpack.c.h.b16 %v31
  %v148 = vunpack.c.l.b16 %v32
  %v149 = vunpack.c.l.b16 %v33
  %v150 = vunpack.c.h.b16 %v33
  %v151 = vunpack.c.l.b16 %v34
  %v152 = vunpack.c.l.b16 %v35
  %v153 = vunpack.c.h.b16 %v35
  %v154 = vunpack.c.l.b16 %v36
  %v155 = vunpack.c.l.b16 %v37
  %v156 = vunpack.c.h.b16 %v37
  %v157 = vunpack.c.l.b16 %v38
  %v158 = vunpack.c.l.b16 %v39
  %v159 = vunpack.c.h.b16 %v39
  %v160 = vunpack.c.l.b16 %v40
  %v161 = vunpack.c.l.b16 %v41
  %v162 = vunpack.c.h.b16 %v41
  %v163 = vunpack.c.l.b16 %v42
  %v164 = vunpack.c.l.b16 %v43
  %v165 = vunpack.c.h.b16 %v43
  %v166 = vunpack.c.l.b16 %v44
  %v167 = vunpack.c.l.b16 %v45
  %v168 = vunpack.c.h.b16 %v45
  %v169 = vunpack.c.l.b16 %v46
  %v170 = vpack.c.b16 %v125, %v122
  %v171 = vpack.c.b16 %v126, %v123
  %v172 = vpack.c.b16 %v127, %v124
  %v173 = vpack.c.b16 %v131, %v128
  %v174 = vpack.c.b16 %v132, %v129
  %v175 = vpack.c.b16 %v133, %v130
  %v176 = vpack.c.b16 %v137, %v134
  %v177 = vpack.c.b16 %v138, %v135
  %v178 = vpack.c.b16 %v139, %v136
  %v179 = vpack.c.b16 %v143, %v140
  %v180 = vpack.c.b16 %v144, %v141
  %v181 = vpack.c.b16 %v145, %v142
  %v182 = vpack.c.b16 %v149, %v146
  %v183 = vpack.c.b16 %v150, %v147
  %v184 = vpack.c.b16 %v151, %v148
  %v185 = vpack.c.b16 %v155, %v152
  %v186 = vpack.c.b16 %v156, %v153
  %v187 = vpack.c.b16 %v157, %v154
  %v188 = vpack.c.b16 %v161, %v158
  %v189 = vpack.c.b16 %v162, %v159
  %v190 = vpack.c.b16 %v163, %v160
  %v191 = vpack.c.b16 %v167, %v164
  %v192 = vpack.c.b16 %v168, %v165
  %v193 = vpack.c.b16 %v169, %v166
  %v246 = vunpack.c.l.b16 %v47
  %v247 = vunpack.c.l.b16 %v48
  %v248 = vunpack.c.l.b16 %v49
  %v249 = vunpack.c.l.b16 %v50
  %v250 = vunpack.c.l.b16 %v51
  %v251 = vunpack.c.l.b16 %v52
  %v252 = vunpack.c.l.b16 %v53
  %v253 = vunpack.c.l.b16 %v54
  %v254 = vunpack.c.l.b16 %v55
  %v255 = vunpack.c.l.b16 %v56
  %v256 = vunpack.c.l.b16 %v57
  %v257 = vunpack.c.l.b16 %v58
  %v258 = vunpack.c.l.b16 %v59
  %v259 = vunpack.c.l.b16 %v60
  %v260 = vunpack.c.l.b16 %v61
  %v261 = vunpack.c.l.b16 %v62
  %v262 = vunpack.c.l.b16 %v63
  %v263 = vunpack.c.l.b16 %v64
  %v264 = vunpack.c.l.b16 %v65
  %v265 = vunpack.c.l.b16 %v66
  %v266 = vunpack.c.l.b16 %v67
  %v267 = vunpack.c.l.b16 %v68
  %v268 = vunpack.c.l.b16 %v69
  %v269 = vunpack.c.l.b16 %v70
  %v270 = vunpack.c.l.b16 %v71
  %v271 = vunpack.c.l.b16 %v72
  %v272 = vunpack.c.l.b16 %v73
  %v273 = vunpack.c.l.b16 %v74
  %v274 = vunpack.c.l.b16 %v75
  %v275 = vunpack.c.l.b16 %v76
  %v276 = vunpack.c.l.b16 %v77
  %v277 = vunpack.c.l.b16 %v78
  %v278 = vunpack.c.l.b16 %v79
  %v279 = vunpack.c.l.b16 %v80
  %v280 = vunpack.c.l.b16 %v81
  %v281 = vunpack.c.l.b16 %v82
  %v282 = vpack.c.b16 %v247, %v246
  %v283 = vpack.c.b16 %v249, %v248
  %v284 = vpack.c.b16 %v251, %v250
  %v285 = vpack.c.b16 %v253, %v252
  %v286 = vpack.c.b16 %v255, %v254
  %v287 = vpack.c.b16 %v257, %v256
  %v288 = vpack.c.b16 %v259, %v258
  %v289 = vpack.c.b16 %v261, %v260
  %v290 = vpack.c.b16 %v263, %v262
  %v291 = vpack.c.b16 %v265, %v264
  %v292 = vpack.c.b16 %v267, %v266
  %v293 = vpack.c.b16 %v269, %v268
  %v294 = vpack.c.b16 %v271, %v270
  %v295 = vpack.c.b16 %v273, %v272
  %v296 = vpack.c.b16 %v275, %v274
  %v297 = vpack.c.b16 %v277, %v276
  %v298 = vpack.c.b16 %v279, %v278
  %v299 = vpack.c.b16 %v281, %v280
  %vm318 = vcmask 261120
  %v320 = vsel %vm318, %v172, 0
  %v323 = vsel %vm318, %v175, 0
  %v326 = vsel %vm318, %v178, 0
  %v329 = vsel %vm318, %v181, 0
  %v332 = vsel %vm318, %v184, 0
  %v335 = vsel %vm318, %v187, 0
  %v338 = vsel %vm318, %v190, 0
  %v341 = vsel %vm318, %v193, 0
  %343 = vmatprep.subr.bf16.mxu0 0
  %344 = vmatpush1.bf16.msra.mxu0 %v282
  %345 = vmatprep.subr.bf16.mxu0 0
  %346 = vmatpush1.bf16.msra.mxu0 %v283
  %347 = vmatprep.subr.bf16.mxu0 0
  %348 = vmatpush1.bf16.msra.mxu0 %v284
  %349 = vmatprep.subr.bf16.mxu0 0
  %350 = vmatpush1.bf16.msra.mxu0 %v285
  %351 = vmatprep.subr.bf16.mxu0 0
  %352 = vmatpush1.bf16.msra.mxu0 %v286
  %353 = vmatprep.subr.bf16.mxu0 0
  %354 = vmatpush1.bf16.msra.mxu0 %v287
  %355 = vmatprep.subr.bf16.mxu0 0
  %356 = vmatpush1.bf16.msra.mxu0 %v288
  %357 = vmatprep.subr.bf16.mxu0 0
  %358 = vmatpush1.bf16.msra.mxu0 %v289
  %359 = vmatprep.subr.bf16.mxu0 0
  %360 = vmatpush1.bf16.msra.mxu0 %v290
  %361 = vmatprep.subr.bf16.mxu0 0
  %362 = vmatpush1.bf16.msra.mxu0 %v291
  %363 = vmatprep.subr.bf16.mxu0 0
  %364 = vmatpush1.bf16.msra.mxu0 %v292
  %365 = vmatprep.subr.bf16.mxu0 0
  %366 = vmatpush1.bf16.msra.mxu0 %v293
  %367 = vmatprep.subr.bf16.mxu0 0
  %368 = vmatpush1.bf16.msra.mxu0 %v294
  %369 = vmatprep.subr.bf16.mxu0 0
  %370 = vmatpush1.bf16.msra.mxu0 %v295
  %371 = vmatprep.subr.bf16.mxu0 0
  %372 = vmatpush1.bf16.msra.mxu0 %v296
  %373 = vmatprep.subr.bf16.mxu0 0
  %374 = vmatpush1.bf16.msra.mxu0 %v297
  %375 = vmatprep.mubr.bf16.mxu0 %v171
  %376 = vmatmul.mubr.bf16.gmra.mrb[0].mxu0 %v170
  %v377 = vpop.f32.mrb[0].mxu0
  %v378 = vadd.f32 %v88, %v377
  %v379 = vpop.f32.mrb[0].mxu0
  %v380 = vpop.f32.mrb[0].mxu0
  %v381 = vadd.f32 %v88, %v380
  %v382 = vpop.f32.mrb[0].mxu0
  %383 = vmatprep.mubr.bf16.mxu0 %v174
  %384 = vmatmul.mubr.bf16.gmra.mrb[0].mxu0 %v173
  %v385 = vpop.f32.mrb[0].mxu0
  %v386 = vadd.f32 %v88, %v385
  %v387 = vpop.f32.mrb[0].mxu0
  %v388 = vpop.f32.mrb[0].mxu0
  %v389 = vadd.f32 %v88, %v388
  %v390 = vpop.f32.mrb[0].mxu0
  %391 = vmatprep.mubr.bf16.mxu0 %v177
  %392 = vmatmul.mubr.bf16.gmra.mrb[0].mxu0 %v176
  %v393 = vpop.f32.mrb[0].mxu0
  %v394 = vadd.f32 %v88, %v393
  %v395 = vpop.f32.mrb[0].mxu0
  %v396 = vpop.f32.mrb[0].mxu0
  %v397 = vadd.f32 %v88, %v396
  %v398 = vpop.f32.mrb[0].mxu0
  %399 = vmatprep.mubr.bf16.mxu0 %v180
  %400 = vmatmul.mubr.bf16.gmra.mrb[0].mxu0 %v179
  %v401 = vpop.f32.mrb[0].mxu0
  %v402 = vadd.f32 %v88, %v401
  %v403 = vpop.f32.mrb[0].mxu0
  %v404 = vpop.f32.mrb[0].mxu0
  %v405 = vadd.f32 %v88, %v404
  %v406 = vpop.f32.mrb[0].mxu0
  %407 = vmatprep.mubr.bf16.mxu0 %v183
  %408 = vmatmul.mubr.bf16.gmra.mrb[0].mxu0 %v182
  %v409 = vpop.f32.mrb[0].mxu0
  %v410 = vadd.f32 %v88, %v409
  %v411 = vpop.f32.mrb[0].mxu0
  %v412 = vpop.f32.mrb[0].mxu0
  %v413 = vadd.f32 %v88, %v412
  %v414 = vpop.f32.mrb[0].mxu0
  %415 = vmatprep.mubr.bf16.mxu0 %v186
  %416 = vmatmul.mubr.bf16.gmra.mrb[0].mxu0 %v185
  %v417 = vpop.f32.mrb[0].mxu0
  %v418 = vadd.f32 %v88, %v417
  %v419 = vpop.f32.mrb[0].mxu0
  %v420 = vpop.f32.mrb[0].mxu0
  %v421 = vadd.f32 %v88, %v420
  %v422 = vpop.f32.mrb[0].mxu0
  %423 = vmatprep.mubr.bf16.mxu0 %v189
  %424 = vmatmul.mubr.bf16.gmra.mrb[0].mxu0 %v188
  %v425 = vpop.f32.mrb[0].mxu0
  %v426 = vadd.f32 %v88, %v425
  %v427 = vpop.f32.mrb[0].mxu0
  %v428 = vpop.f32.mrb[0].mxu0
  %v429 = vadd.f32 %v88, %v428
  %v430 = vpop.f32.mrb[0].mxu0
  %431 = vmatprep.mubr.bf16.mxu0 %v192
  %432 = vmatmul.mubr.bf16.gmra.mrb[0].mxu0 %v191
  %v433 = vpop.f32.mrb[0].mxu0
  %v434 = vadd.f32 %v88, %v433
  %v435 = vpop.f32.mrb[0].mxu0
  %v436 = vpop.f32.mrb[0].mxu0
  %v437 = vadd.f32 %v88, %v436
  %v438 = vpop.f32.mrb[0].mxu0
  %439 = vdwg.mxu0
  %440 = vmatprep.subr.bf16.mxu0 0
  %441 = vmatpush1.bf16.msra.mxu0 %v298
  %442 = vmatprep.subr.bf16.mxu0 0
  %443 = vmatpush1.bf16.msra.mxu0 %v299
  %444 = vmatprep.subr.bf16.mxu0 0
  %445 = vmatpush1.bf16.msra.mxu0 0
  %446 = vmatprep.subr.bf16.mxu0 0
  %447 = vmatpush1.bf16.msra.mxu0 0
  %448 = vmatprep.subr.bf16.mxu0 0
  %449 = vmatpush1.bf16.msra.mxu0 0
  %450 = vmatprep.subr.bf16.mxu0 0
  %451 = vmatpush1.bf16.msra.mxu0 0
  %452 = vmatprep.subr.bf16.mxu0 0
  %453 = vmatpush1.bf16.msra.mxu0 0
  %454 = vmatprep.subr.bf16.mxu0 0
  %455 = vmatpush1.bf16.msra.mxu0 0
  %456 = vmatprep.subr.bf16.mxu0 0
  %457 = vmatpush1.bf16.msra.mxu0 0
  %458 = vmatprep.subr.bf16.mxu0 0
  %459 = vmatpush1.bf16.msra.mxu0 0
  %460 = vmatprep.subr.bf16.mxu0 0
  %461 = vmatpush1.bf16.msra.mxu0 0
  %462 = vmatprep.subr.bf16.mxu0 0
  %463 = vmatpush1.bf16.msra.mxu0 0
  %464 = vmatprep.subr.bf16.mxu0 0
  %465 = vmatpush1.bf16.msra.mxu0 0
  %466 = vmatprep.subr.bf16.mxu0 0
  %467 = vmatpush1.bf16.msra.mxu0 0
  %468 = vmatprep.subr.bf16.mxu0 0
  %469 = vmatpush1.bf16.msra.mxu0 0
  %470 = vmatprep.subr.bf16.mxu0 0
  %471 = vmatpush1.bf16.msra.mxu0 0
  %472 = vmatprep.mubr.bf16.mxu0 0
  %473 = vmatmul.mubr.bf16.gmra.mrb[0].mxu0 %v320
  %v474 = vpop.f32.mrb[0].mxu0
  %v475 = vadd.f32 %v378, %v474
  %v476 = vpop.f32.mrb[0].mxu0
  %v477 = vpop.f32.mrb[0].mxu0
  %v478 = vadd.f32 %v381, %v477
  %v479 = vpop.f32.mrb[0].mxu0
  %480 = vmatprep.mubr.bf16.mxu0 0
  %481 = vmatmul.mubr.bf16.gmra.mrb[0].mxu0 %v323
  %v482 = vpop.f32.mrb[0].mxu0
  %v483 = vadd.f32 %v386, %v482
  %v484 = vpop.f32.mrb[0].mxu0
  %v485 = vpop.f32.mrb[0].mxu0
  %v486 = vadd.f32 %v389, %v485
  %v487 = vpop.f32.mrb[0].mxu0
  %488 = vmatprep.mubr.bf16.mxu0 0
  %489 = vmatmul.mubr.bf16.gmra.mrb[0].mxu0 %v326
  %v490 = vpop.f32.mrb[0].mxu0
  %v491 = vadd.f32 %v394, %v490
  %v492 = vpop.f32.mrb[0].mxu0
  %v493 = vpop.f32.mrb[0].mxu0
  %v494 = vadd.f32 %v397, %v493
  %v495 = vpop.f32.mrb[0].mxu0
  %496 = vmatprep.mubr.bf16.mxu0 0
  %497 = vmatmul.mubr.bf16.gmra.mrb[0].mxu0 %v329
  %v498 = vpop.f32.mrb[0].mxu0
  %v499 = vadd.f32 %v402, %v498
  %v500 = vpop.f32.mrb[0].mxu0
  %v501 = vpop.f32.mrb[0].mxu0
  %v502 = vadd.f32 %v405, %v501
  %v503 = vpop.f32.mrb[0].mxu0
  %504 = vmatprep.mubr.bf16.mxu0 0
  %505 = vmatmul.mubr.bf16.gmra.mrb[0].mxu0 %v332
  %v506 = vpop.f32.mrb[0].mxu0
  %v507 = vadd.f32 %v410, %v506
  %v508 = vpop.f32.mrb[0].mxu0
  %v509 = vpop.f32.mrb[0].mxu0
  %v510 = vadd.f32 %v413, %v509
  %v511 = vpop.f32.mrb[0].mxu0
  %512 = vmatprep.mubr.bf16.mxu0 0
  %513 = vmatmul.mubr.bf16.gmra.mrb[0].mxu0 %v335
  %v514 = vpop.f32.mrb[0].mxu0
  %v515 = vadd.f32 %v418, %v514
  %v516 = vpop.f32.mrb[0].mxu0
  %v517 = vpop.f32.mrb[0].mxu0
  %v518 = vadd.f32 %v421, %v517
  %v519 = vpop.f32.mrb[0].mxu0
  %520 = vmatprep.mubr.bf16.mxu0 0
  %521 = vmatmul.mubr.bf16.gmra.mrb[0].mxu0 %v338
  %v522 = vpop.f32.mrb[0].mxu0
  %v523 = vadd.f32 %v426, %v522
  %v524 = vpop.f32.mrb[0].mxu0
  %v525 = vpop.f32.mrb[0].mxu0
  %v526 = vadd.f32 %v429, %v525
  %v527 = vpop.f32.mrb[0].mxu0
  %528 = vmatprep.mubr.bf16.mxu0 0
  %529 = vmatmul.mubr.bf16.gmra.mrb[0].mxu0 %v341
  %v530 = vpop.f32.mrb[0].mxu0
  %v531 = vadd.f32 %v434, %v530
  %v532 = vpop.f32.mrb[0].mxu0
  %v533 = vpop.f32.mrb[0].mxu0
  %v534 = vadd.f32 %v437, %v533
  %v535 = vpop.f32.mrb[0].mxu0
  %536 = vdwg.mxu0
  %v537 = vmax.f32 %v475, 0.0
  %v538 = vmax.f32 %v478, 0.0
  %v539 = vmax.f32 %v483, 0.0
  %v540 = vmax.f32 %v486, 0.0
  %v541 = vmax.f32 %v491, 0.0
  %v542 = vmax.f32 %v494, 0.0
  %v543 = vmax.f32 %v499, 0.0
  %v544 = vmax.f32 %v502, 0.0
  %v545 = vmax.f32 %v507, 0.0
  %v546 = vmax.f32 %v510, 0.0
  %v547 = vmax.f32 %v515, 0.0
  %v548 = vmax.f32 %v518, 0.0
  %v549 = vmax.f32 %v523, 0.0
  %v550 = vmax.f32 %v526, 0.0
  %v551 = vmax.f32 %v531, 0.0
  %v552 = vmax.f32 %v534, 0.0
  %v553 = vpack.c.bf16 %v538, %v537
  %v554 = vpack.c.bf16 %v540, %v539
  %v555 = vpack.c.bf16 %v542, %v541
  %v556 = vpack.c.bf16 %v544, %v543
  %v557 = vpack.c.bf16 %v546, %v545
  %v558 = vpack.c.bf16 %v548, %v547
  %v559 = vpack.c.bf16 %v550, %v549
  %v560 = vpack.c.bf16 %v552, %v551
  %v569 = vunpack.c.l.b16 %v553
  %v570 = vunpack.c.h.b16 %v553
  %v571 = vunpack.c.l.b16 %v554
  %v572 = vunpack.c.h.b16 %v554
  %v573 = vunpack.c.l.b16 %v555
  %v574 = vunpack.c.h.b16 %v555
  %v575 = vunpack.c.l.b16 %v556
  %v576 = vunpack.c.h.b16 %v556
  %v577 = vunpack.c.l.b16 %v557
  %v578 = vunpack.c.h.b16 %v557
  %v579 = vunpack.c.l.b16 %v558
  %v580 = vunpack.c.h.b16 %v558
  %v581 = vunpack.c.l.b16 %v559
  %v582 = vunpack.c.h.b16 %v559
  %v583 = vunpack.c.l.b16 %v560
  %v584 = vunpack.c.h.b16 %v560
  %v585 = vpack.c.b16 %v569, %v569
  %v586 = vpack.c.b16 %v570, %v570
  %v587 = vpack.c.b16 %v571, %v571
  %v588 = vpack.c.b16 %v572, %v572
  %v589 = vpack.c.b16 %v573, %v573
  %v590 = vpack.c.b16 %v574, %v574
  %v591 = vpack.c.b16 %v575, %v575
  %v592 = vpack.c.b16 %v576, %v576
  %v593 = vpack.c.b16 %v577, %v577
  %v594 = vpack.c.b16 %v578, %v578
  %v595 = vpack.c.b16 %v579, %v579
  %v596 = vpack.c.b16 %v580, %v580
  %v597 = vpack.c.b16 %v581, %v581
  %v598 = vpack.c.b16 %v582, %v582
  %v599 = vpack.c.b16 %v583, %v583
  %v600 = vpack.c.b16 %v584, %v584
  %vm617 = vcmask 257024
  %618 = vst.msk [vmem:[%s3] sm:$0xf] %vm617, %v585
  %619 = vst.msk [vmem:[%s3 + $0x4] sm:$0xf] %vm617, %v586
  %620 = vst.msk [vmem:[%s3 + $0x8] sm:$0xf] %vm617, %v587
  %621 = vst.msk [vmem:[%s3 + $0xc] sm:$0xf] %vm617, %v588
  %622 = vst.msk [vmem:[%s3 + $0x10] sm:$0xf] %vm617, %v589
  %623 = vst.msk [vmem:[%s3 + $0x14] sm:$0xf] %vm617, %v590
  %624 = vst.msk [vmem:[%s3 + $0x18] sm:$0xf] %vm617, %v591
  %625 = vst.msk [vmem:[%s3 + $0x1c] sm:$0xf] %vm617, %v592
  %626 = vst.msk [vmem:[%s3 + $0x20] sm:$0xf] %vm617, %v593
  %627 = vst.msk [vmem:[%s3 + $0x24] sm:$0xf] %vm617, %v594
  %628 = vst.msk [vmem:[%s3 + $0x28] sm:$0xf] %vm617, %v595
  %629 = vst.msk [vmem:[%s3 + $0x2c] sm:$0xf] %vm617, %v596
  %630 = vst.msk [vmem:[%s3 + $0x30] sm:$0xf] %vm617, %v597
  %631 = vst.msk [vmem:[%s3 + $0x34] sm:$0xf] %vm617, %v598
  %632 = vst.msk [vmem:[%s3 + $0x38] sm:$0xf] %vm617, %v599
  %633 = vst.msk [vmem:[%s3 + $0x3c] sm:$0xf] %vm617, %v600
  // Predicated region
  $region14: #{encoder_forward.12} parent=0 // pred_check
    _
  $region15: #{encoder_forward.12} parent=0 // pred_check_branch
    %635 = sbr.rel (0) target = $region17
  $region16: #{encoder_forward.12} parent=0 // pred_region
    _
  $region17: #{encoder_forward.12} parent=0 // pred_fallthru
    _
  // Predicated region
  $region18: #{encoder_forward.12} parent=0 // pred_check
    _
  $region19: #{encoder_forward.12} parent=0 // pred_check_branch
    %637 = sbr.rel (0) target = $region21
  $region20: #{encoder_forward.12} parent=0 // pred_region
    _
  $region21: #{encoder_forward.12} parent=0 // pred_fallthru
    _

// kernel: encoder_forward.13
$region0: #{encoder_forward.13}
  #allocation0 [shape = 'u32[]', space=smem, size = 0x4, offset = 0x4, fixed_abs, tag = 'smem constant byte address 0x4 - core index']
  #allocation1 [shape = 'u32[144,128]{1,0:T(1,128)}', space=vmem, size = 0x12000, scoped, tag = 'internal scratch']
  %s0 = inlined_call_operand.vmem [shape: bf16[32,128], index: 0, kind: input, shape index: {}]
  %s1 = inlined_call_operand.vmem [shape: bf16[128,32], index: 1, kind: input, shape index: {}]
  %s2 = inlined_call_operand.vmem [shape: f32[1,32], index: 2, kind: input, shape index: {}]
  %s3 = inlined_call_operand.vmem [shape: f32[32,32], index: 3, kind: output, shape index: {}]
  %s4 = sld [smem:[#allocation0]]
  $region22: #{encoder_forward.13} parent=0
    _
  %s6 = ssub.s32 1, %s4
  %s7 = scalar_select 0, %s6, %s4
  // Predicated region
  $region2: #{encoder_forward.13} parent=0 // pred_check
    _
  $region3: #{encoder_forward.13} parent=0 // pred_check_branch
    %9 = sbr.rel (0) target = $region5
  $region4: #{encoder_forward.13} parent=0 // pred_region
    _
  $region5: #{encoder_forward.13} parent=0 // pred_fallthru
    _
  // Predicated region
  $region6: #{encoder_forward.13} parent=0 // pred_check
    _
  $region7: #{encoder_forward.13} parent=0 // pred_check_branch
    %11 = sbr.rel (0) target = $region9
  $region8: #{encoder_forward.13} parent=0 // pred_region
    _
  $region9: #{encoder_forward.13} parent=0 // pred_fallthru
    _
  // Predicated region
  $region10: #{encoder_forward.13} parent=0 // pred_check
    _
  $region11: #{encoder_forward.13} parent=0 // pred_check_branch
    %13 = sbr.rel (0) target = $region13
  $region12: #{encoder_forward.13} parent=0 // pred_region
    _
  $region13: #{encoder_forward.13} parent=0 // pred_fallthru
    _
  %v15 = vld [vmem:[%s0] sm:$0xf]
  %v16 = vld [vmem:[%s0 + $0x4] sm:$0xf]
  %v17 = vld [vmem:[%s0 + $0x8] sm:$0xf]
  %v18 = vld [vmem:[%s0 + $0xc] sm:$0xf]
  %v19 = vld [vmem:[%s1] sm:$0xf]
  %v20 = vld [vmem:[%s1 + $0x4] sm:$0xf]
  %v21 = vld [vmem:[%s1 + $0x8] sm:$0xf]
  %v22 = vld [vmem:[%s1 + $0xc] sm:$0xf]
  %v23 = vld [vmem:[%s1 + $0x10] sm:$0xf]
  %v24 = vld [vmem:[%s1 + $0x14] sm:$0xf]
  %v25 = vld [vmem:[%s1 + $0x18] sm:$0xf]
  %v26 = vld [vmem:[%s1 + $0x1c] sm:$0xf]
  %v27 = vld [vmem:[%s1 + $0x20] sm:$0xf]
  %v28 = vld [vmem:[%s1 + $0x24] sm:$0xf]
  %v29 = vld [vmem:[%s1 + $0x28] sm:$0xf]
  %v30 = vld [vmem:[%s1 + $0x2c] sm:$0xf]
  %v31 = vld [vmem:[%s1 + $0x30] sm:$0xf]
  %v32 = vld [vmem:[%s1 + $0x34] sm:$0xf]
  %v33 = vld [vmem:[%s1 + $0x38] sm:$0xf]
  %v34 = vld [vmem:[%s1 + $0x3c] sm:$0xf]
  %v35 = vld [vmem:[%s2] sm:$0x1]
  %v37 = vlaneseq
  %v38 = vshrl.u32 %v37, 7
  %v39 = vsub.s32 0, %v38
  %v40 = vrot.slane %v35, %v39
  %v46 = vunpack.c.l.b16 %v15
  %v47 = vunpack.c.l.b16 %v16
  %v48 = vunpack.c.l.b16 %v17
  %v49 = vunpack.c.l.b16 %v18
  %v50 = vpack.c.b16 %v47, %v46
  %v51 = vpack.c.b16 %v49, %v48
  %v70 = vunpack.c.l.b16 %v19
  %v71 = vunpack.c.l.b16 %v20
  %v72 = vunpack.c.l.b16 %v21
  %v73 = vunpack.c.l.b16 %v22
  %v74 = vunpack.c.l.b16 %v23
  %v75 = vunpack.c.l.b16 %v24
  %v76 = vunpack.c.l.b16 %v25
  %v77 = vunpack.c.l.b16 %v26
  %v78 = vunpack.c.l.b16 %v27
  %v79 = vunpack.c.l.b16 %v28
  %v80 = vunpack.c.l.b16 %v29
  %v81 = vunpack.c.l.b16 %v30
  %v82 = vunpack.c.l.b16 %v31
  %v83 = vunpack.c.l.b16 %v32
  %v84 = vunpack.c.l.b16 %v33
  %v85 = vunpack.c.l.b16 %v34
  %v86 = vpack.c.b16 %v71, %v70
  %v87 = vpack.c.b16 %v73, %v72
  %v88 = vpack.c.b16 %v75, %v74
  %v89 = vpack.c.b16 %v77, %v76
  %v90 = vpack.c.b16 %v79, %v78
  %v91 = vpack.c.b16 %v81, %v80
  %v92 = vpack.c.b16 %v83, %v82
  %v93 = vpack.c.b16 %v85, %v84
  %102 = vmatprep.subr.bf16.mxu0 0
  %103 = vmatpush1.bf16.msra.mxu0 %v86
  %104 = vmatprep.subr.bf16.mxu0 0
  %105 = vmatpush1.bf16.msra.mxu0 %v87
  %106 = vmatprep.subr.bf16.mxu0 0
  %107 = vmatpush1.bf16.msra.mxu0 %v88
  %108 = vmatprep.subr.bf16.mxu0 0
  %109 = vmatpush1.bf16.msra.mxu0 %v89
  %110 = vmatprep.subr.bf16.mxu0 0
  %111 = vmatpush1.bf16.msra.mxu0 %v90
  %112 = vmatprep.subr.bf16.mxu0 0
  %113 = vmatpush1.bf16.msra.mxu0 %v91
  %114 = vmatprep.subr.bf16.mxu0 0
  %115 = vmatpush1.bf16.msra.mxu0 %v92
  %116 = vmatprep.subr.bf16.mxu0 0
  %117 = vmatpush1.bf16.msra.mxu0 %v93
  %118 = vmatprep.subr.bf16.mxu0 0
  %119 = vmatpush1.bf16.msra.mxu0 0
  %120 = vmatprep.subr.bf16.mxu0 0
  %121 = vmatpush1.bf16.msra.mxu0 0
  %122 = vmatprep.subr.bf16.mxu0 0
  %123 = vmatpush1.bf16.msra.mxu0 0
  %124 = vmatprep.subr.bf16.mxu0 0
  %125 = vmatpush1.bf16.msra.mxu0 0
  %126 = vmatprep.subr.bf16.mxu0 0
  %127 = vmatpush1.bf16.msra.mxu0 0
  %128 = vmatprep.subr.bf16.mxu0 0
  %129 = vmatpush1.bf16.msra.mxu0 0
  %130 = vmatprep.subr.bf16.mxu0 0
  %131 = vmatpush1.bf16.msra.mxu0 0
  %132 = vmatprep.subr.bf16.mxu0 0
  %133 = vmatpush1.bf16.msra.mxu0 0
  %134 = vmatprep.mubr.bf16.mxu0 0
  %135 = vmatmul.mubr.bf16.gmra.mrb[0].mxu0 %v50
  %v136 = vpop.f32.mrb[0].mxu0
  %v137 = vadd.f32 %v40, %v136
  %v138 = vpop.f32.mrb[0].mxu0
  %v139 = vpop.f32.mrb[0].mxu0
  %v140 = vadd.f32 %v40, %v139
  %v141 = vpop.f32.mrb[0].mxu0
  %142 = vmatprep.mubr.bf16.mxu0 0
  %143 = vmatmul.mubr.bf16.gmra.mrb[0].mxu0 %v51
  %v144 = vpop.f32.mrb[0].mxu0
  %v145 = vadd.f32 %v40, %v144
  %v146 = vpop.f32.mrb[0].mxu0
  %v147 = vpop.f32.mrb[0].mxu0
  %v148 = vadd.f32 %v40, %v147
  %v149 = vpop.f32.mrb[0].mxu0
  %150 = vdwg.mxu0
  %vm151 = vcmask 261120
  %152 = vst.msk [vmem:[%s3] sm:$0xff] %vm151, %v137
  %153 = vst.msk [vmem:[%s3 + $0x8] sm:$0xff] %vm151, %v140
  %154 = vst.msk [vmem:[%s3 + $0x10] sm:$0xff] %vm151, %v145
  %155 = vst.msk [vmem:[%s3 + $0x18] sm:$0xff] %vm151, %v148
  // Predicated region
  $region14: #{encoder_forward.13} parent=0 // pred_check
    _
  $region15: #{encoder_forward.13} parent=0 // pred_check_branch
    %157 = sbr.rel (0) target = $region17
  $region16: #{encoder_forward.13} parent=0 // pred_region
    _
  $region17: #{encoder_forward.13} parent=0 // pred_fallthru
    _
  // Predicated region
  $region18: #{encoder_forward.13} parent=0 // pred_check
    _
  $region19: #{encoder_forward.13} parent=0 // pred_check_branch
    %159 = sbr.rel (0) target = $region21
  $region20: #{encoder_forward.13} parent=0 // pred_region
    _
  $region21: #{encoder_forward.13} parent=0 // pred_fallthru
    _

// kernel: encoder_forward.15
$region0: #{encoder_forward.15}
  #allocation0 [shape = 'u32[]', space=smem, size = 0x4, offset = 0x4, fixed_abs, tag = 'smem constant byte address 0x4 - core index']
  #allocation1 [shape = 'u32[144,128]{1,0:T(1,128)}', space=vmem, size = 0x12000, scoped, tag = 'internal scratch']
  %s0 = inlined_call_operand.vmem [shape: f32[32,32], index: 0, kind: input, shape index: {}]
  %s1 = inlined_call_operand.vmem [shape: f32[1,32], index: 1, kind: input, shape index: {}]
  %s2 = inlined_call_operand.vmem [shape: f32[1,32], index: 2, kind: input, shape index: {}]
  %s3 = inlined_call_operand.vmem [shape: bf16[32,96], index: 3, kind: input, shape index: {}]
  %s4 = inlined_call_operand.vmem [shape: bf16[32,96], index: 4, kind: output, shape index: {}]
  %s5 = sld [smem:[#allocation0]]
  $region26: #{encoder_forward.15} parent=0
    _
  %s7 = ssub.s32 1, %s5
  %s8 = scalar_select 0, %s7, %s5
  // Predicated region
  $region2: #{encoder_forward.15} parent=0 // pred_check
    _
  $region3: #{encoder_forward.15} parent=0 // pred_check_branch
    %10 = sbr.rel (0) target = $region5
  $region4: #{encoder_forward.15} parent=0 // pred_region
    _
  $region5: #{encoder_forward.15} parent=0 // pred_fallthru
    _
  // Predicated region
  $region6: #{encoder_forward.15} parent=0 // pred_check
    _
  $region7: #{encoder_forward.15} parent=0 // pred_check_branch
    %12 = sbr.rel (0) target = $region9
  $region8: #{encoder_forward.15} parent=0 // pred_region
    _
  $region9: #{encoder_forward.15} parent=0 // pred_fallthru
    _
  // Predicated region
  $region10: #{encoder_forward.15} parent=0 // pred_check
    _
  $region11: #{encoder_forward.15} parent=0 // pred_check_branch
    %14 = sbr.rel (0) target = $region13
  $region12: #{encoder_forward.15} parent=0 // pred_region
    _
  $region13: #{encoder_forward.15} parent=0 // pred_fallthru
    _
  // Predicated region
  $region14: #{encoder_forward.15} parent=0 // pred_check
    _
  $region15: #{encoder_forward.15} parent=0 // pred_check_branch
    %16 = sbr.rel (0) target = $region17
  $region16: #{encoder_forward.15} parent=0 // pred_region
    _
  $region17: #{encoder_forward.15} parent=0 // pred_fallthru
    _
  %v18 = vld [vmem:[%s0] sm:$0xff]
  %v19 = vld [vmem:[%s0 + $0x8] sm:$0xff]
  %v20 = vld [vmem:[%s0 + $0x10] sm:$0xff]
  %v21 = vld [vmem:[%s0 + $0x18] sm:$0xff]
  %vm22 = vcmask 261120
  %v23 = vsel %vm22, %v18, 0.0
  %24 = vadd.xlane.f32.xlu0 %v23
  %v25 = vpop.xlane.xlu0 %24
  %v26 = vsel %vm22, %v19, 0.0
  %27 = vadd.xlane.f32.xlu0 %v26
  %v28 = vpop.xlane.xlu0 %27
  %v29 = vsel %vm22, %v20, 0.0
  %30 = vadd.xlane.f32.xlu0 %v29
  %v31 = vpop.xlane.xlu0 %30
  %v32 = vsel %vm22, %v21, 0.0
  %33 = vadd.xlane.f32.xlu0 %v32
  %v34 = vpop.xlane.xlu0 %33
  %v35 = vrcp.pop 32.0
  %v36 = vmul.f32 %v25, %v35
  %v37 = vmul.f32 %v28, %v35
  %v38 = vmul.f32 %v31, %v35
  %v39 = vmul.f32 %v34, %v35
  %v40 = vsub.f32 %v18, %v36
  %v41 = vsub.f32 %v19, %v37
  %v42 = vsub.f32 %v20, %v38
  %v43 = vsub.f32 %v21, %v39
  %v44 = vmul.f32 %v40, %v40
  %v45 = vmul.f32 %v41, %v41
  %v46 = vmul.f32 %v42, %v42
  %v47 = vmul.f32 %v43, %v43
  %v48 = vsel %vm22, %v44, 0.0
  %49 = vadd.xlane.f32.xlu0 %v48
  %v50 = vpop.xlane.xlu0 %49
  %v51 = vsel %vm22, %v45, 0.0
  %52 = vadd.xlane.f32.xlu0 %v51
  %v53 = vpop.xlane.xlu0 %52
  %v54 = vsel %vm22, %v46, 0.0
  %55 = vadd.xlane.f32.xlu0 %v54
  %v56 = vpop.xlane.xlu0 %55
  %v57 = vsel %vm22, %v47, 0.0
  %58 = vadd.xlane.f32.xlu0 %v57
  %v59 = vpop.xlane.xlu0 %58
  %v60 = vmul.f32 %v50, %v35
  %v61 = vmul.f32 %v53, %v35
  %v62 = vmul.f32 %v56, %v35
  %v63 = vmul.f32 %v59, %v35
  %v64 = vadd.f32 %v60, 1e-05
  %v65 = vadd.f32 %v61, 1e-05
  %v66 = vadd.f32 %v62, 1e-05
  %v67 = vadd.f32 %v63, 1e-05
  %v68 = vrsqrt.pop %v64
  %v69 = vrsqrt.pop %v65
  %v70 = vrsqrt.pop %v66
  %v71 = vrsqrt.pop %v67
  %v72 = vmul.f32 %v40, %v68
  %v73 = vmul.f32 %v41, %v69
  %v74 = vmul.f32 %v42, %v70
  %v75 = vmul.f32 %v43, %v71
  %v76 = vld [vmem:[%s1] sm:$0x1]
  %v78 = vlaneseq
  %v79 = vshrl.u32 %v78, 7
  %v80 = vsub.s32 0, %v79
  %v81 = vrot.slane %v76, %v80
  %v83 = vmul.f32 %v72, %v81
  %v84 = vmul.f32 %v73, %v81
  %v85 = vmul.f32 %v74, %v81
  %v86 = vmul.f32 %v75, %v81
  %v87 = vld [vmem:[%s2] sm:$0x1]
  %v89 = vlaneseq
  %v90 = vshrl.u32 %v89, 7
  %v91 = vsub.s32 0, %v90
  %v92 = vrot.slane %v87, %v91
  %v94 = vadd.f32 %v83, %v92
  %v95 = vadd.f32 %v84, %v92
  %v96 = vadd.f32 %v85, %v92
  %v97 = vadd.f32 %v86, %v92
  %v98 = vpack.c.bf16 %v95, %v94
  %v99 = vpack.c.bf16 %v97, %v96
  %v100 = vld [vmem:[%s3] sm:$0xf]
  %v101 = vld [vmem:[%s3 + $0x4] sm:$0xf]
  %v102 = vld [vmem:[%s3 + $0x8] sm:$0xf]
  %v103 = vld [vmem:[%s3 + $0xc] sm:$0xf]
  %v108 = vunpack.c.l.b16 %v100
  %v109 = vunpack.c.l.b16 %v101
  %v110 = vunpack.c.l.b16 %v102
  %v111 = vunpack.c.l.b16 %v103
  %v112 = vpack.c.b16 %v109, %v108
  %v113 = vpack.c.b16 %v111, %v110
  %v117 = vsel %vm22, %v98, 0
  %v120 = vsel %vm22, %v99, 0
  %122 = vmatprep.subr.bf16.mxu0 0
  %123 = vmatpush1.bf16.msra.mxu0 %v112
  %124 = vmatprep.subr.bf16.mxu0 0
  %125 = vmatpush1.bf16.msra.mxu0 %v113
  %126 = vmatprep.subr.bf16.mxu0 0
  %127 = vmatpush1.bf16.msra.mxu0 0
  %128 = vmatprep.subr.bf16.mxu0 0
  %129 = vmatpush1.bf16.msra.mxu0 0
  %130 = vmatprep.subr.bf16.mxu0 0
  %131 = vmatpush1.bf16.msra.mxu0 0
  %132 = vmatprep.subr.bf16.mxu0 0
  %133 = vmatpush1.bf16.msra.mxu0 0
  %134 = vmatprep.subr.bf16.mxu0 0
  %135 = vmatpush1.bf16.msra.mxu0 0
  %136 = vmatprep.subr.bf16.mxu0 0
  %137 = vmatpush1.bf16.msra.mxu0 0
  %138 = vmatprep.subr.bf16.mxu0 0
  %139 = vmatpush1.bf16.msra.mxu0 0
  %140 = vmatprep.subr.bf16.mxu0 0
  %141 = vmatpush1.bf16.msra.mxu0 0
  %142 = vmatprep.subr.bf16.mxu0 0
  %143 = vmatpush1.bf16.msra.mxu0 0
  %144 = vmatprep.subr.bf16.mxu0 0
  %145 = vmatpush1.bf16.msra.mxu0 0
  %146 = vmatprep.subr.bf16.mxu0 0
  %147 = vmatpush1.bf16.msra.mxu0 0
  %148 = vmatprep.subr.bf16.mxu0 0
  %149 = vmatpush1.bf16.msra.mxu0 0
  %150 = vmatprep.subr.bf16.mxu0 0
  %151 = vmatpush1.bf16.msra.mxu0 0
  %152 = vmatprep.subr.bf16.mxu0 0
  %153 = vmatpush1.bf16.msra.mxu0 0
  %154 = vmatprep.mubr.bf16.mxu0 0
  %155 = vmatmul.mubr.bf16.gmra.mrb[0].mxu0 %v117
  %v156 = vpop.f32.mrb[0].mxu0
  %v157 = vadd.f32 0.0, %v156
  %v158 = vpop.f32.mrb[0].mxu0
  %v159 = vpop.f32.mrb[0].mxu0
  %v160 = vadd.f32 0.0, %v159
  %v161 = vpop.f32.mrb[0].mxu0
  %162 = vmatprep.mubr.bf16.mxu0 0
  %163 = vmatmul.mubr.bf16.gmra.mrb[0].mxu0 %v120
  %v164 = vpop.f32.mrb[0].mxu0
  %v165 = vadd.f32 0.0, %v164
  %v166 = vpop.f32.mrb[0].mxu0
  %v167 = vpop.f32.mrb[0].mxu0
  %v168 = vadd.f32 0.0, %v167
  %v169 = vpop.f32.mrb[0].mxu0
  %170 = vdwg.mxu0
  %v171 = vpack.c.bf16 %v160, %v157
  %v172 = vpack.c.bf16 %v168, %v165
  %v175 = vunpack.c.l.b16 %v171
  %v176 = vunpack.c.h.b16 %v171
  %v177 = vunpack.c.l.b16 %v172
  %v178 = vunpack.c.h.b16 %v172
  %v179 = vpack.c.b16 %v175, %v175
  %v180 = vpack.c.b16 %v176, %v176
  %v181 = vpack.c.b16 %v177, %v177
  %v182 = vpack.c.b16 %v178, %v178
  %vm187 = vcmask 781312
  %188 = vst.msk [vmem:[%s4] sm:$0xf] %vm187, %v179
  %189 = vst.msk [vmem:[%s4 + $0x4] sm:$0xf] %vm187, %v180
  %190 = vst.msk [vmem:[%s4 + $0x8] sm:$0xf] %vm187, %v181
  %191 = vst.msk [vmem:[%s4 + $0xc] sm:$0xf] %vm187, %v182
  // Predicated region
  $region18: #{encoder_forward.15} parent=0 // pred_check
    _
  $region19: #{encoder_forward.15} parent=0 // pred_check_branch
    %193 = sbr.rel (0) target = $region21
  $region20: #{encoder_forward.15} parent=0 // pred_region
    _
  $region21: #{encoder_forward.15} parent=0 // pred_fallthru
    _
  // Predicated region
  $region22: #{encoder_forward.15} parent=0 // pred_check
    _
  $region23: #{encoder_forward.15} parent=0 // pred_check_branch
    %195 = sbr.rel (0) target = $region25
  $region24: #{encoder_forward.15} parent=0 // pred_region
    _
  $region25: #{encoder_forward.15} parent=0 // pred_fallthru
    _

// kernel: encoder_forward.14
$region0: #{encoder_forward.14}
  #allocation0 [shape = 'u32[]', space=smem, size = 0x4, offset = 0x4, fixed_abs, tag = 'smem constant byte address 0x4 - core index']
  #allocation1 [shape = 'u32[144,128]{1,0:T(1,128)}', space=vmem, size = 0x12000, scoped, tag = 'internal scratch']
  %s0 = inlined_call_operand.vmem [shape: f32[8,32], index: 0, kind: input, shape index: {}]
  %s1 = inlined_call_operand.vmem [shape: bf16[32,64], index: 1, kind: input, shape index: {}]
  %s2 = inlined_call_operand.vmem [shape: f32[1,64], index: 2, kind: input, shape index: {}]
  %s3 = inlined_call_operand.vmem [shape: f32[8,64], index: 3, kind: output, shape index: {}]
  %s4 = sld [smem:[#allocation0]]
  $region22: #{encoder_forward.14} parent=0
    _
  %s6 = ssub.s32 1, %s4
  %s7 = scalar_select 0, %s6, %s4
  // Predicated region
  $region2: #{encoder_forward.14} parent=0 // pred_check
    _
  $region3: #{encoder_forward.14} parent=0 // pred_check_branch
    %9 = sbr.rel (0) target = $region5
  $region4: #{encoder_forward.14} parent=0 // pred_region
    _
  $region5: #{encoder_forward.14} parent=0 // pred_fallthru
    _
  // Predicated region
  $region6: #{encoder_forward.14} parent=0 // pred_check
    _
  $region7: #{encoder_forward.14} parent=0 // pred_check_branch
    %11 = sbr.rel (0) target = $region9
  $region8: #{encoder_forward.14} parent=0 // pred_region
    _
  $region9: #{encoder_forward.14} parent=0 // pred_fallthru
    _
  // Predicated region
  $region10: #{encoder_forward.14} parent=0 // pred_check
    _
  $region11: #{encoder_forward.14} parent=0 // pred_check_branch
    %13 = sbr.rel (0) target = $region13
  $region12: #{encoder_forward.14} parent=0 // pred_region
    _
  $region13: #{encoder_forward.14} parent=0 // pred_fallthru
    _
  %v15 = vld [vmem:[%s0] sm:$0xff]
  %v16 = vld [vmem:[%s1] sm:$0xf]
  %v17 = vld [vmem:[%s1 + $0x4] sm:$0xf]
  %v18 = vld [vmem:[%s1 + $0x8] sm:$0xf]
  %v19 = vld [vmem:[%s1 + $0xc] sm:$0xf]
  %v20 = vpack.c.bf16 %v15, %v15
  %v21 = vld [vmem:[%s2] sm:$0x1]
  %v23 = vlaneseq
  %v24 = vshrl.u32 %v23, 7
  %v25 = vsub.s32 0, %v24
  %v26 = vrot.slane %v21, %v25
  %v32 = vunpack.c.l.b16 %v16
  %v33 = vunpack.c.l.b16 %v17
  %v34 = vunpack.c.l.b16 %v18
  %v35 = vunpack.c.l.b16 %v19
  %v36 = vpack.c.b16 %v33, %v32
  %v37 = vpack.c.b16 %v35, %v34
  %vm40 = vcmask 261120
  %v42 = vsel %vm40, %v20, 0
  %44 = vmatprep.subr.bf16.mxu0 0
  %45 = vmatpush1.bf16.msra.mxu0 %v36
  %46 = vmatprep.subr.bf16.mxu0 0
  %47 = vmatpush1.bf16.msra.mxu0 %v37
  %48 = vmatprep.subr.bf16.mxu0 0
  %49 = vmatpush1.bf16.msra.mxu0 0
  %50 = vmatprep.subr.bf16.mxu0 0
  %51 = vmatpush1.bf16.msra.mxu0 0
  %52 = vmatprep.subr.bf16.mxu0 0
  %53 = vmatpush1.bf16.msra.mxu0 0
  %54 = vmatprep.subr.bf16.mxu0 0
  %55 = vmatpush1.bf16.msra.mxu0 0
  %56 = vmatprep.subr.bf16.mxu0 0
  %57 = vmatpush1.bf16.msra.mxu0 0
  %58 = vmatprep.subr.bf16.mxu0 0
  %59 = vmatpush1.bf16.msra.mxu0 0
  %60 = vmatprep.subr.bf16.mxu0 0
  %61 = vmatpush1.bf16.msra.mxu0 0
  %62 = vmatprep.subr.bf16.mxu0 0
  %63 = vmatpush1.bf16.msra.mxu0 0
  %64 = vmatprep.subr.bf16.mxu0 0
  %65 = vmatpush1.bf16.msra.mxu0 0
  %66 = vmatprep.subr.bf16.mxu0 0
  %67 = vmatpush1.bf16.msra.mxu0 0
  %68 = vmatprep.subr.bf16.mxu0 0
  %69 = vmatpush1.bf16.msra.mxu0 0
  %70 = vmatprep.subr.bf16.mxu0 0
  %71 = vmatpush1.bf16.msra.mxu0 0
  %72 = vmatprep.subr.bf16.mxu0 0
  %73 = vmatpush1.bf16.msra.mxu0 0
  %74 = vmatprep.subr.bf16.mxu0 0
  %75 = vmatpush1.bf16.msra.mxu0 0
  %76 = vmatprep.mubr.bf16.mxu0 0
  %77 = vmatmul.mubr.bf16.gmra.mrb[0].mxu0 %v42
  %v78 = vpop.f32.mrb[0].mxu0
  %v79 = vadd.f32 %v26, %v78
  %v80 = vpop.f32.mrb[0].mxu0
  %v81 = vpop.f32.mrb[0].mxu0
  %v82 = vpop.f32.mrb[0].mxu0
  %83 = vdwg.mxu0
  %vm84 = vcmask 523264
  %85 = vst.msk [vmem:[%s3] sm:$0xff] %vm84, %v79
  // Predicated region
  $region14: #{encoder_forward.14} parent=0 // pred_check
    _
  $region15: #{encoder_forward.14} parent=0 // pred_check_branch
    %87 = sbr.rel (0) target = $region17
  $region16: #{encoder_forward.14} parent=0 // pred_region
    _
  $region17: #{encoder_forward.14} parent=0 // pred_fallthru
    _
  // Predicated region
  $region18: #{encoder_forward.14} parent=0 // pred_check
    _
  $region19: #{encoder_forward.14} parent=0 // pred_check_branch
    %89 = sbr.rel (0) target = $region21
  $region20: #{encoder_forward.14} parent=0 // pred_region
    _
  $region21: #{encoder_forward.14} parent=0 // pred_fallthru
    _

// kernel: encoder_forward.21
$region0: #{encoder_forward.21}
  #allocation0 [shape = 'u32[]', space=smem, size = 0x4, offset = 0x4, fixed_abs, tag = 'smem constant byte address 0x4 - core index']
  #allocation1 [shape = 'u32[144,128]{1,0:T(1,128)}', space=vmem, size = 0x12000, scoped, tag = 'internal scratch']
  %s0 = inlined_call_operand.vmem [shape: f32[32,32], index: 0, kind: input, shape index: {}]
  %s1 = inlined_call_operand.vmem [shape: f32[1,32], index: 1, kind: input, shape index: {}]
  %s2 = inlined_call_operand.vmem [shape: f32[1,32], index: 2, kind: input, shape index: {}]
  %s3 = inlined_call_operand.hbm [shape: f32[32,32], index: 3, kind: output, shape index: {}]
  %s4 = sld [smem:[#allocation0]]
  $region22: #{encoder_forward.21} parent=0
    _
  %s6 = ssub.s32 1, %s4
  %s7 = scalar_select 0, %s6, %s4
  $region1: #{encoder_forward.21} parent=0
    #allocation2 [shape = 'u8[16384]{0}', space=vmem, size = 0x4000, scoped, tag = 'output window, operand 0, single buffered']
    #allocation3 [shape = 's32[1]{0}', space=sflag, size = 0x4, scoped, tag = 'scoped memory for encoder_forward.21']
    %8 = vsyncpa [#allocation3], 0
    // Predicated region
    $region2: #{encoder_forward.21} parent=1 // pred_check
      _
    $region3: #{encoder_forward.21} parent=1 // pred_check_branch
      %10 = sbr.rel (0) target = $region5
    $region4: #{encoder_forward.21} parent=1 // pred_region
      _
    $region5: #{encoder_forward.21} parent=1 // pred_fallthru
      _
    // Predicated region
    $region6: #{encoder_forward.21} parent=1 // pred_check
      _
    $region7: #{encoder_forward.21} parent=1 // pred_check_branch
      %12 = sbr.rel (0) target = $region9
    $region8: #{encoder_forward.21} parent=1 // pred_region
      _
    $region9: #{encoder_forward.21} parent=1 // pred_fallthru
      _
    // Predicated region
    $region10: #{encoder_forward.21} parent=1 // pred_check
      _
    $region11: #{encoder_forward.21} parent=1 // pred_check_branch
      %14 = sbr.rel (0) target = $region13
    $region12: #{encoder_forward.21} parent=1 // pred_region
      _
    $region13: #{encoder_forward.21} parent=1 // pred_fallthru
      _
    %v15 = vld [vmem:[%s0] sm:$0xff]
    %v16 = vld [vmem:[%s0 + $0x8] sm:$0xff]
    %v17 = vld [vmem:[%s0 + $0x10] sm:$0xff]
    %v18 = vld [vmem:[%s0 + $0x18] sm:$0xff]
    %vm19 = vcmask 261120
    %v20 = vsel %vm19, %v15, 0.0
    %21 = vadd.xlane.f32.xlu0 %v20
    %v22 = vpop.xlane.xlu0 %21
    %v23 = vsel %vm19, %v16, 0.0
    %24 = vadd.xlane.f32.xlu0 %v23
    %v25 = vpop.xlane.xlu0 %24
    %v26 = vsel %vm19, %v17, 0.0
    %27 = vadd.xlane.f32.xlu0 %v26
    %v28 = vpop.xlane.xlu0 %27
    %v29 = vsel %vm19, %v18, 0.0
    %30 = vadd.xlane.f32.xlu0 %v29
    %v31 = vpop.xlane.xlu0 %30
    %v32 = vrcp.pop 32.0
    %v33 = vmul.f32 %v22, %v32
    %v34 = vmul.f32 %v25, %v32
    %v35 = vmul.f32 %v28, %v32
    %v36 = vmul.f32 %v31, %v32
    %v37 = vsub.f32 %v15, %v33
    %v38 = vsub.f32 %v16, %v34
    %v39 = vsub.f32 %v17, %v35
    %v40 = vsub.f32 %v18, %v36
    %v41 = vmul.f32 %v37, %v37
    %v42 = vmul.f32 %v38, %v38
    %v43 = vmul.f32 %v39, %v39
    %v44 = vmul.f32 %v40, %v40
    %v45 = vsel %vm19, %v41, 0.0
    %46 = vadd.xlane.f32.xlu0 %v45
    %v47 = vpop.xlane.xlu0 %46
    %v48 = vsel %vm19, %v42, 0.0
    %49 = vadd.xlane.f32.xlu0 %v48
    %v50 = vpop.xlane.xlu0 %49
    %v51 = vsel %vm19, %v43, 0.0
    %52 = vadd.xlane.f32.xlu0 %v51
    %v53 = vpop.xlane.xlu0 %52
    %v54 = vsel %vm19, %v44, 0.0
    %55 = vadd.xlane.f32.xlu0 %v54
    %v56 = vpop.xlane.xlu0 %55
    %v57 = vmul.f32 %v47, %v32
    %v58 = vmul.f32 %v50, %v32
    %v59 = vmul.f32 %v53, %v32
    %v60 = vmul.f32 %v56, %v32
    %v61 = vadd.f32 %v57, 1e-12
    %v62 = vadd.f32 %v58, 1e-12
    %v63 = vadd.f32 %v59, 1e-12
    %v64 = vadd.f32 %v60, 1e-12
    %v65 = vrsqrt.pop %v61
    %v66 = vrsqrt.pop %v62
    %v67 = vrsqrt.pop %v63
    %v68 = vrsqrt.pop %v64
    %v69 = vmul.f32 %v37, %v65
    %v70 = vmul.f32 %v38, %v66
    %v71 = vmul.f32 %v39, %v67
    %v72 = vmul.f32 %v40, %v68
    %v73 = vld [vmem:[%s1] sm:$0x1]
    %v75 = vlaneseq
    %v76 = vshrl.u32 %v75, 7
    %v77 = vsub.s32 0, %v76
    %v78 = vrot.slane %v73, %v77
    %v80 = vmul.f32 %v69, %v78
    %v81 = vmul.f32 %v70, %v78
    %v82 = vmul.f32 %v71, %v78
    %v83 = vmul.f32 %v72, %v78
    %v84 = vld [vmem:[%s2] sm:$0x1]
    %v86 = vlaneseq
    %v87 = vshrl.u32 %v86, 7
    %v88 = vsub.s32 0, %v87
    %v89 = vrot.slane %v84, %v88
    %v91 = vadd.f32 %v80, %v89
    %v92 = vadd.f32 %v81, %v89
    %v93 = vadd.f32 %v82, %v89
    %v94 = vadd.f32 %v83, %v89
    %95 = vst.msk [vmem:[#allocation2] sm:$0xff] %vm19, %v91
    %96 = vst.msk [vmem:[#allocation2 + $0x8] sm:$0xff] %vm19, %v92
    %97 = vst.msk [vmem:[#allocation2 + $0x10] sm:$0xff] %vm19, %v93
    %98 = vst.msk [vmem:[#allocation2 + $0x18] sm:$0xff] %vm19, %v94
    // Predicated region
    $region14: #{encoder_forward.21} parent=1 // pred_check
      _
    $region15: #{encoder_forward.21} parent=1 // pred_check_branch
      %100 = sbr.rel (0) target = $region17
    $region16: #{encoder_forward.21} parent=1 // pred_region
      %s102 = ssub.s32 512, 512
      %103 = vsyncadd [#allocation3], %s102
      %s104 = sshll.u32 [#allocation2], 4
      %s105 = int_to_ptr.vmem [resolvable:$true] %s104
      %110 = dma.vmem_to_hbm [thread:$0]  %s105, 512, %s3, [#allocation3], 128, 128, 8
    $region17: #{encoder_forward.21} parent=1 // pred_fallthru
      _
    // Predicated region
    $region18: #{encoder_forward.21} parent=1 // pred_check
      _
    $region19: #{encoder_forward.21} parent=1 // pred_check_branch
      %112 = sbr.rel (0) target = $region21
    $region20: #{encoder_forward.21} parent=1 // pred_region
      %113 = dma.done [#allocation3], 512
    $region21: #{encoder_forward.21} parent=1 // pred_fallthru
      _
    %114 = vsyncpa [#allocation3], 1

// kernel: encoder_forward.16
$region0: #{encoder_forward.16}
  #allocation0 [shape = 'u32[]', space=smem, size = 0x4, offset = 0x4, fixed_abs, tag = 'smem constant byte address 0x4 - core index']
  #allocation1 [shape = 'u32[144,128]{1,0:T(1,128)}', space=vmem, size = 0x12000, scoped, tag = 'internal scratch']
  %s0 = inlined_call_operand.vmem [shape: bf16[4,8,96], index: 0, kind: input, shape index: {}]
  %s1 = inlined_call_operand.vmem [shape: bf16[4,4,8,8], index: 1, kind: input, shape index: {}]
  %s2 = inlined_call_operand.vmem [shape: f32[1,32], index: 2, kind: input, shape index: {}]
  %s3 = inlined_call_operand.vmem [shape: bf16[4,8,32], index: 3, kind: output, shape index: {}]
  %s4 = sld [smem:[#allocation0]]
  $region45: #{encoder_forward.16} parent=0
    _
  %s6 = ssub.s32 1, %s4
  %s7 = scalar_select 0, %s6, %s4
  loop: start=0, step=1, limit=6
  $region2: #{encoder_forward.16} parent=0 // loop_pre_header
    _
  $region3: #{encoder_forward.16} parent=0 // loop_header
    %s9 = sphi 0, %s13
    %p10 = scmp.ge.s32.totalorder %s9, 6
    %s19 = sphi 0, %s21
    %s22 = sphi 0, %s19
    %s23 = sphi 0, %s22
    %s39 = sphi 0, %s23
    %s45 = sphi 0, %s47
    %s48 = sphi 0, %s45
    %s49 = sphi 0, %s48
    %s65 = sphi 0, %s49
    %s69 = sphi 0, %s69
    %s71 = sphi 0, %s69
    %s72 = sphi 0, %s71
    %s86 = sphi 0, %s72
    %s92 = sphi 0, %s94
    %s95 = sphi 0, %s92
    %s96 = sphi 0, %s95
    %s112 = sphi 0, %s96
  $region4: #{encoder_forward.16} parent=0 // loop_header_branch
    %12 = sbr.rel (%p10) target = $region8
  $region5: #{encoder_forward.16} parent=0 // loop_body
    %s14 = ssub.s32 %s9, 1
    %s15 = ssub.s32 %s9, 2
    %s16 = sadd.s32 %s9, 1
    %s17 = ssub.s32 %s9, %s16
    %p18 = scmp.eq.s32.totalorder %s17, 0
    %s20 = sadd.s32 %s19, 1
    %s21 = scalar_select %p18, %s19, %s20
    %p24 = pneg %p18
    %p25 = scmp.eq.s32.totalorder %s9, 3
    %p26 = por %p24, %p25
    %p27 = scmp.ne.s32.totalorder %s19, %s22
    %p28 = scmp.eq.s32.totalorder %s9, 0
    %p29 = por %p27, %p28
    %p30 = scmp.ne.s32.totalorder %s19, %s22
    %p31 = scmp.eq.s32.totalorder %s14, 3
    %p32 = por %p30, %p31
    %p33 = scmp.ne.s32.totalorder %s22, %s23
    %p34 = scmp.eq.s32.totalorder %s14, 0
    %p35 = por %p33, %p34
    %p36 = scmp.ne.s32.totalorder %s22, %s23
    %p37 = scmp.eq.s32.totalorder %s15, 3
    %p38 = por %p36, %p37
    %p40 = scmp.ne.s32.totalorder %s23, %s39
    %p41 = scmp.eq.s32.totalorder %s15, 0
    %p42 = por %p40, %p41
    %s43 = ssub.s32 %s9, %s16
    %p44 = scmp.eq.s32.totalorder %s43, 0
    %s46 = sadd.s32 %s45, 1
    %s47 = scalar_select %p44, %s45, %s46
    %p50 = pneg %p44
    %p51 = scmp.eq.s32.totalorder %s9, 3
    %p52 = por %p50, %p51
    %p53 = scmp.ne.s32.totalorder %s45, %s48
    %p54 = scmp.eq.s32.totalorder %s9, 0
    %p55 = por %p53, %p54
    %p56 = scmp.ne.s32.totalorder %s45, %s48
    %p57 = scmp.eq.s32.totalorder %s14, 3
    %p58 = por %p56, %p57
    %p59 = scmp.ne.s32.totalorder %s48, %s49
    %p60 = scmp.eq.s32.totalorder %s14, 0
    %p61 = por %p59, %p60
    %p62 = scmp.ne.s32.totalorder %s48, %s49
    %p63 = scmp.eq.s32.totalorder %s15, 3
    %p64 = por %p62, %p63
    %p66 = scmp.ne.s32.totalorder %s49, %s65
    %p67 = scmp.eq.s32.totalorder %s15, 0
    %p68 = por %p66, %p67
    %s70 = sadd.s32 %s69, 1
    %p73 = scmp.eq.s32.totalorder %s9, 3
    %p74 = scmp.ne.s32.totalorder %s69, %s71
    %p75 = scmp.eq.s32.totalorder %s9, 0
    %p76 = por %p74, %p75
    %p77 = scmp.ne.s32.totalorder %s69, %s71
    %p78 = scmp.eq.s32.totalorder %s14, 3
    %p79 = por %p77, %p78
    %p80 = scmp.ne.s32.totalorder %s71, %s72
    %p81 = scmp.eq.s32.totalorder %s14, 0
    %p82 = por %p80, %p81
    %p83 = scmp.ne.s32.totalorder %s71, %s72
    %p84 = scmp.eq.s32.totalorder %s15, 3
    %p85 = por %p83, %p84
    %p87 = scmp.ne.s32.totalorder %s72, %s86
    %p88 = scmp.eq.s32.totalorder %s15, 0
    %p89 = por %p87, %p88
    %s90 = ssub.s32 %s9, %s16
    %p91 = scmp.eq.s32.totalorder %s90, 0
    %s93 = sadd.s32 %s92, 1
    %s94 = scalar_select %p91, %s92, %s93
    %p97 = pneg %p91
    %p98 = scmp.eq.s32.totalorder %s9, 3
    %p99 = por %p97, %p98
    %p100 = scmp.ne.s32.totalorder %s92, %s95
    %p101 = scmp.eq.s32.totalorder %s9, 0
    %p102 = por %p100, %p101
    %p103 = scmp.ne.s32.totalorder %s92, %s95
    %p104 = scmp.eq.s32.totalorder %s14, 3
    %p105 = por %p103, %p104
    %p106 = scmp.ne.s32.totalorder %s95, %s96
    %p107 = scmp.eq.s32.totalorder %s14, 0
    %p108 = por %p106, %p107
    %p109 = scmp.ne.s32.totalorder %s95, %s96
    %p110 = scmp.eq.s32.totalorder %s15, 3
    %p111 = por %p109, %p110
    %p113 = scmp.ne.s32.totalorder %s96, %s112
    %p114 = scmp.eq.s32.totalorder %s15, 0
    %p115 = por %p113, %p114
    %p116 = scmp.le.s32.totalorder 1, %s9
    %p117 = scmp.lt.s32.totalorder %s9, 5
    %p118 = pnand %p116, %p117
    %p119 = pneg %p118
    // Predicated region
    $region9: #{encoder_forward.16} parent=5 // pred_check
      _
    $region10: #{encoder_forward.16} parent=5 // pred_check_branch
      %121 = sbr.rel (%p118) target = $region12
    $region11: #{encoder_forward.16} parent=5 // pred_region
      %s122 = ssub.s32 %s9, 1
      // Predicated region
      $region13: #{encoder_forward.16} parent=11 // pred_check
        %p123 = pneg %p82
      $region14: #{encoder_forward.16} parent=11 // pred_check_branch
        %125 = sbr.rel (%p123) target = $region16
      $region15: #{encoder_forward.16} parent=11 // pred_region
        _
      $region16: #{encoder_forward.16} parent=11 // pred_fallthru
        _
    $region12: #{encoder_forward.16} parent=5 // pred_fallthru
      _
    %p126 = scmp.lt.s32.totalorder %s9, 4
    // Predicated region
    $region17: #{encoder_forward.16} parent=5 // pred_check
      %p127 = pneg %p126
    $region18: #{encoder_forward.16} parent=5 // pred_check_branch
      %129 = sbr.rel (%p127) target = $region20
    $region19: #{encoder_forward.16} parent=5 // pred_region
      // Predicated region
      $region21: #{encoder_forward.16} parent=19 // pred_check
        %p130 = pneg %p29
      $region22: #{encoder_forward.16} parent=19 // pred_check_branch
        %132 = sbr.rel (%p130) target = $region24
      $region23: #{encoder_forward.16} parent=19 // pred_region
        %p133 = scmp.lt.s32.totalorder %s9, 3
        %s134 = scalar_select %p133, %s9, 3
        %s135 = smul.addr %s134, 4
        %s136 = scalar_lea.vmem %s0, %s135
      $region24: #{encoder_forward.16} parent=19 // pred_fallthru
        _
      // Predicated region
      $region25: #{encoder_forward.16} parent=19 // pred_check
        %p137 = pneg %p55
      $region26: #{encoder_forward.16} parent=19 // pred_check_branch
        %139 = sbr.rel (%p137) target = $region28
      $region27: #{encoder_forward.16} parent=19 // pred_region
        %p140 = scmp.lt.s32.totalorder %s9, 3
        %s141 = scalar_select %p140, %s9, 3
        %s142 = smul.addr %s141, 4
        %s143 = smul.addr %s142, 4
        %s144 = scalar_lea.vmem %s1, %s143
      $region28: #{encoder_forward.16} parent=19 // pred_fallthru
        _
    $region20: #{encoder_forward.16} parent=5 // pred_fallthru
      _
    %p145 = scmp.le.s32.totalorder 1, %s9
    %p146 = scmp.lt.s32.totalorder %s9, 5
    %p147 = pnand %p145, %p146
    %p148 = pneg %p147
    // Predicated region
    $region29: #{encoder_forward.16} parent=5 // pred_check
      _
    $region30: #{encoder_forward.16} parent=5 // pred_check_branch
      %150 = sbr.rel (%p147) target = $region32
    $region31: #{encoder_forward.16} parent=5 // pred_region
      %s151 = ssub.s32 %s9, 1
      %p152 = scmp.lt.s32.totalorder %s14, 3
      %s153 = scalar_select %p152, %s14, 3
      %s154 = smul.addr %s153, 4
      %s155 = scalar_lea.vmem %s0, %s154
      %p156 = pneg %p35
      %p157 = pneg %p32
      %p158 = scmp.lt.s32.totalorder %s14, 3
      %s159 = scalar_select %p158, %s14, 3
      %s160 = smul.addr %s159, 4
      %s161 = smul.addr %s160, 4
      %s162 = scalar_lea.vmem %s1, %s161
      %p163 = pneg %p61
      %p164 = pneg %p58
      %p165 = pneg %p82
      %p166 = pneg %p79
      %p167 = pneg %p108
      %p168 = pneg %p105
      %p169 = scmp.lt.s32.totalorder %s14, 3
      %s170 = scalar_select %p169, %s14, 3
      %s171 = smul.addr %s170, 4
      %s172 = scalar_lea.vmem %s3, %s171
      %p173 = scmp.lt.s32.totalorder %s14, 3
      %s174 = scalar_select %p173, %s14, 3
      %s175 = smul.addr %s174, 4
      %s176 = scalar_lea.vmem %s0, %s175
      %p177 = scmp.lt.s32.totalorder %s14, 3
      %s178 = scalar_select %p177, %s14, 3
      %s179 = smul.addr %s178, 4
      %s180 = smul.addr %s179, 4
      %s181 = scalar_lea.vmem %s1, %s180
      %p182 = scmp.lt.s32.totalorder %s14, 3
      %s183 = scalar_select %p182, %s14, 3
      %s184 = smul.addr %s183, 4
      %s185 = scalar_lea.vmem %s3, %s184
      %v187 = vld [vmem:[%s176] sm:$0xf]
      %v188 = vunpack.c.l.bf16 %v187
      %v189 = vld [vmem:[%s2] sm:$0x1]
      %v191 = vlaneseq
      %v192 = vshrl.u32 %v191, 7
      %v193 = vsub.s32 0, %v192
      %v194 = vrot.slane %v189, %v193
      %v196 = vadd.f32 %v188, %v194
      %v197 = vpack.c.bf16 %v196, %v196
      %v198 = vld [vmem:[%s181] sm:$0xf]
      %v199 = vunpack.c.l.bf16 %v198
      %v201 = vunpack.c.l.b16 %v187
      %v202 = vpack.c.b16 %v201, %v201
      %203 = vrot.lane.b32.xlu0 %v202, 96
      %v204 = vpop.permute.xlu0 %203
      %vm205 = vcmask 64512
      %v207 = vsel %vm205, %v197, 0
      %v210 = vsel %vm205, %v204, 0
      %212 = vmatprep.subr.bf16.mxu0 0
      %213 = vmatpush1.bf16.xpose.msra.mxu0 %v210
      %214 = vmatprep.subr.bf16.mxu0 0
      %215 = vmatpush1.bf16.xpose.msra.mxu0 0
      %216 = vmatprep.subr.bf16.mxu0 0
      %217 = vmatpush1.bf16.xpose.msra.mxu0 0
      %218 = vmatprep.subr.bf16.mxu0 0
      %219 = vmatpush1.bf16.xpose.msra.mxu0 0
      %220 = vmatprep.subr.bf16.mxu0 0
      %221 = vmatpush1.bf16.xpose.msra.mxu0 0
      %222 = vmatprep.subr.bf16.mxu0 0
      %223 = vmatpush1.bf16.xpose.msra.mxu0 0
      %224 = vmatprep.subr.bf16.mxu0 0
      %225 = vmatpush1.bf16.xpose.msra.mxu0 0
      %226 = vmatprep.subr.bf16.mxu0 0
      %227 = vmatpush1.bf16.xpose.msra.mxu0 0
      %228 = vmatprep.subr.bf16.mxu0 0
      %229 = vmatpush1.bf16.xpose.msra.mxu0 0
      %230 = vmatprep.subr.bf16.mxu0 0
      %231 = vmatpush1.bf16.xpose.msra.mxu0 0
      %232 = vmatprep.subr.bf16.mxu0 0
      %233 = vmatpush1.bf16.xpose.msra.mxu0 0
      %234 = vmatprep.subr.bf16.mxu0 0
      %235 = vmatpush1.bf16.xpose.msra.mxu0 0
      %236 = vmatprep.subr.bf16.mxu0 0
      %237 = vmatpush1.bf16.xpose.msra.mxu0 0
      %238 = vmatprep.subr.bf16.mxu0 0
      %239 = vmatpush1.bf16.xpose.msra.mxu0 0
      %240 = vmatprep.subr.bf16.mxu0 0
      %241 = vmatpush1.bf16.xpose.msra.mxu0 0
      %242 = vmatprep.subr.bf16.mxu0 0
      %243 = vmatpush1.bf16.xpose.msra.mxu0 0
      %244 = vmatprep.mubr.bf16.mxu0 0
      %245 = vmatmul.mubr.bf16.gmra.mrb[0].mxu0 %v207
      %v246 = vpop.f32.mrb[0].mxu0
      %v247 = vadd.f32 %v199, %v246
      %v248 = vpop.f32.mrb[0].mxu0
      %v249 = vpop.f32.mrb[0].mxu0
      %v250 = vpop.f32.mrb[0].mxu0
      %251 = vdwg.mxu0
      %v252 = vmul.f32 %v247, 0.35355338
      %v253 = vsel %vm205, %v252, -inf
      %254 = vmax.xlane.f32.xlu0 %v253
      %v255 = vpop.xlane.xlu0 %254
      %v256 = vsub.f32 %v252, %v255
      %v257 = vmul.f32 %v256, 1.442695
      %v258 = vpow.pop %v257
      %v259 = vsel %vm205, %v258, 0.0
      %260 = vadd.xlane.f32.xlu0 %v259
      %v261 = vpop.xlane.xlu0 %260
      %v262 = vrcp.pop %v261
      %v263 = vmul.f32 %v258, %v262
      %v264 = vpack.c.bf16 %v263, %v263
      %265 = vrot.lane.b32.xlu0 %v202, 64
      %v266 = vpop.permute.xlu0 %265
      %v268 = vsel %vm205, %v264, 0
      %vm270 = vcmask 1043456
      %v272 = vsel %vm270, %v266, 0
      %274 = vmatprep.subr.bf16.mxu0 0
      %275 = vmatpush1.bf16.msra.mxu0 %v272
      %276 = vmatprep.subr.bf16.mxu0 0
      %277 = vmatpush1.bf16.msra.mxu0 0
      %278 = vmatprep.subr.bf16.mxu0 0
      %279 = vmatpush1.bf16.msra.mxu0 0
      %280 = vmatprep.subr.bf16.mxu0 0
      %281 = vmatpush1.bf16.msra.mxu0 0
      %282 = vmatprep.subr.bf16.mxu0 0
      %283 = vmatpush1.bf16.msra.mxu0 0
      %284 = vmatprep.subr.bf16.mxu0 0
      %285 = vmatpush1.bf16.msra.mxu0 0
      %286 = vmatprep.subr.bf16.mxu0 0
      %287 = vmatpush1.bf16.msra.mxu0 0
      %288 = vmatprep.subr.bf16.mxu0 0
      %289 = vmatpush1.bf16.msra.mxu0 0
      %290 = vmatprep.subr.bf16.mxu0 0
      %291 = vmatpush1.bf16.msra.mxu0 0
      %292 = vmatprep.subr.bf16.mxu0 0
      %293 = vmatpush1.bf16.msra.mxu0 0
      %294 = vmatprep.subr.bf16.mxu0 0
      %295 = vmatpush1.bf16.msra.mxu0 0
      %296 = vmatprep.subr.bf16.mxu0 0
      %297 = vmatpush1.bf16.msra.mxu0 0
      %298 = vmatprep.subr.bf16.mxu0 0
      %299 = vmatpush1.bf16.msra.mxu0 0
      %300 = vmatprep.subr.bf16.mxu0 0
      %301 = vmatpush1.bf16.msra.mxu0 0
      %302 = vmatprep.subr.bf16.mxu0 0
      %303 = vmatpush1.bf16.msra.mxu0 0
      %304 = vmatprep.subr.bf16.mxu0 0
      %305 = vmatpush1.bf16.msra.mxu0 0
      %306 = vmatprep.mubr.bf16.mxu0 0
      %307 = vmatmul.mubr.bf16.gmra.mrb[0].mxu0 %v268
      %v308 = vpop.f32.mrb[0].mxu0
      %v309 = vadd.f32 0.0, %v308
      %v310 = vpop.f32.mrb[0].mxu0
      %v311 = vpop.f32.mrb[0].mxu0
      %v312 = vpop.f32.mrb[0].mxu0
      %313 = vdwg.mxu0
      %s314 = scalar_lea.vmem %s181, 4
      %v315 = vld [vmem:[%s314] sm:$0xf]
      %v316 = vunpack.c.l.bf16 %v315
      %318 = vrot.lane.b32.xlu0 %v197, 120
      %v319 = vpop.permute.xlu0 %318
      %320 = vrot.lane.b32.xlu0 %v202, 88
      %v321 = vpop.permute.xlu0 %320
      %v323 = vsel %vm205, %v319, 0
      %v326 = vsel %vm205, %v321, 0
      %328 = vmatprep.subr.bf16.mxu0 0
      %329 = vmatpush1.bf16.xpose.msra.mxu0 %v326
      %330 = vmatprep.subr.bf16.mxu0 0
      %331 = vmatpush1.bf16.xpose.msra.mxu0 0
      %332 = vmatprep.subr.bf16.mxu0 0
      %333 = vmatpush1.bf16.xpose.msra.mxu0 0
      %334 = vmatprep.subr.bf16.mxu0 0
      %335 = vmatpush1.bf16.xpose.msra.mxu0 0
      %336 = vmatprep.subr.bf16.mxu0 0
      %337 = vmatpush1.bf16.xpose.msra.mxu0 0
      %338 = vmatprep.subr.bf16.mxu0 0
      %339 = vmatpush1.bf16.xpose.msra.mxu0 0
      %340 = vmatprep.subr.bf16.mxu0 0
      %341 = vmatpush1.bf16.xpose.msra.mxu0 0
      %342 = vmatprep.subr.bf16.mxu0 0
      %343 = vmatpush1.bf16.xpose.msra.mxu0 0
      %344 = vmatprep.subr.bf16.mxu0 0
      %345 = vmatpush1.bf16.xpose.msra.mxu0 0
      %346 = vmatprep.subr.bf16.mxu0 0
      %347 = vmatpush1.bf16.xpose.msra.mxu0 0
      %348 = vmatprep.subr.bf16.mxu0 0
      %349 = vmatpush1.bf16.xpose.msra.mxu0 0
      %350 = vmatprep.subr.bf16.mxu0 0
      %351 = vmatpush1.bf16.xpose.msra.mxu0 0
      %352 = vmatprep.subr.bf16.mxu0 0
      %353 = vmatpush1.bf16.xpose.msra.mxu0 0
      %354 = vmatprep.subr.bf16.mxu0 0
      %355 = vmatpush1.bf16.xpose.msra.mxu0 0
      %356 = vmatprep.subr.bf16.mxu0 0
      %357 = vmatpush1.bf16.xpose.msra.mxu0 0
      %358 = vmatprep.subr.bf16.mxu0 0
      %359 = vmatpush1.bf16.xpose.msra.mxu0 0
      %360 = vmatprep.mubr.bf16.mxu0 0
      %361 = vmatmul.mubr.bf16.gmra.mrb[0].mxu0 %v323
      %v362 = vpop.f32.mrb[0].mxu0
      %v363 = vadd.f32 %v316, %v362
      %v364 = vpop.f32.mrb[0].mxu0
      %v365 = vpop.f32.mrb[0].mxu0
      %v366 = vpop.f32.mrb[0].mxu0
      %367 = vdwg.mxu0
      %v368 = vmul.f32 %v363, 0.35355338
      %v369 = vsel %vm205, %v368, -inf
      %370 = vmax.xlane.f32.xlu0 %v369
      %v371 = vpop.xlane.xlu0 %370
      %v372 = vsub.f32 %v368, %v371
      %v373 = vmul.f32 %v372, 1.442695
      %v374 = vpow.pop %v373
      %v375 = vsel %vm205, %v374, 0.0
      %376 = vadd.xlane.f32.xlu0 %v375
      %v377 = vpop.xlane.xlu0 %376
      %v378 = vrcp.pop %v377
      %v379 = vmul.f32 %v374, %v378
      %v380 = vpack.c.bf16 %v379, %v379
      %381 = vrot.lane.b32.xlu0 %v202, 56
      %v382 = vpop.permute.xlu0 %381
      %v384 = vsel %vm205, %v380, 0
      %v387 = vsel %vm270, %v382, 0
      %389 = vmatprep.subr.bf16.mxu0 0
      %390 = vmatpush1.bf16.msra.mxu0 %v387
      %391 = vmatprep.subr.bf16.mxu0 0
      %392 = vmatpush1.bf16.msra.mxu0 0
      %393 = vmatprep.subr.bf16.mxu0 0
      %394 = vmatpush1.bf16.msra.mxu0 0
      %395 = vmatprep.subr.bf16.mxu0 0
      %396 = vmatpush1.bf16.msra.mxu0 0
      %397 = vmatprep.subr.bf16.mxu0 0
      %398 = vmatpush1.bf16.msra.mxu0 0
      %399 = vmatprep.subr.bf16.mxu0 0
      %400 = vmatpush1.bf16.msra.mxu0 0
      %401 = vmatprep.subr.bf16.mxu0 0
      %402 = vmatpush1.bf16.msra.mxu0 0
      %403 = vmatprep.subr.bf16.mxu0 0
      %404 = vmatpush1.bf16.msra.mxu0 0
      %405 = vmatprep.subr.bf16.mxu0 0
      %406 = vmatpush1.bf16.msra.mxu0 0
      %407 = vmatprep.subr.bf16.mxu0 0
      %408 = vmatpush1.bf16.msra.mxu0 0
      %409 = vmatprep.subr.bf16.mxu0 0
      %410 = vmatpush1.bf16.msra.mxu0 0
      %411 = vmatprep.subr.bf16.mxu0 0
      %412 = vmatpush1.bf16.msra.mxu0 0
      %413 = vmatprep.subr.bf16.mxu0 0
      %414 = vmatpush1.bf16.msra.mxu0 0
      %415 = vmatprep.subr.bf16.mxu0 0
      %416 = vmatpush1.bf16.msra.mxu0 0
      %417 = vmatprep.subr.bf16.mxu0 0
      %418 = vmatpush1.bf16.msra.mxu0 0
      %419 = vmatprep.subr.bf16.mxu0 0
      %420 = vmatpush1.bf16.msra.mxu0 0
      %421 = vmatprep.mubr.bf16.mxu0 0
      %422 = vmatmul.mubr.bf16.gmra.mrb[0].mxu0 %v384
      %v423 = vpop.f32.mrb[0].mxu0
      %v424 = vadd.f32 0.0, %v423
      %v425 = vpop.f32.mrb[0].mxu0
      %v426 = vpop.f32.mrb[0].mxu0
      %v427 = vpop.f32.mrb[0].mxu0
      %428 = vdwg.mxu0
      %s429 = scalar_lea.vmem %s181, 8
      %v430 = vld [vmem:[%s429] sm:$0xf]
      %v431 = vunpack.c.l.bf16 %v430
      %432 = vrot.lane.b32.xlu0 %v197, 112
      %v433 = vpop.permute.xlu0 %432
      %434 = vrot.lane.b32.xlu0 %v202, 80
      %v435 = vpop.permute.xlu0 %434
      %v437 = vsel %vm205, %v433, 0
      %v440 = vsel %vm205, %v435, 0
      %442 = vmatprep.subr.bf16.mxu0 0
      %443 = vmatpush1.bf16.xpose.msra.mxu0 %v440
      %444 = vmatprep.subr.bf16.mxu0 0
      %445 = vmatpush1.bf16.xpose.msra.mxu0 0
      %446 = vmatprep.subr.bf16.mxu0 0
      %447 = vmatpush1.bf16.xpose.msra.mxu0 0
      %448 = vmatprep.subr.bf16.mxu0 0
      %449 = vmatpush1.bf16.xpose.msra.mxu0 0
      %450 = vmatprep.subr.bf16.mxu0 0
      %451 = vmatpush1.bf16.xpose.msra.mxu0 0
      %452 = vmatprep.subr.bf16.mxu0 0
      %453 = vmatpush1.bf16.xpose.msra.mxu0 0
      %454 = vmatprep.subr.bf16.mxu0 0
      %455 = vmatpush1.bf16.xpose.msra.mxu0 0
      %456 = vmatprep.subr.bf16.mxu0 0
      %457 = vmatpush1.bf16.xpose.msra.mxu0 0
      %458 = vmatprep.subr.bf16.mxu0 0
      %459 = vmatpush1.bf16.xpose.msra.mxu0 0
      %460 = vmatprep.subr.bf16.mxu0 0
      %461 = vmatpush1.bf16.xpose.msra.mxu0 0
      %462 = vmatprep.subr.bf16.mxu0 0
      %463 = vmatpush1.bf16.xpose.msra.mxu0 0
      %464 = vmatprep.subr.bf16.mxu0 0
      %465 = vmatpush1.bf16.xpose.msra.mxu0 0
      %466 = vmatprep.subr.bf16.mxu0 0
      %467 = vmatpush1.bf16.xpose.msra.mxu0 0
      %468 = vmatprep.subr.bf16.mxu0 0
      %469 = vmatpush1.bf16.xpose.msra.mxu0 0
      %470 = vmatprep.subr.bf16.mxu0 0
      %471 = vmatpush1.bf16.xpose.msra.mxu0 0
      %472 = vmatprep.subr.bf16.mxu0 0
      %473 = vmatpush1.bf16.xpose.msra.mxu0 0
      %474 = vmatprep.mubr.bf16.mxu0 0
      %475 = vmatmul.mubr.bf16.gmra.mrb[0].mxu0 %v437
      %v476 = vpop.f32.mrb[0].mxu0
      %v477 = vadd.f32 %v431, %v476
      %v478 = vpop.f32.mrb[0].mxu0
      %v479 = vpop.f32.mrb[0].mxu0
      %v480 = vpop.f32.mrb[0].mxu0
      %481 = vdwg.mxu0
      %v482 = vmul.f32 %v477, 0.35355338
      %v483 = vsel %vm205, %v482, -inf
      %484 = vmax.xlane.f32.xlu0 %v483
      %v485 = vpop.xlane.xlu0 %484
      %v486 = vsub.f32 %v482, %v485
      %v487 = vmul.f32 %v486, 1.442695
      %v488 = vpow.pop %v487
      %v489 = vsel %vm205, %v488, 0.0
      %490 = vadd.xlane.f32.xlu0 %v489
      %v491 = vpop.xlane.xlu0 %490
      %v492 = vrcp.pop %v491
      %v493 = vmul.f32 %v488, %v492
      %v494 = vpack.c.bf16 %v493, %v493
      %495 = vrot.lane.b32.xlu0 %v202, 48
      %v496 = vpop.permute.xlu0 %495
      %v498 = vsel %vm205, %v494, 0
      %v501 = vsel %vm270, %v496, 0
      %503 = vmatprep.subr.bf16.mxu0 0
      %504 = vmatpush1.bf16.msra.mxu0 %v501
      %505 = vmatprep.subr.bf16.mxu0 0
      %506 = vmatpush1.bf16.msra.mxu0 0
      %507 = vmatprep.subr.bf16.mxu0 0
      %508 = vmatpush1.bf16.msra.mxu0 0
      %509 = vmatprep.subr.bf16.mxu0 0
      %510 = vmatpush1.bf16.msra.mxu0 0
      %511 = vmatprep.subr.bf16.mxu0 0
      %512 = vmatpush1.bf16.msra.mxu0 0
      %513 = vmatprep.subr.bf16.mxu0 0
      %514 = vmatpush1.bf16.msra.mxu0 0
      %515 = vmatprep.subr.bf16.mxu0 0
      %516 = vmatpush1.bf16.msra.mxu0 0
      %517 = vmatprep.subr.bf16.mxu0 0
      %518 = vmatpush1.bf16.msra.mxu0 0
      %519 = vmatprep.subr.bf16.mxu0 0
      %520 = vmatpush1.bf16.msra.mxu0 0
      %521 = vmatprep.subr.bf16.mxu0 0
      %522 = vmatpush1.bf16.msra.mxu0 0
      %523 = vmatprep.subr.bf16.mxu0 0
      %524 = vmatpush1.bf16.msra.mxu0 0
      %525 = vmatprep.subr.bf16.mxu0 0
      %526 = vmatpush1.bf16.msra.mxu0 0
      %527 = vmatprep.subr.bf16.mxu0 0
      %528 = vmatpush1.bf16.msra.mxu0 0
      %529 = vmatprep.subr.bf16.mxu0 0
      %530 = vmatpush1.bf16.msra.mxu0 0
      %531 = vmatprep.subr.bf16.mxu0 0
      %532 = vmatpush1.bf16.msra.mxu0 0
      %533 = vmatprep.subr.bf16.mxu0 0
      %534 = vmatpush1.bf16.msra.mxu0 0
      %535 = vmatprep.mubr.bf16.mxu0 0
      %536 = vmatmul.mubr.bf16.gmra.mrb[0].mxu0 %v498
      %v537 = vpop.f32.mrb[0].mxu0
      %v538 = vadd.f32 0.0, %v537
      %v539 = vpop.f32.mrb[0].mxu0
      %v540 = vpop.f32.mrb[0].mxu0
      %v541 = vpop.f32.mrb[0].mxu0
      %542 = vdwg.mxu0
      %s543 = scalar_lea.vmem %s181, 12
      %v544 = vld [vmem:[%s543] sm:$0xf]
      %v545 = vunpack.c.l.bf16 %v544
      %546 = vrot.lane.b32.xlu0 %v197, 104
      %v547 = vpop.permute.xlu0 %546
      %548 = vrot.lane.b32.xlu0 %v202, 72
      %v549 = vpop.permute.xlu0 %548
      %v551 = vsel %vm205, %v547, 0
      %v554 = vsel %vm205, %v549, 0
      %556 = vmatprep.subr.bf16.mxu0 0
      %557 = vmatpush1.bf16.xpose.msra.mxu0 %v554
      %558 = vmatprep.subr.bf16.mxu0 0
      %559 = vmatpush1.bf16.xpose.msra.mxu0 0
      %560 = vmatprep.subr.bf16.mxu0 0
      %561 = vmatpush1.bf16.xpose.msra.mxu0 0
      %562 = vmatprep.subr.bf16.mxu0 0
      %563 = vmatpush1.bf16.xpose.msra.mxu0 0
      %564 = vmatprep.subr.bf16.mxu0 0
      %565 = vmatpush1.bf16.xpose.msra.mxu0 0
      %566 = vmatprep.subr.bf16.mxu0 0
      %567 = vmatpush1.bf16.xpose.msra.mxu0 0
      %568 = vmatprep.subr.bf16.mxu0 0
      %569 = vmatpush1.bf16.xpose.msra.mxu0 0
      %570 = vmatprep.subr.bf16.mxu0 0
      %571 = vmatpush1.bf16.xpose.msra.mxu0 0
      %572 = vmatprep.subr.bf16.mxu0 0
      %573 = vmatpush1.bf16.xpose.msra.mxu0 0
      %574 = vmatprep.subr.bf16.mxu0 0
      %575 = vmatpush1.bf16.xpose.msra.mxu0 0
      %576 = vmatprep.subr.bf16.mxu0 0
      %577 = vmatpush1.bf16.xpose.msra.mxu0 0
      %578 = vmatprep.subr.bf16.mxu0 0
      %579 = vmatpush1.bf16.xpose.msra.mxu0 0
      %580 = vmatprep.subr.bf16.mxu0 0
      %581 = vmatpush1.bf16.xpose.msra.mxu0 0
      %582 = vmatprep.subr.bf16.mxu0 0
      %583 = vmatpush1.bf16.xpose.msra.mxu0 0
      %584 = vmatprep.subr.bf16.mxu0 0
      %585 = vmatpush1.bf16.xpose.msra.mxu0 0
      %586 = vmatprep.subr.bf16.mxu0 0
      %587 = vmatpush1.bf16.xpose.msra.mxu0 0
      %588 = vmatprep.mubr.bf16.mxu0 0
      %589 = vmatmul.mubr.bf16.gmra.mrb[0].mxu0 %v551
      %v590 = vpop.f32.mrb[0].mxu0
      %v591 = vadd.f32 %v545, %v590
      %v592 = vpop.f32.mrb[0].mxu0
      %v593 = vpop.f32.mrb[0].mxu0
      %v594 = vpop.f32.mrb[0].mxu0
      %595 = vdwg.mxu0
      %v596 = vmul.f32 %v591, 0.35355338
      %v597 = vsel %vm205, %v596, -inf
      %598 = vmax.xlane.f32.xlu0 %v597
      %v599 = vpop.xlane.xlu0 %598
      %v600 = vsub.f32 %v596, %v599
      %v601 = vmul.f32 %v600, 1.442695
      %v602 = vpow.pop %v601
      %v603 = vsel %vm205, %v602, 0.0
      %604 = vadd.xlane.f32.xlu0 %v603
      %v605 = vpop.xlane.xlu0 %604
      %v606 = vrcp.pop %v605
      %v607 = vmul.f32 %v602, %v606
      %v608 = vpack.c.bf16 %v607, %v607
      %609 = vrot.lane.b32.xlu0 %v202, 40
      %v610 = vpop.permute.xlu0 %609
      %v612 = vsel %vm205, %v608, 0
      %v615 = vsel %vm270, %v610, 0
      %617 = vmatprep.subr.bf16.mxu0 0
      %618 = vmatpush1.bf16.msra.mxu0 %v615
      %619 = vmatprep.subr.bf16.mxu0 0
      %620 = vmatpush1.bf16.msra.mxu0 0
      %621 = vmatprep.subr.bf16.mxu0 0
      %622 = vmatpush1.bf16.msra.mxu0 0
      %623 = vmatprep.subr.bf16.mxu0 0
      %624 = vmatpush1.bf16.msra.mxu0 0
      %625 = vmatprep.subr.bf16.mxu0 0
      %626 = vmatpush1.bf16.msra.mxu0 0
      %627 = vmatprep.subr.bf16.mxu0 0
      %628 = vmatpush1.bf16.msra.mxu0 0
      %629 = vmatprep.subr.bf16.mxu0 0
      %630 = vmatpush1.bf16.msra.mxu0 0
      %631 = vmatprep.subr.bf16.mxu0 0
      %632 = vmatpush1.bf16.msra.mxu0 0
      %633 = vmatprep.subr.bf16.mxu0 0
      %634 = vmatpush1.bf16.msra.mxu0 0
      %635 = vmatprep.subr.bf16.mxu0 0
      %636 = vmatpush1.bf16.msra.mxu0 0
      %637 = vmatprep.subr.bf16.mxu0 0
      %638 = vmatpush1.bf16.msra.mxu0 0
      %639 = vmatprep.subr.bf16.mxu0 0
      %640 = vmatpush1.bf16.msra.mxu0 0
      %641 = vmatprep.subr.bf16.mxu0 0
      %642 = vmatpush1.bf16.msra.mxu0 0
      %643 = vmatprep.subr.bf16.mxu0 0
      %644 = vmatpush1.bf16.msra.mxu0 0
      %645 = vmatprep.subr.bf16.mxu0 0
      %646 = vmatpush1.bf16.msra.mxu0 0
      %647 = vmatprep.subr.bf16.mxu0 0
      %648 = vmatpush1.bf16.msra.mxu0 0
      %649 = vmatprep.mubr.bf16.mxu0 0
      %650 = vmatmul.mubr.bf16.gmra.mrb[0].mxu0 %v612
      %v651 = vpop.f32.mrb[0].mxu0
      %v652 = vadd.f32 0.0, %v651
      %v653 = vpop.f32.mrb[0].mxu0
      %v654 = vpop.f32.mrb[0].mxu0
      %v655 = vpop.f32.mrb[0].mxu0
      %656 = vdwg.mxu0
      %658 = vrot.lane.b32.xlu0 %v424, 8
      %v659 = vpop.permute.xlu0 %658
      %662 = vrot.lane.b32.xlu0 %v538, 16
      %v663 = vpop.permute.xlu0 %662
      %666 = vrot.lane.b32.xlu0 %v652, 24
      %v667 = vpop.permute.xlu0 %666
      %v669 = vsel %vm205, %v309, %v659
      %vm670 = vcmask 130048
      %v671 = vsel %vm670, %v669, %v663
      %vm672 = vcmask 195584
      %v673 = vsel %vm672, %v671, %v667
      %v674 = vpack.c.bf16 %v673, %v673
      %vm675 = vcmask 257024
      %676 = vst.msk [vmem:[%s185] sm:$0xf] %vm675, %v674
      %p677 = scmp.lt.s32.totalorder %s14, 3
      %s678 = scalar_select %p677, %s14, 3
      %s679 = smul.addr %s678, 4
      %s680 = scalar_lea.vmem %s3, %s679
      // Predicated region
      $region33: #{encoder_forward.16} parent=31 // pred_check
        %p681 = pneg %p105
      $region34: #{encoder_forward.16} parent=31 // pred_check_branch
        %683 = sbr.rel (%p681) target = $region36
      $region35: #{encoder_forward.16} parent=31 // pred_region
        _
      $region36: #{encoder_forward.16} parent=31 // pred_fallthru
        _
    $region32: #{encoder_forward.16} parent=5 // pred_fallthru
      _
    %p684 = scmp.le.s32.totalorder 2, %s9
    // Predicated region
    $region37: #{encoder_forward.16} parent=5 // pred_check
      %p685 = pneg %p684
    $region38: #{encoder_forward.16} parent=5 // pred_check_branch
      %687 = sbr.rel (%p685) target = $region40
    $region39: #{encoder_forward.16} parent=5 // pred_region
      %s688 = ssub.s32 %s9, 2
      // Predicated region
      $region41: #{encoder_forward.16} parent=39 // pred_check
        %p689 = pneg %p111
      $region42: #{encoder_forward.16} parent=39 // pred_check_branch
        %691 = sbr.rel (%p689) target = $region44
      $region43: #{encoder_forward.16} parent=39 // pred_region
        %p692 = scmp.lt.s32.totalorder %s15, 3
        %s693 = scalar_select %p692, %s15, 3
        %s694 = smul.addr %s693, 4
        %s695 = scalar_lea.vmem %s3, %s694
      $region44: #{encoder_forward.16} parent=39 // pred_fallthru
        _
    $region40: #{encoder_forward.16} parent=5 // pred_fallthru
      _
  $region6: #{encoder_forward.16} parent=0 // loop_footer
    %s13 = sadd.s32 1, %s9
  $region7: #{encoder_forward.16} parent=0 // loop_footer_branch
    %8 = sbr.rel target = $region3
  $region8: #{encoder_forward.16} parent=0 // loop_exit
    _

// kernel: encoder_forward.17
$region0: #{encoder_forward.17}
  #allocation0 [shape = 'u32[]', space=smem, size = 0x4, offset = 0x4, fixed_abs, tag = 'smem constant byte address 0x4 - core index']
  #allocation1 [shape = 'u32[144,128]{1,0:T(1,128)}', space=vmem, size = 0x12000, scoped, tag = 'internal scratch']
  %s0 = inlined_call_operand.vmem [shape: f32[32,32], index: 0, kind: input, shape index: {}]
  %s1 = inlined_call_operand.vmem [shape: bf16[32,32], index: 1, kind: input, shape index: {}]
  %s2 = inlined_call_operand.vmem [shape: bf16[32,32], index: 2, kind: input, shape index: {}]
  %s3 = inlined_call_operand.vmem [shape: f32[1,32], index: 3, kind: input, shape index: {}]
  %s4 = inlined_call_operand.vmem [shape: f32[1,32], index: 4, kind: input, shape index: {}]
  %s5 = inlined_call_operand.vmem [shape: bf16[32,64], index: 5, kind: input, shape index: {}]
  %s6 = inlined_call_operand.vmem [shape: f32[1,64], index: 6, kind: input, shape index: {}]
  %s7 = inlined_call_operand.vmem [shape: bf16[64,32], index: 7, kind: input, shape index: {}]
  %s8 = inlined_call_operand.vmem [shape: f32[1,32], index: 8, kind: input, shape index: {}]
  %s9 = inlined_call_operand.vmem [shape: f32[32,32], index: 9, kind: output, shape index: {}]
  %s10 = sld [smem:[#allocation0]]
  $region46: #{encoder_forward.17} parent=0
    _
  %s12 = ssub.s32 1, %s10
  %s13 = scalar_select 0, %s12, %s10
  // Predicated region
  $region2: #{encoder_forward.17} parent=0 // pred_check
    _
  $region3: #{encoder_forward.17} parent=0 // pred_check_branch
    %15 = sbr.rel (0) target = $region5
  $region4: #{encoder_forward.17} parent=0 // pred_region
    _
  $region5: #{encoder_forward.17} parent=0 // pred_fallthru
    _
  // Predicated region
  $region6: #{encoder_forward.17} parent=0 // pred_check
    _
  $region7: #{encoder_forward.17} parent=0 // pred_check_branch
    %17 = sbr.rel (0) target = $region9
  $region8: #{encoder_forward.17} parent=0 // pred_region
    _
  $region9: #{encoder_forward.17} parent=0 // pred_fallthru
    _
  // Predicated region
  $region10: #{encoder_forward.17} parent=0 // pred_check
    _
  $region11: #{encoder_forward.17} parent=0 // pred_check_branch
    %19 = sbr.rel (0) target = $region13
  $region12: #{encoder_forward.17} parent=0 // pred_region
    _
  $region13: #{encoder_forward.17} parent=0 // pred_fallthru
    _
  // Predicated region
  $region14: #{encoder_forward.17} parent=0 // pred_check
    _
  $region15: #{encoder_forward.17} parent=0 // pred_check_branch
    %21 = sbr.rel (0) target = $region17
  $region16: #{encoder_forward.17} parent=0 // pred_region
    _
  $region17: #{encoder_forward.17} parent=0 // pred_fallthru
    _
  // Predicated region
  $region18: #{encoder_forward.17} parent=0 // pred_check
    _
  $region19: #{encoder_forward.17} parent=0 // pred_check_branch
    %23 = sbr.rel (0) target = $region21
  $region20: #{encoder_forward.17} parent=0 // pred_region
    _
  $region21: #{encoder_forward.17} parent=0 // pred_fallthru
    _
  // Predicated region
  $region22: #{encoder_forward.17} parent=0 // pred_check
    _
  $region23: #{encoder_forward.17} parent=0 // pred_check_branch
    %25 = sbr.rel (0) target = $region25
  $region24: #{encoder_forward.17} parent=0 // pred_region
    _
  $region25: #{encoder_forward.17} parent=0 // pred_fallthru
    _
  // Predicated region
  $region26: #{encoder_forward.17} parent=0 // pred_check
    _
  $region27: #{encoder_forward.17} parent=0 // pred_check_branch
    %27 = sbr.rel (0) target = $region29
  $region28: #{encoder_forward.17} parent=0 // pred_region
    _
  $region29: #{encoder_forward.17} parent=0 // pred_fallthru
    _
  // Predicated region
  $region30: #{encoder_forward.17} parent=0 // pred_check
    _
  $region31: #{encoder_forward.17} parent=0 // pred_check_branch
    %29 = sbr.rel (0) target = $region33
  $region32: #{encoder_forward.17} parent=0 // pred_region
    _
  $region33: #{encoder_forward.17} parent=0 // pred_fallthru
    _
  // Predicated region
  $region34: #{encoder_forward.17} parent=0 // pred_check
    _
  $region35: #{encoder_forward.17} parent=0 // pred_check_branch
    %31 = sbr.rel (0) target = $region37
  $region36: #{encoder_forward.17} parent=0 // pred_region
    _
  $region37: #{encoder_forward.17} parent=0 // pred_fallthru
    _
  %v33 = vld [vmem:[%s0] sm:$0xff]
  %v34 = vld [vmem:[%s0 + $0x8] sm:$0xff]
  %v35 = vld [vmem:[%s0 + $0x10] sm:$0xff]
  %v36 = vld [vmem:[%s0 + $0x18] sm:$0xff]
  %v37 = vld [vmem:[%s1] sm:$0xf]
  %v38 = vld [vmem:[%s1 + $0x4] sm:$0xf]
  %v39 = vld [vmem:[%s1 + $0x8] sm:$0xf]
  %v40 = vld [vmem:[%s1 + $0xc] sm:$0xf]
  %v41 = vld [vmem:[%s2] sm:$0xf]
  %v42 = vld [vmem:[%s2 + $0x4] sm:$0xf]
  %v43 = vld [vmem:[%s2 + $0x8] sm:$0xf]
  %v44 = vld [vmem:[%s2 + $0xc] sm:$0xf]
  %v49 = vunpack.c.l.b16 %v37
  %v50 = vunpack.c.l.b16 %v38
  %v51 = vunpack.c.l.b16 %v39
  %v52 = vunpack.c.l.b16 %v40
  %v53 = vpack.c.b16 %v50, %v49
  %v54 = vpack.c.b16 %v52, %v51
  %v59 = vunpack.c.l.b16 %v41
  %v60 = vunpack.c.l.b16 %v42
  %v61 = vunpack.c.l.b16 %v43
  %v62 = vunpack.c.l.b16 %v44
  %v63 = vpack.c.b16 %v60, %v59
  %v64 = vpack.c.b16 %v62, %v61
  %vm67 = vcmask 261120
  %v69 = vsel %vm67, %v53, 0
  %v72 = vsel %vm67, %v54, 0
  %74 = vmatprep.subr.bf16.mxu0 0
  %75 = vmatpush1.bf16.msra.mxu0 %v63
  %76 = vmatprep.subr.bf16.mxu0 0
  %77 = vmatpush1.bf16.msra.mxu0 %v64
  %78 = vmatprep.subr.bf16.mxu0 0
  %79 = vmatpush1.bf16.msra.mxu0 0
  %80 = vmatprep.subr.bf16.mxu0 0
  %81 = vmatpush1.bf16.msra.mxu0 0
  %82 = vmatprep.subr.bf16.mxu0 0
  %83 = vmatpush1.bf16.msra.mxu0 0
  %84 = vmatprep.subr.bf16.mxu0 0
  %85 = vmatpush1.bf16.msra.mxu0 0
  %86 = vmatprep.subr.bf16.mxu0 0
  %87 = vmatpush1.bf16.msra.mxu0 0
  %88 = vmatprep.subr.bf16.mxu0 0
  %89 = vmatpush1.bf16.msra.mxu0 0
  %90 = vmatprep.subr.bf16.mxu0 0
  %91 = vmatpush1.bf16.msra.mxu0 0
  %92 = vmatprep.subr.bf16.mxu0 0
  %93 = vmatpush1.bf16.msra.mxu0 0
  %94 = vmatprep.subr.bf16.mxu0 0
  %95 = vmatpush1.bf16.msra.mxu0 0
  %96 = vmatprep.subr.bf16.mxu0 0
  %97 = vmatpush1.bf16.msra.mxu0 0
  %98 = vmatprep.subr.bf16.mxu0 0
  %99 = vmatpush1.bf16.msra.mxu0 0
  %100 = vmatprep.subr.bf16.mxu0 0
  %101 = vmatpush1.bf16.msra.mxu0 0
  %102 = vmatprep.subr.bf16.mxu0 0
  %103 = vmatpush1.bf16.msra.mxu0 0
  %104 = vmatprep.subr.bf16.mxu0 0
  %105 = vmatpush1.bf16.msra.mxu0 0
  %106 = vmatprep.mubr.bf16.mxu0 0
  %107 = vmatmul.mubr.bf16.gmra.mrb[0].mxu0 %v69
  %v108 = vpop.f32.mrb[0].mxu0
  %v109 = vadd.f32 0.0, %v108
  %v110 = vpop.f32.mrb[0].mxu0
  %v111 = vpop.f32.mrb[0].mxu0
  %v112 = vadd.f32 0.0, %v111
  %v113 = vpop.f32.mrb[0].mxu0
  %114 = vmatprep.mubr.bf16.mxu0 0
  %115 = vmatmul.mubr.bf16.gmra.mrb[0].mxu0 %v72
  %v116 = vpop.f32.mrb[0].mxu0
  %v117 = vadd.f32 0.0, %v116
  %v118 = vpop.f32.mrb[0].mxu0
  %v119 = vpop.f32.mrb[0].mxu0
  %v120 = vadd.f32 0.0, %v119
  %v121 = vpop.f32.mrb[0].mxu0
  %122 = vdwg.mxu0
  %v123 = vadd.f32 %v33, %v109
  %v124 = vadd.f32 %v34, %v112
  %v125 = vadd.f32 %v35, %v117
  %v126 = vadd.f32 %v36, %v120
  %v127 = vsel %vm67, %v123, 0.0
  %128 = vadd.xlane.f32.xlu0 %v127
  %v129 = vpop.xlane.xlu0 %128
  %v130 = vsel %vm67, %v124, 0.0
  %131 = vadd.xlane.f32.xlu0 %v130
  %v132 = vpop.xlane.xlu0 %131
  %v133 = vsel %vm67, %v125, 0.0
  %134 = vadd.xlane.f32.xlu0 %v133
  %v135 = vpop.xlane.xlu0 %134
  %v136 = vsel %vm67, %v126, 0.0
  %137 = vadd.xlane.f32.xlu0 %v136
  %v138 = vpop.xlane.xlu0 %137
  %v139 = vrcp.pop 32.0
  %v140 = vmul.f32 %v129, %v139
  %v141 = vmul.f32 %v132, %v139
  %v142 = vmul.f32 %v135, %v139
  %v143 = vmul.f32 %v138, %v139
  %v144 = vsub.f32 %v123, %v140
  %v145 = vsub.f32 %v124, %v141
  %v146 = vsub.f32 %v125, %v142
  %v147 = vsub.f32 %v126, %v143
  %v148 = vmul.f32 %v144, %v144
  %v149 = vmul.f32 %v145, %v145
  %v150 = vmul.f32 %v146, %v146
  %v151 = vmul.f32 %v147, %v147
  %v152 = vsel %vm67, %v148, 0.0
  %153 = vadd.xlane.f32.xlu0 %v152
  %v154 = vpop.xlane.xlu0 %153
  %v155 = vsel %vm67, %v149, 0.0
  %156 = vadd.xlane.f32.xlu0 %v155
  %v157 = vpop.xlane.xlu0 %156
  %v158 = vsel %vm67, %v150, 0.0
  %159 = vadd.xlane.f32.xlu0 %v158
  %v160 = vpop.xlane.xlu0 %159
  %v161 = vsel %vm67, %v151, 0.0
  %162 = vadd.xlane.f32.xlu0 %v161
  %v163 = vpop.xlane.xlu0 %162
  %v164 = vmul.f32 %v154, %v139
  %v165 = vmul.f32 %v157, %v139
  %v166 = vmul.f32 %v160, %v139
  %v167 = vmul.f32 %v163, %v139
  %v168 = vadd.f32 %v164, 1e-05
  %v169 = vadd.f32 %v165, 1e-05
  %v170 = vadd.f32 %v166, 1e-05
  %v171 = vadd.f32 %v167, 1e-05
  %v172 = vrsqrt.pop %v168
  %v173 = vrsqrt.pop %v169
  %v174 = vrsqrt.pop %v170
  %v175 = vrsqrt.pop %v171
  %v176 = vmul.f32 %v144, %v172
  %v177 = vmul.f32 %v145, %v173
  %v178 = vmul.f32 %v146, %v174
  %v179 = vmul.f32 %v147, %v175
  %v180 = vld [vmem:[%s3] sm:$0x1]
  %v182 = vlaneseq
  %v183 = vshrl.u32 %v182, 7
  %v184 = vsub.s32 0, %v183
  %v185 = vrot.slane %v180, %v184
  %v187 = vmul.f32 %v176, %v185
  %v188 = vmul.f32 %v177, %v185
  %v189 = vmul.f32 %v178, %v185
  %v190 = vmul.f32 %v179, %v185
  %v191 = vld [vmem:[%s4] sm:$0x1]
  %v193 = vlaneseq
  %v194 = vshrl.u32 %v193, 7
  %v195 = vsub.s32 0, %v194
  %v196 = vrot.slane %v191, %v195
  %v198 = vadd.f32 %v187, %v196
  %v199 = vadd.f32 %v188, %v196
  %v200 = vadd.f32 %v189, %v196
  %v201 = vadd.f32 %v190, %v196
  %v202 = vpack.c.bf16 %v199, %v198
  %v203 = vpack.c.bf16 %v201, %v200
  %v204 = vld [vmem:[%s5] sm:$0xf]
  %v205 = vld [vmem:[%s5 + $0x4] sm:$0xf]
  %v206 = vld [vmem:[%s5 + $0x8] sm:$0xf]
  %v207 = vld [vmem:[%s5 + $0xc] sm:$0xf]
  %v208 = vld [vmem:[%s6] sm:$0x1]
  %v210 = vlaneseq
  %v211 = vshrl.u32 %v210, 7
  %v212 = vsub.s32 0, %v211
  %v213 = vrot.slane %v208, %v212
  %v219 = vunpack.c.l.b16 %v204
  %v220 = vunpack.c.l.b16 %v205
  %v221 = vunpack.c.l.b16 %v206
  %v222 = vunpack.c.l.b16 %v207
  %v223 = vpack.c.b16 %v220, %v219
  %v224 = vpack.c.b16 %v222, %v221
  %v228 = vsel %vm67, %v202, 0
  %v231 = vsel %vm67, %v203, 0
  %233 = vmatprep.subr.bf16.mxu0 0
  %234 = vmatpush1.bf16.msra.mxu0 %v223
  %235 = vmatprep.subr.bf16.mxu0 0
  %236 = vmatpush1.bf16.msra.mxu0 %v224
  %237 = vmatprep.subr.bf16.mxu0 0
  %238 = vmatpush1.bf16.msra.mxu0 0
  %239 = vmatprep.subr.bf16.mxu0 0
  %240 = vmatpush1.bf16.msra.mxu0 0
  %241 = vmatprep.subr.bf16.mxu0 0
  %242 = vmatpush1.bf16.msra.mxu0 0
  %243 = vmatprep.subr.bf16.mxu0 0
  %244 = vmatpush1.bf16.msra.mxu0 0
  %245 = vmatprep.subr.bf16.mxu0 0
  %246 = vmatpush1.bf16.msra.mxu0 0
  %247 = vmatprep.subr.bf16.mxu0 0
  %248 = vmatpush1.bf16.msra.mxu0 0
  %249 = vmatprep.subr.bf16.mxu0 0
  %250 = vmatpush1.bf16.msra.mxu0 0
  %251 = vmatprep.subr.bf16.mxu0 0
  %252 = vmatpush1.bf16.msra.mxu0 0
  %253 = vmatprep.subr.bf16.mxu0 0
  %254 = vmatpush1.bf16.msra.mxu0 0
  %255 = vmatprep.subr.bf16.mxu0 0
  %256 = vmatpush1.bf16.msra.mxu0 0
  %257 = vmatprep.subr.bf16.mxu0 0
  %258 = vmatpush1.bf16.msra.mxu0 0
  %259 = vmatprep.subr.bf16.mxu0 0
  %260 = vmatpush1.bf16.msra.mxu0 0
  %261 = vmatprep.subr.bf16.mxu0 0
  %262 = vmatpush1.bf16.msra.mxu0 0
  %263 = vmatprep.subr.bf16.mxu0 0
  %264 = vmatpush1.bf16.msra.mxu0 0
  %265 = vmatprep.mubr.bf16.mxu0 0
  %266 = vmatmul.mubr.bf16.gmra.mrb[0].mxu0 %v228
  %v267 = vpop.f32.mrb[0].mxu0
  %v268 = vadd.f32 %v213, %v267
  %v269 = vpop.f32.mrb[0].mxu0
  %v270 = vpop.f32.mrb[0].mxu0
  %v271 = vadd.f32 %v213, %v270
  %v272 = vpop.f32.mrb[0].mxu0
  %273 = vmatprep.mubr.bf16.mxu0 0
  %274 = vmatmul.mubr.bf16.gmra.mrb[0].mxu0 %v231
  %v275 = vpop.f32.mrb[0].mxu0
  %v276 = vadd.f32 %v213, %v275
  %v277 = vpop.f32.mrb[0].mxu0
  %v278 = vpop.f32.mrb[0].mxu0
  %v279 = vadd.f32 %v213, %v278
  %v280 = vpop.f32.mrb[0].mxu0
  %281 = vdwg.mxu0
  %v282 = vmax.f32 %v268, 0.0
  %v283 = vmax.f32 %v271, 0.0
  %v284 = vmax.f32 %v276, 0.0
  %v285 = vmax.f32 %v279, 0.0
  %v286 = vpack.c.bf16 %v283, %v282
  %v287 = vpack.c.bf16 %v285, %v284
  %v288 = vld [vmem:[%s7] sm:$0xf]
  %v289 = vld [vmem:[%s7 + $0x4] sm:$0xf]
  %v290 = vld [vmem:[%s7 + $0x8] sm:$0xf]
  %v291 = vld [vmem:[%s7 + $0xc] sm:$0xf]
  %v292 = vld [vmem:[%s7 + $0x10] sm:$0xf]
  %v293 = vld [vmem:[%s7 + $0x14] sm:$0xf]
  %v294 = vld [vmem:[%s7 + $0x18] sm:$0xf]
  %v295 = vld [vmem:[%s7 + $0x1c] sm:$0xf]
  %v296 = vld [vmem:[%s8] sm:$0x1]
  %v298 = vlaneseq
  %v299 = vshrl.u32 %v298, 7
  %v300 = vsub.s32 0, %v299
  %v301 = vrot.slane %v296, %v300
  %v311 = vunpack.c.l.b16 %v288
  %v312 = vunpack.c.l.b16 %v289
  %v313 = vunpack.c.l.b16 %v290
  %v314 = vunpack.c.l.b16 %v291
  %v315 = vunpack.c.l.b16 %v292
  %v316 = vunpack.c.l.b16 %v293
  %v317 = vunpack.c.l.b16 %v294
  %v318 = vunpack.c.l.b16 %v295
  %v319 = vpack.c.b16 %v312, %v311
  %v320 = vpack.c.b16 %v314, %v313
  %v321 = vpack.c.b16 %v316, %v315
  %v322 = vpack.c.b16 %v318, %v317
  %vm327 = vcmask 523264
  %v329 = vsel %vm327, %v286, 0
  %v332 = vsel %vm327, %v287, 0
  %334 = vmatprep.subr.bf16.mxu0 0
  %335 = vmatpush1.bf16.msra.mxu0 %v319
  %336 = vmatprep.subr.bf16.mxu0 0
  %337 = vmatpush1.bf16.msra.mxu0 %v320
  %338 = vmatprep.subr.bf16.mxu0 0
  %339 = vmatpush1.bf16.msra.mxu0 %v321
  %340 = vmatprep.subr.bf16.mxu0 0
  %341 = vmatpush1.bf16.msra.mxu0 %v322
  %342 = vmatprep.subr.bf16.mxu0 0
  %343 = vmatpush1.bf16.msra.mxu0 0
  %344 = vmatprep.subr.bf16.mxu0 0
  %345 = vmatpush1.bf16.msra.mxu0 0
  %346 = vmatprep.subr.bf16.mxu0 0
  %347 = vmatpush1.bf16.msra.mxu0 0
  %348 = vmatprep.subr.bf16.mxu0 0
  %349 = vmatpush1.bf16.msra.mxu0 0
  %350 = vmatprep.subr.bf16.mxu0 0
  %351 = vmatpush1.bf16.msra.mxu0 0
  %352 = vmatprep.subr.bf16.mxu0 0
  %353 = vmatpush1.bf16.msra.mxu0 0
  %354 = vmatprep.subr.bf16.mxu0 0
  %355 = vmatpush1.bf16.msra.mxu0 0
  %356 = vmatprep.subr.bf16.mxu0 0
  %357 = vmatpush1.bf16.msra.mxu0 0
  %358 = vmatprep.subr.bf16.mxu0 0
  %359 = vmatpush1.bf16.msra.mxu0 0
  %360 = vmatprep.subr.bf16.mxu0 0
  %361 = vmatpush1.bf16.msra.mxu0 0
  %362 = vmatprep.subr.bf16.mxu0 0
  %363 = vmatpush1.bf16.msra.mxu0 0
  %364 = vmatprep.subr.bf16.mxu0 0
  %365 = vmatpush1.bf16.msra.mxu0 0
  %366 = vmatprep.mubr.bf16.mxu0 0
  %367 = vmatmul.mubr.bf16.gmra.mrb[0].mxu0 %v329
  %v368 = vpop.f32.mrb[0].mxu0
  %v369 = vadd.f32 %v301, %v368
  %v370 = vpop.f32.mrb[0].mxu0
  %v371 = vpop.f32.mrb[0].mxu0
  %v372 = vadd.f32 %v301, %v371
  %v373 = vpop.f32.mrb[0].mxu0
  %374 = vmatprep.mubr.bf16.mxu0 0
  %375 = vmatmul.mubr.bf16.gmra.mrb[0].mxu0 %v332
  %v376 = vpop.f32.mrb[0].mxu0
  %v377 = vadd.f32 %v301, %v376
  %v378 = vpop.f32.mrb[0].mxu0
  %v379 = vpop.f32.mrb[0].mxu0
  %v380 = vadd.f32 %v301, %v379
  %v381 = vpop.f32.mrb[0].mxu0
  %382 = vdwg.mxu0
  %v383 = vadd.f32 %v123, %v369
  %v384 = vadd.f32 %v124, %v372
  %v385 = vadd.f32 %v125, %v377
  %v386 = vadd.f32 %v126, %v380
  %387 = vst.msk [vmem:[%s9] sm:$0xff] %vm67, %v383
  %388 = vst.msk [vmem:[%s9 + $0x8] sm:$0xff] %vm67, %v384
  %389 = vst.msk [vmem:[%s9 + $0x10] sm:$0xff] %vm67, %v385
  %390 = vst.msk [vmem:[%s9 + $0x18] sm:$0xff] %vm67, %v386
  // Predicated region
  $region38: #{encoder_forward.17} parent=0 // pred_check
    _
  $region39: #{encoder_forward.17} parent=0 // pred_check_branch
    %392 = sbr.rel (0) target = $region41
  $region40: #{encoder_forward.17} parent=0 // pred_region
    _
  $region41: #{encoder_forward.17} parent=0 // pred_fallthru
    _
  // Predicated region
  $region42: #{encoder_forward.17} parent=0 // pred_check
    _
  $region43: #{encoder_forward.17} parent=0 // pred_check_branch
    %394 = sbr.rel (0) target = $region45
  $region44: #{encoder_forward.17} parent=0 // pred_region
    _
  $region45: #{encoder_forward.17} parent=0 // pred_fallthru
    _

</llo_original>
